<compile_context>
chip_gen: v7x
topology: tpu7x:2x2x1
jax: 0.10.0
libtpu: 0.0.40
codegen_flags: <defaults>
</compile_context>

<pallas_src>
import functools
import math

import jax
import jax.numpy as jnp
from jax.experimental import pallas as pl
from jax.experimental.pallas import tpu as pltpu


# --------------------------------------------------------------------- TPU-aware sizing
def _tpu_info():
    """(vmem_bytes_per_core, tensorcores_sharing_the_grid) with safe fallbacks."""
    vmem = 64 * 1024 * 1024            # conservative default (v7x per-TC VMEM)
    cores = 0
    try:
        info = pltpu.get_tpu_info()
        vmem = int(getattr(info, "vmem_capacity_bytes", vmem) or vmem)
        cores = int(getattr(info, "tensorcores_per_chip", 0)
                    or getattr(info, "num_cores", 0) or 0)
    except Exception:
        pass
    if cores <= 0:
        # v7x-style chips: 64 MiB VMEM per TC, 2 TCs share "parallel" grid axes.
        cores = 2 if vmem <= 80 * 1024 * 1024 else 1
    return vmem, cores


def _sublane(dtype):
    return max(8, 32 // jnp.dtype(dtype).itemsize)


def _pick_tile_rows(n_rows, row_bytes, *, sublane, vmem_budget, num_cores=1,
                    max_rows=16384):
    """Rows per block: largest tile that fits the budget; even grid split on 2-TC chips."""
    n_rows = int(n_rows)
    tr = int(vmem_budget // max(1, int(row_bytes)))
    tr = max(sublane, min(tr, max_rows))
    steps = pl.cdiv(n_rows, min(tr, n_rows))
    if num_cores > 1 and n_rows >= 2 * num_cores * sublane:
        steps = max(steps, num_cores)
        steps = ((steps + num_cores - 1) // num_cores) * num_cores   # equal work per TC
    if steps <= 1:
        return n_rows                              # one full block, no forced split
    tr = pl.cdiv(n_rows, steps)
    tr = ((tr + sublane - 1) // sublane) * sublane  # keep (8,128)/(16,128) alignment
    return min(tr, n_rows)


# ------------------------------------------------------ group LayerNorm (shared helper)
def _group_layernorm(x, m, mt, gamma, beta, *, inv_n, eps):
    """LayerNorm of every lane-group of `x` (groups defined by 0/1 indicator `m`).

    x: (rows, G*C) f32; m: (G*C, kp); mt: (kp, G*C).  Per-group stats ride small MXU
    dots (HIGHEST so they stay f32-accurate); variance is two-pass (centred).
    """
    dot = functools.partial(
        jax.lax.dot_general,
        dimension_numbers=(((1,), (0,)), ((), ())),
        preferred_element_type=jnp.float32,
        precision=jax.lax.Precision.HIGHEST,
    )
    mean_b = dot(dot(x, m) * inv_n, mt)            # per-group mean, broadcast back
    xc = x - mean_b
    inv_b = dot(jax.lax.rsqrt(dot(xc * xc, m) * inv_n + eps), mt)
    return xc * inv_b * gamma + beta


# ---------------------------------------------------------------- LayerNorm (last dim)
def _ln_kernel(x_ref, w_ref, b_ref, m_ref, mt_ref, o_ref, *, eps, inv_n):
    y = _group_layernorm(x_ref[...].astype(jnp.float32), m_ref[...], mt_ref[...],
                         w_ref[...], b_ref[...], inv_n=inv_n, eps=eps)
    o_ref[...] = y.astype(o_ref.dtype)


def layernorm_lastdim(x, weight, bias, *, eps=1e-5):
    """LayerNorm over the last dim (scale & bias); lane-dense slabs when C < 128."""
    shape = x.shape
    C = int(shape[-1])
    xr = x.reshape(-1, C)
    R = int(xr.shape[0])

    # Pack k rows per slab row so the last dim reaches 128 lanes when C divides 128;
    # gcd keeps (a smaller) packing alive when R is not divisible by 128 // C.
    k = 128 // C if (C < 128 and 128 % C == 0) else 1
    if k > 1:
        k = math.gcd(k, R)
    k = max(k, 1)
    kc, rs = k * C, R // k
    kp = max(k, 8)

    xs = xr.reshape(rs, kc)                        # free row-major reshape
    w2 = jnp.tile(weight.reshape(1, C).astype(jnp.float32), (1, k))
    b2 = jnp.tile(bias.reshape(1, C).astype(jnp.float32), (1, k))
    grp = jnp.arange(kc, dtype=jnp.int32) // C
    m = (grp[:, None] == jnp.arange(kp, dtype=jnp.int32)[None, :]).astype(jnp.float32)
    mt = m.T

    vmem, cores = _tpu_info()
    itm = jnp.dtype(x.dtype).itemsize
    row_bytes = kc * (2 * itm + 2 * itm + 20)      # in/out double buffers + f32 temps
    tr = _pick_tile_rows(rs, row_bytes, sublane=_sublane(x.dtype),
                         vmem_budget=0.45 * vmem, num_cores=cores)

    out = pl.pallas_call(
        functools.partial(_ln_kernel, eps=float(eps), inv_n=1.0 / C),
        out_shape=jax.ShapeDtypeStruct((rs, kc), x.dtype),
        grid_spec=pltpu.PrefetchScalarGridSpec(
            num_scalar_prefetch=0,
            grid=(pl.cdiv(rs, tr),),               # ragged last block handled by Pallas
            in_specs=[
                pl.BlockSpec((tr, kc), lambda i: (i, 0)),
                pl.BlockSpec((1, kc), lambda i: (0, 0)),
                pl.BlockSpec((1, kc), lambda i: (0, 0)),
                pl.BlockSpec((kc, kp), lambda i: (0, 0)),
                pl.BlockSpec((kp, kc), lambda i: (0, 0)),
            ],
            out_specs=pl.BlockSpec((tr, kc), lambda i: (i, 0)),
        ),
        compiler_params=pltpu.CompilerParams(
            dimension_semantics=("parallel",),
            vmem_limit_bytes=int(0.8 * vmem),
        ),
    )(xs, w2, b2, m, mt)
    return out.reshape(shape)


# -------------------------------------------------------- Conv2d (im2col + MXU matmul)
def _conv_bias_kernel(a_ref, w_ref, b_ref, o_ref):
    acc = jax.lax.dot_general(a_ref[...], w_ref[...],
                              dimension_numbers=(((1,), (0,)), ((), ())),
                              preferred_element_type=jnp.float32)   # bf16 MXU, f32 acc
    o_ref[...] = (acc + b_ref[...]).astype(o_ref.dtype)


def _conv_bias_ln_kernel(a_ref, w_ref, b_ref, g_ref, be_ref, m_ref, mt_ref, o_ref,
                         *, eps, inv_n):
    acc = jax.lax.dot_general(a_ref[...], w_ref[...],
                              dimension_numbers=(((1,), (0,)), ((), ())),
                              preferred_element_type=jnp.float32)   # bf16 MXU, f32 acc
    acc = acc + b_ref[...]
    y = _group_layernorm(acc, m_ref[...], mt_ref[...], g_ref[...], be_ref[...],
                         inv_n=inv_n, eps=eps)
    o_ref[...] = y.astype(o_ref.dtype)


def _im2col(x, KH, KW, SH, SW, PH, PW, *, channels_last):
    """Patch matrix (B*OH*OW, KH*KW*CI) in (kh, kw, ci) column order, cast to bf16."""
    if channels_last:
        B, H, W, CI = map(int, x.shape)
        xp = jnp.pad(x, ((0, 0), (PH, PH), (PW, PW), (0, 0)))
    else:
        B, CI, H, W = map(int, x.shape)
        xp = jnp.pad(x, ((0, 0), (0, 0), (PH, PH), (PW, PW)))
    OH = (H + 2 * PH - KH) // SH + 1
    OW = (W + 2 * PW - KW) // SW + 1
    cols = []
    for kh in range(KH):
        for kw in range(KW):
            if channels_last:
                c = xp[:, kh:kh + (OH - 1) * SH + 1:SH, kw:kw + (OW - 1) * SW + 1:SW, :]
            else:
                c = jnp.transpose(
                    xp[:, :, kh:kh + (OH - 1) * SH + 1:SH, kw:kw + (OW - 1) * SW + 1:SW],
                    (0, 2, 3, 1))
            cols.append(c)
    a = jnp.concatenate(cols, axis=-1).astype(jnp.bfloat16)
    return a.reshape(B * OH * OW, KH * KW * CI), B, OH, OW, CI


def conv2d_downsample(x, weight, bias, *, stride, padding, groups=1, channels_last=True,
                      post_ln=None, eps=1e-5):
    """nn.Conv2d (groups=1) producing NHWC output (== conv(x).permute(0,2,3,1)).

    x is NHWC when channels_last else NCHW.  `post_ln=(gamma, beta)` fuses the
    subsequent channel LayerNorm into the matmul epilogue when possible.
    """
    if groups != 1:
        # TODO(synk): grouped conv (groups > 1) not implemented; module default is 1.
        raise NotImplementedError("groups != 1 not supported")
    CO, CIw, KH, KW = map(int, weight.shape)
    SH, SW = (stride, stride) if isinstance(stride, int) else tuple(stride)
    PH, PW = (padding, padding) if isinstance(padding, int) else tuple(padding)

    a, B, OH, OW, CI = _im2col(x, KH, KW, SH, SW, PH, PW, channels_last=channels_last)
    assert CI == CIw, (CI, CIw)
    M, Kd = int(a.shape[0]), int(a.shape[1])
    out_dtype = x.dtype
    out_itm = jnp.dtype(out_dtype).itemsize

    w2 = jnp.transpose(weight, (2, 3, 1, 0)).reshape(Kd, CO).astype(jnp.bfloat16)
    b2 = bias.reshape(1, CO).astype(jnp.float32)

    # Lane-dense packing: k logical output rows per slab row -> 128-lane MXU result and
    # unmasked stores when CO < 128 (block-diagonal weight; the extra zero-FLOPs are
    # hidden behind the HBM-bound patch stream).
    k = 128 // CO if (CO < 128 and 128 % CO == 0) else 1
    if k > 1:
        k = math.gcd(k, M)
    k = max(k, 1)
    Ms, Kds, Ns = M // k, k * Kd, k * CO
    a_s = a.reshape(Ms, Kds)                       # free row-major reshape
    if k > 1:
        eye = jnp.eye(k, dtype=w2.dtype)
        w_s = (eye[:, None, :, None] * w2[None, :, None, :]).reshape(Kds, Ns)
        b_s = jnp.tile(b2, (1, k))
    else:
        w_s, b_s = w2, b2

    vmem, cores = _tpu_info()
    budget = 0.45 * vmem
    # VMEM model: resident weight (x2 buffers) + small constants, and per output row:
    # bf16 A block (x2), out block (x2), ~5 live f32 (row, Ns) intermediates.
    fixed = 2 * Kds * Ns * 2 + 6 * Ns * 4 + 4 * Ns * 8 * 4
    per_row = 2 * Kds * 2 + 2 * Ns * out_itm + 5 * Ns * 4
    use_fused = fixed + min(Ms, 16) * per_row <= budget

    if use_fused:
        # Fused path: the block spans full output rows -> bias and (optionally) the
        # post-LayerNorm ride the matmul epilogue; weight index map is constant so it
        # is DMA'd into VMEM once and stays resident.
        tm = _pick_tile_rows(Ms, per_row, sublane=16, vmem_budget=budget - fixed,
                             num_cores=cores)
        grid = (pl.cdiv(Ms, tm),)
        a_spec = pl.BlockSpec((tm, Kds), lambda i: (i, 0))
        w_spec = pl.BlockSpec((Kds, Ns), lambda i: (0, 0))
        v_spec = pl.BlockSpec((1, Ns), lambda i: (0, 0))
        o_spec = pl.BlockSpec((tm, Ns), lambda i: (i, 0))
        cparams = pltpu.CompilerParams(dimension_semantics=("parallel",),
                                       vmem_limit_bytes=int(0.8 * vmem))
        if post_ln is not None:
            gamma, beta = post_ln
            g_s = jnp.tile(gamma.reshape(1, CO).astype(jnp.float32), (1, k))
            be_s = jnp.tile(beta.reshape(1, CO).astype(jnp.float32), (1, k))
            kp = max(k, 8)
            grp = jnp.arange(Ns, dtype=jnp.int32) // CO
            m = (grp[:, None] == jnp.arange(kp, dtype=jnp.int32)[None, :]
                 ).astype(jnp.float32)
            mt = m.T
            out = pl.pallas_call(
                functools.partial(_conv_bias_ln_kernel, eps=float(eps), inv_n=1.0 / CO),
                out_shape=jax.ShapeDtypeStruct((Ms, Ns), out_dtype),
                grid_spec=pltpu.PrefetchScalarGridSpec(
                    num_scalar_prefetch=0, grid=grid,
                    in_specs=[a_spec, w_spec, v_spec, v_spec, v_spec,
                              pl.BlockSpec((Ns, kp), lambda i: (0, 0)),
                              pl.BlockSpec((kp, Ns), lambda i: (0, 0))],
                    out_specs=o_spec),
                compiler_params=cparams,
            )(a_s, w_s, b_s, g_s, be_s, m, mt)
        else:
            out = pl.pallas_call(
                _conv_bias_kernel,
                out_shape=jax.ShapeDtypeStruct((Ms, Ns), out_dtype),
                grid_spec=pltpu.PrefetchScalarGridSpec(
                    num_scalar_prefetch=0, grid=grid,
                    in_specs=[a_spec, w_spec, v_spec],
                    out_specs=o_spec),
                compiler_params=cparams,
            )(a_s, w_s, b_s)
        return out.reshape(B, OH, OW, CO)          # (Ms, k*CO) is bit-identical to NHWC

    # Fallback (huge Kd*CO): column-tiled matmul + bias; post-LN as its own Pallas pass.
    tn = 256 if (CO % 128 == 0 and CO > 256) else CO
    per_row_fb = 2 * Kd * 2 + 2 * tn * out_itm + 3 * tn * 4
    fixed_fb = 2 * Kd * tn * 2 + 2 * tn * 4
    tm = _pick_tile_rows(M, per_row_fb, sublane=16,
                         vmem_budget=max(budget - fixed_fb, 16 * per_row_fb),
                         num_cores=cores)
    out = pl.pallas_call(
        _conv_bias_kernel,
        out_shape=jax.ShapeDtypeStruct((M, CO), out_dtype),
        grid_spec=pltpu.PrefetchScalarGridSpec(
            num_scalar_prefetch=0, grid=(pl.cdiv(M, tm), pl.cdiv(CO, tn)),
            in_specs=[pl.BlockSpec((tm, Kd), lambda i, j: (i, 0)),
                      pl.BlockSpec((Kd, tn), lambda i, j: (0, j)),
                      pl.BlockSpec((1, tn), lambda i, j: (0, j))],
            out_specs=pl.BlockSpec((tm, tn), lambda i, j: (i, j))),
        compiler_params=pltpu.CompilerParams(
            dimension_semantics=("parallel", "parallel"),
            vmem_limit_bytes=int(0.8 * vmem)),
    )(a, w2, b2)
    y = out.reshape(B, OH, OW, CO)
    if post_ln is not None:
        y = layernorm_lastdim(y, post_ln[0], post_ln[1], eps=eps)
    return y


# ----------------------------------------------------------------- Downsampling module
def downsampling_forward(x, params, *, stride, padding, groups=1,
                         pre_norm=True, post_norm=True, pre_permute=True, eps=1e-5):
    """Downsampling.forward: pre_norm -> (permute) -> conv -> permute -> post_norm.

    The two permutes are folded into the conv (it reads the incoming layout and emits
    NHWC directly) and the post-norm rides the conv's matmul epilogue.
    """
    if pre_norm:
        x = layernorm_lastdim(x, params["pre_norm_weight"], params["pre_norm_bias"],
                              eps=eps)
    post_ln = (params["post_norm_weight"], params["post_norm_bias"]) if post_norm else None
    return conv2d_downsample(x, params["conv_weight"], params["conv_bias"],
                             stride=stride, padding=padding, groups=groups,
                             channels_last=bool(pre_permute), post_ln=post_ln, eps=eps)


# ----------------------------------------------------------------------- pure-JAX refs
def _ln_ref(x, w, b, eps):
    x32 = x.astype(jnp.float32)
    mu = jnp.mean(x32, axis=-1, keepdims=True)
    c = x32 - mu
    var = jnp.mean(c * c, axis=-1, keepdims=True)
    y = c * jax.lax.rsqrt(var + eps)
    return (y * w.astype(jnp.float32) + b.astype(jnp.float32)).astype(x.dtype)


def _downsampling_ref(x, params, *, stride, padding, pre_norm, post_norm, pre_permute,
                      eps=1e-5):
    if pre_norm:
        x = _ln_ref(x, params["pre_norm_weight"], params["pre_norm_bias"], eps)
    if pre_permute:
        x = jnp.transpose(x, (0, 3, 1, 2))
    y = jax.lax.conv_general_dilated(
        x.astype(jnp.float32), params["conv_weight"].astype(jnp.float32),
        window_strides=(stride, stride),
        padding=((padding, padding), (padding, padding)),
        dimension_numbers=("NCHW", "OIHW", "NCHW"),
        precision=jax.lax.Precision.HIGHEST)
    y = y + params["conv_bias"].astype(jnp.float32)[None, :, None, None]
    y = jnp.transpose(y, (0, 2, 3, 1)).astype(x.dtype)
    if post_norm:
        y = _ln_ref(y, params["post_norm_weight"], params["post_norm_bias"], eps)
    return y


if __name__ == "__main__":
    key = jax.random.PRNGKey(0)
    ks = jax.random.split(key, 16)

    # 1) Stage-transition Downsampling: NHWC input, pre/post LayerNorm, 3x3 stride-2.
    #    Exercises the C=32 lane-dense LN slab and the fused conv+post-LN with CO=64
    #    output packed to 128 lanes.  Tolerance re-validated for the bf16 MXU matmul.
    B, H, W, CI, CO = 2, 16, 16, 32, 64
    x = jax.random.normal(ks[0], (B, H, W, CI), jnp.float32)
    params = {
        "pre_norm_weight": 1.0 + 0.1 * jax.random.normal(ks[1], (CI,), jnp.float32),
        "pre_norm_bias": 0.1 * jax.random.normal(ks[2], (CI,), jnp.float32),
        "conv_weight": 0.05 * jax.random.normal(ks[3], (CO, CI, 3, 3), jnp.float32),
        "conv_bias": 0.05 * jax.random.normal(ks[4], (CO,), jnp.float32),
        "post_norm_weight": 1.0 + 0.1 * jax.random.normal(ks[5], (CO,), jnp.float32),
        "post_norm_bias": 0.1 * jax.random.normal(ks[6], (CO,), jnp.float32),
    }
    out = downsampling_forward(x, params, stride=2, padding=1,
                               pre_norm=True, post_norm=True, pre_permute=True)
    out = jax.block_until_ready(out)
    ref = _downsampling_ref(x, params, stride=2, padding=1,
                            pre_norm=True, post_norm=True, pre_permute=True)
    assert out.shape == (B, H // 2, W // 2, CO), out.shape
    err = float(jnp.max(jnp.abs(out - ref)))
    assert jnp.allclose(out, ref, atol=5e-2, rtol=5e-2), err

    # 2) Stem-style Downsampling: NCHW input, no pre-norm, 7x7 stride-4 conv, fused
    #    post-LN (also exercises the NCHW im2col branch and odd CI=3).
    x2 = jax.random.normal(ks[7], (2, 3, 16, 16), jnp.float32)
    params2 = {
        "conv_weight": 0.1 * jax.random.normal(ks[8], (64, 3, 7, 7), jnp.float32),
        "conv_bias": 0.05 * jax.random.normal(ks[9], (64,), jnp.float32),
        "post_norm_weight": 1.0 + 0.1 * jax.random.normal(ks[10], (64,), jnp.float32),
        "post_norm_bias": 0.1 * jax.random.normal(ks[11], (64,), jnp.float32),
    }
    out2 = downsampling_forward(x2, params2, stride=4, padding=2,
                                pre_norm=False, post_norm=True, pre_permute=False)
    out2 = jax.block_until_ready(out2)
    ref2 = _downsampling_ref(x2, params2, stride=4, padding=2,
                             pre_norm=False, post_norm=True, pre_permute=False)
    assert out2.shape == (2, 4, 4, 64), out2.shape
    err2 = float(jnp.max(jnp.abs(out2 - ref2)))
    assert jnp.allclose(out2, ref2, atol=5e-2, rtol=5e-2), err2

    # 3) General LayerNorm path (C not dividing 128, ragged row count).
    xg = jax.random.normal(ks[12], (300, 160), jnp.float32)
    wg = 1.0 + 0.1 * jax.random.normal(ks[13], (160,), jnp.float32)
    bg = 0.1 * jax.random.normal(ks[14], (160,), jnp.float32)
    og = jax.block_until_ready(layernorm_lastdim(xg, wg, bg))
    rg = _ln_ref(xg, wg, bg, 1e-5)
    err3 = float(jnp.max(jnp.abs(og - rg)))
    assert jnp.allclose(og, rg, atol=1e-3, rtol=1e-3), err3

    print("KERNEL_OK")
</pallas_src>

<mosaic_0001>
module attributes {stable_mosaic.version = 11 : i64} {
  func.func @_ln_kernel(%arg0: i32, %arg1: memref<64x128xf32, #tpu.memory_space<vmem>>, %arg2: memref<1x128xf32, #tpu.memory_space<vmem>>, %arg3: memref<1x128xf32, #tpu.memory_space<vmem>>, %arg4: memref<128x8xf32, #tpu.memory_space<vmem>>, %arg5: memref<8x128xf32, #tpu.memory_space<vmem>>, %arg6: memref<64x128xf32, #tpu.memory_space<vmem>>) attributes {dimension_semantics = [#tpu.dimension_semantics<parallel>], iteration_bounds = array<i64: 2>, scalar_prefetch = 0 : i64, scratch_operands = 0 : i64, tpu.core_type = #tpu.core_type<tc>, window_params = [{transform_indices = @transform_0, window_bounds = array<i64: 64, 128>}, {pipeline_mode = #tpu.pipeline_mode<synchronous>, transform_indices = @transform_1, window_bounds = array<i64: 1, 128>}, {pipeline_mode = #tpu.pipeline_mode<synchronous>, transform_indices = @transform_2, window_bounds = array<i64: 1, 128>}, {pipeline_mode = #tpu.pipeline_mode<synchronous>, transform_indices = @transform_3, window_bounds = array<i64: 128, 8>}, {pipeline_mode = #tpu.pipeline_mode<synchronous>, transform_indices = @transform_4, window_bounds = array<i64: 8, 128>}, {transform_indices = @transform_5, window_bounds = array<i64: 64, 128>}]} {
    %c0 = arith.constant 0 : index
    %c0_0 = arith.constant 0 : index
    %0 = vector.load %arg1[%c0, %c0_0] : memref<64x128xf32, #tpu.memory_space<vmem>>, vector<64x128xf32>
    %c0_1 = arith.constant 0 : index
    %c0_2 = arith.constant 0 : index
    %1 = vector.load %arg4[%c0_1, %c0_2] : memref<128x8xf32, #tpu.memory_space<vmem>>, vector<128x8xf32>
    %c0_3 = arith.constant 0 : index
    %c0_4 = arith.constant 0 : index
    %2 = vector.load %arg5[%c0_3, %c0_4] : memref<8x128xf32, #tpu.memory_space<vmem>>, vector<8x128xf32>
    %c0_5 = arith.constant 0 : index
    %c0_6 = arith.constant 0 : index
    %3 = vector.load %arg2[%c0_5, %c0_6] : memref<1x128xf32, #tpu.memory_space<vmem>>, vector<1x128xf32>
    %c0_7 = arith.constant 0 : index
    %c0_8 = arith.constant 0 : index
    %4 = vector.load %arg3[%c0_7, %c0_8] : memref<1x128xf32, #tpu.memory_space<vmem>>, vector<1x128xf32>
    %cst = arith.constant dense<0.000000e+00> : vector<64x8xf32>
    %5 = tpu.matmul %0, %1, %cst {dimension_numbers = #tpu.dot_dimension_numbers<[1], [0], [0], [1], [0, 0, 1, 1], [], []>, precision = #tpu.contract_precision<fp32>} : vector<64x128xf32>, vector<128x8xf32>, vector<64x8xf32> -> vector<64x8xf32>
    %cst_9 = arith.constant 3.125000e-02 : f32
    %6 = vector.broadcast %cst_9 : f32 to vector<64x8xf32>
    %7 = arith.mulf %5, %6 : vector<64x8xf32>
    %cst_10 = arith.constant dense<0.000000e+00> : vector<64x128xf32>
    %8 = tpu.matmul %7, %2, %cst_10 {dimension_numbers = #tpu.dot_dimension_numbers<[1], [0], [0], [1], [0, 0, 1, 1], [], []>, precision = #tpu.contract_precision<fp32>} : vector<64x8xf32>, vector<8x128xf32>, vector<64x128xf32> -> vector<64x128xf32>
    %9 = arith.subf %0, %8 : vector<64x128xf32>
    %10 = arith.mulf %9, %9 : vector<64x128xf32>
    %cst_11 = arith.constant dense<0.000000e+00> : vector<64x8xf32>
    %11 = tpu.matmul %10, %1, %cst_11 {dimension_numbers = #tpu.dot_dimension_numbers<[1], [0], [0], [1], [0, 0, 1, 1], [], []>, precision = #tpu.contract_precision<fp32>} : vector<64x128xf32>, vector<128x8xf32>, vector<64x8xf32> -> vector<64x8xf32>
    %cst_12 = arith.constant 3.125000e-02 : f32
    %12 = vector.broadcast %cst_12 : f32 to vector<64x8xf32>
    %13 = arith.mulf %11, %12 : vector<64x8xf32>
    %cst_13 = arith.constant 9.99999974E-6 : f32
    %14 = vector.broadcast %cst_13 : f32 to vector<64x8xf32>
    %15 = arith.addf %13, %14 : vector<64x8xf32>
    %16 = math.rsqrt %15 : vector<64x8xf32>
    %cst_14 = arith.constant dense<0.000000e+00> : vector<64x128xf32>
    %17 = tpu.matmul %16, %2, %cst_14 {dimension_numbers = #tpu.dot_dimension_numbers<[1], [0], [0], [1], [0, 0, 1, 1], [], []>, precision = #tpu.contract_precision<fp32>} : vector<64x8xf32>, vector<8x128xf32>, vector<64x128xf32> -> vector<64x128xf32>
    %18 = arith.mulf %9, %17 : vector<64x128xf32>
    %19 = vector.broadcast %3 : vector<1x128xf32> to vector<64x128xf32>
    %20 = arith.mulf %18, %19 : vector<64x128xf32>
    %21 = vector.broadcast %4 : vector<1x128xf32> to vector<64x128xf32>
    %22 = arith.addf %20, %21 : vector<64x128xf32>
    %c0_15 = arith.constant 0 : index
    %c0_16 = arith.constant 0 : index
    %23 = vector.load %arg6[%c0_15, %c0_16] : memref<64x128xf32, #tpu.memory_space<vmem>>, vector<64x128xf32>
    tpu.vector_store %arg6[%c0_15, %c0_16], %22 {strides = array<i32>} : memref<64x128xf32, #tpu.memory_space<vmem>>, vector<64x128xf32>,
    return
  }
  func.func @transform_0(%arg0: i32) -> (i32, i32) {
    %c0_i32 = arith.constant 0 : i32
    %c0_i32_0 = arith.constant 0 : i32
    return %arg0, %c0_i32 : i32, i32
  }
  func.func @transform_1(%arg0: i32) -> (i32, i32) {
    %c0_i32 = arith.constant 0 : i32
    %c0_i32_0 = arith.constant 0 : i32
    %c0_i32_1 = arith.constant 0 : i32
    return %c0_i32, %c0_i32_0 : i32, i32
  }
  func.func @transform_2(%arg0: i32) -> (i32, i32) {
    %c0_i32 = arith.constant 0 : i32
    %c0_i32_0 = arith.constant 0 : i32
    %c0_i32_1 = arith.constant 0 : i32
    return %c0_i32, %c0_i32_0 : i32, i32
  }
  func.func @transform_3(%arg0: i32) -> (i32, i32) {
    %c0_i32 = arith.constant 0 : i32
    %c0_i32_0 = arith.constant 0 : i32
    %c0_i32_1 = arith.constant 0 : i32
    return %c0_i32, %c0_i32_0 : i32, i32
  }
  func.func @transform_4(%arg0: i32) -> (i32, i32) {
    %c0_i32 = arith.constant 0 : i32
    %c0_i32_0 = arith.constant 0 : i32
    %c0_i32_1 = arith.constant 0 : i32
    return %c0_i32, %c0_i32_0 : i32, i32
  }
  func.func @transform_5(%arg0: i32) -> (i32, i32) {
    %c0_i32 = arith.constant 0 : i32
    %c0_i32_0 = arith.constant 0 : i32
    return %arg0, %c0_i32 : i32, i32
  }
}

</mosaic_0001>

<llo_original>
// kernel: tpu_custom_call.1
$region0: #{tpu_custom_call.1}
  #allocation0 [shape = 'u32[]', space=smem, size = 0x4, offset = 0x4, fixed_abs, tag = 'smem constant byte address 0x4 - core index']
  #allocation1 [shape = 'u32[144,128]{1,0:T(1,128)}', space=vmem, size = 0x12000, scoped, tag = 'internal scratch']
  %s0 = inlined_call_operand.vmem [shape: f32[128,128], index: 0, kind: input, shape index: {}]
  %s1 = inlined_call_operand.vmem [shape: f32[1,128], index: 1, kind: input, shape index: {}]
  %s2 = inlined_call_operand.vmem [shape: f32[1,128], index: 2, kind: input, shape index: {}]
  %s3 = inlined_call_operand.vmem [shape: f32[128,8], index: 3, kind: input, shape index: {}]
  %s4 = inlined_call_operand.vmem [shape: f32[8,128], index: 4, kind: input, shape index: {}]
  %s5 = inlined_call_operand.hbm [shape: f32[128,128], index: 5, kind: output, shape index: {}]
  %s6 = sld [smem:[#allocation0]]
  $region53: #{tpu_custom_call.1} parent=0
    _
  %s8 = ssub.s32 1, %s6
  %s9 = scalar_select 0, %s8, %s6
  $region1: #{tpu_custom_call.1} parent=0
    #allocation2 [shape = 'u8[65536]{0}', space=vmem, size = 0x10000, scoped, tag = 'output window, operand 0']
    #allocation3 [shape = 's32[2]{0}', space=sflag, size = 0x8, scoped, tag = 'scoped memory for tpu_custom_call.1']
    %10 = vsyncpa [#allocation3], 0
    %s11 = scalar_lea.sflag [#allocation3], 1
    %12 = vsyncpa %s11, 0
    loop: start=0, step=1, limit=4
    $region2: #{tpu_custom_call.1} parent=1 // loop_pre_header
      _
    $region3: #{tpu_custom_call.1} parent=1 // loop_header
      %s14 = sphi 0, %s18
      %p15 = scmp.ge.s32.totalorder %s14, 4
      %s24 = sphi 0, %s26
      %s27 = sphi 0, %s24
      %s28 = sphi 0, %s27
      %s44 = sphi 0, %s28
      %s48 = sphi 0, %s48
      %s50 = sphi 0, %s48
      %s51 = sphi 0, %s50
      %s65 = sphi 0, %s51
      %s69 = sphi 0, %s69
      %s71 = sphi 0, %s69
      %s72 = sphi 0, %s71
      %s86 = sphi 0, %s72
      %s90 = sphi 0, %s90
      %s92 = sphi 0, %s90
      %s93 = sphi 0, %s92
      %s107 = sphi 0, %s93
      %s111 = sphi 0, %s111
      %s113 = sphi 0, %s111
      %s114 = sphi 0, %s113
      %s128 = sphi 0, %s114
      %s134 = sphi 0, %s136
      %s137 = sphi 0, %s134
      %s138 = sphi 0, %s137
      %s154 = sphi 0, %s138
    $region4: #{tpu_custom_call.1} parent=1 // loop_header_branch
      %17 = sbr.rel (%p15) target = $region8
    $region5: #{tpu_custom_call.1} parent=1 // loop_body
      %s19 = ssub.s32 %s14, 1
      %s20 = ssub.s32 %s14, 2
      %s21 = sadd.s32 %s14, 1
      %s22 = ssub.s32 %s14, %s21
      %p23 = scmp.eq.s32.totalorder %s22, 0
      %s25 = sadd.s32 %s24, 1
      %s26 = scalar_select %p23, %s24, %s25
      %p29 = pneg %p23
      %p30 = scmp.eq.s32.totalorder %s14, 1
      %p31 = por %p29, %p30
      %p32 = scmp.ne.s32.totalorder %s24, %s27
      %p33 = scmp.eq.s32.totalorder %s14, 0
      %p34 = por %p32, %p33
      %p35 = scmp.ne.s32.totalorder %s24, %s27
      %p36 = scmp.eq.s32.totalorder %s19, 1
      %p37 = por %p35, %p36
      %p38 = scmp.ne.s32.totalorder %s27, %s28
      %p39 = scmp.eq.s32.totalorder %s19, 0
      %p40 = por %p38, %p39
      %p41 = scmp.ne.s32.totalorder %s27, %s28
      %p42 = scmp.eq.s32.totalorder %s20, 1
      %p43 = por %p41, %p42
      %p45 = scmp.ne.s32.totalorder %s28, %s44
      %p46 = scmp.eq.s32.totalorder %s20, 0
      %p47 = por %p45, %p46
      %s49 = sadd.s32 %s48, 1
      %p52 = scmp.eq.s32.totalorder %s14, 1
      %p53 = scmp.ne.s32.totalorder %s48, %s50
      %p54 = scmp.eq.s32.totalorder %s14, 0
      %p55 = por %p53, %p54
      %p56 = scmp.ne.s32.totalorder %s48, %s50
      %p57 = scmp.eq.s32.totalorder %s19, 1
      %p58 = por %p56, %p57
      %p59 = scmp.ne.s32.totalorder %s50, %s51
      %p60 = scmp.eq.s32.totalorder %s19, 0
      %p61 = por %p59, %p60
      %p62 = scmp.ne.s32.totalorder %s50, %s51
      %p63 = scmp.eq.s32.totalorder %s20, 1
      %p64 = por %p62, %p63
      %p66 = scmp.ne.s32.totalorder %s51, %s65
      %p67 = scmp.eq.s32.totalorder %s20, 0
      %p68 = por %p66, %p67
      %s70 = sadd.s32 %s69, 1
      %p73 = scmp.eq.s32.totalorder %s14, 1
      %p74 = scmp.ne.s32.totalorder %s69, %s71
      %p75 = scmp.eq.s32.totalorder %s14, 0
      %p76 = por %p74, %p75
      %p77 = scmp.ne.s32.totalorder %s69, %s71
      %p78 = scmp.eq.s32.totalorder %s19, 1
      %p79 = por %p77, %p78
      %p80 = scmp.ne.s32.totalorder %s71, %s72
      %p81 = scmp.eq.s32.totalorder %s19, 0
      %p82 = por %p80, %p81
      %p83 = scmp.ne.s32.totalorder %s71, %s72
      %p84 = scmp.eq.s32.totalorder %s20, 1
      %p85 = por %p83, %p84
      %p87 = scmp.ne.s32.totalorder %s72, %s86
      %p88 = scmp.eq.s32.totalorder %s20, 0
      %p89 = por %p87, %p88
      %s91 = sadd.s32 %s90, 1
      %p94 = scmp.eq.s32.totalorder %s14, 1
      %p95 = scmp.ne.s32.totalorder %s90, %s92
      %p96 = scmp.eq.s32.totalorder %s14, 0
      %p97 = por %p95, %p96
      %p98 = scmp.ne.s32.totalorder %s90, %s92
      %p99 = scmp.eq.s32.totalorder %s19, 1
      %p100 = por %p98, %p99
      %p101 = scmp.ne.s32.totalorder %s92, %s93
      %p102 = scmp.eq.s32.totalorder %s19, 0
      %p103 = por %p101, %p102
      %p104 = scmp.ne.s32.totalorder %s92, %s93
      %p105 = scmp.eq.s32.totalorder %s20, 1
      %p106 = por %p104, %p105
      %p108 = scmp.ne.s32.totalorder %s93, %s107
      %p109 = scmp.eq.s32.totalorder %s20, 0
      %p110 = por %p108, %p109
      %s112 = sadd.s32 %s111, 1
      %p115 = scmp.eq.s32.totalorder %s14, 1
      %p116 = scmp.ne.s32.totalorder %s111, %s113
      %p117 = scmp.eq.s32.totalorder %s14, 0
      %p118 = por %p116, %p117
      %p119 = scmp.ne.s32.totalorder %s111, %s113
      %p120 = scmp.eq.s32.totalorder %s19, 1
      %p121 = por %p119, %p120
      %p122 = scmp.ne.s32.totalorder %s113, %s114
      %p123 = scmp.eq.s32.totalorder %s19, 0
      %p124 = por %p122, %p123
      %p125 = scmp.ne.s32.totalorder %s113, %s114
      %p126 = scmp.eq.s32.totalorder %s20, 1
      %p127 = por %p125, %p126
      %p129 = scmp.ne.s32.totalorder %s114, %s128
      %p130 = scmp.eq.s32.totalorder %s20, 0
      %p131 = por %p129, %p130
      %s132 = ssub.s32 %s14, %s21
      %p133 = scmp.eq.s32.totalorder %s132, 0
      %s135 = sadd.s32 %s134, 1
      %s136 = scalar_select %p133, %s134, %s135
      %p139 = pneg %p133
      %p140 = scmp.eq.s32.totalorder %s14, 1
      %p141 = por %p139, %p140
      %p142 = scmp.ne.s32.totalorder %s134, %s137
      %p143 = scmp.eq.s32.totalorder %s14, 0
      %p144 = por %p142, %p143
      %p145 = scmp.ne.s32.totalorder %s134, %s137
      %p146 = scmp.eq.s32.totalorder %s19, 1
      %p147 = por %p145, %p146
      %p148 = scmp.ne.s32.totalorder %s137, %s138
      %p149 = scmp.eq.s32.totalorder %s19, 0
      %p150 = por %p148, %p149
      %p151 = scmp.ne.s32.totalorder %s137, %s138
      %p152 = scmp.eq.s32.totalorder %s20, 1
      %p153 = por %p151, %p152
      %p155 = scmp.ne.s32.totalorder %s138, %s154
      %p156 = scmp.eq.s32.totalorder %s20, 0
      %p157 = por %p155, %p156
      %p158 = scmp.le.s32.totalorder 1, %s14
      %p159 = scmp.lt.s32.totalorder %s14, 3
      %p160 = pnand %p158, %p159
      %p161 = pneg %p160
      // Predicated region
      $region9: #{tpu_custom_call.1} parent=5 // pred_check
        _
      $region10: #{tpu_custom_call.1} parent=5 // pred_check_branch
        %163 = sbr.rel (%p160) target = $region12
      $region11: #{tpu_custom_call.1} parent=5 // pred_region
        %s164 = ssub.s32 %s14, 1
        // Predicated region
        $region13: #{tpu_custom_call.1} parent=11 // pred_check
          %p165 = pneg %p61
        $region14: #{tpu_custom_call.1} parent=11 // pred_check_branch
          %167 = sbr.rel (%p165) target = $region16
        $region15: #{tpu_custom_call.1} parent=11 // pred_region
          _
        $region16: #{tpu_custom_call.1} parent=11 // pred_fallthru
          _
        // Predicated region
        $region17: #{tpu_custom_call.1} parent=11 // pred_check
          %p168 = pneg %p82
        $region18: #{tpu_custom_call.1} parent=11 // pred_check_branch
          %170 = sbr.rel (%p168) target = $region20
        $region19: #{tpu_custom_call.1} parent=11 // pred_region
          _
        $region20: #{tpu_custom_call.1} parent=11 // pred_fallthru
          _
        // Predicated region
        $region21: #{tpu_custom_call.1} parent=11 // pred_check
          %p171 = pneg %p103
        $region22: #{tpu_custom_call.1} parent=11 // pred_check_branch
          %173 = sbr.rel (%p171) target = $region24
        $region23: #{tpu_custom_call.1} parent=11 // pred_region
          _
        $region24: #{tpu_custom_call.1} parent=11 // pred_fallthru
          _
        // Predicated region
        $region25: #{tpu_custom_call.1} parent=11 // pred_check
          %p174 = pneg %p124
        $region26: #{tpu_custom_call.1} parent=11 // pred_check_branch
          %176 = sbr.rel (%p174) target = $region28
        $region27: #{tpu_custom_call.1} parent=11 // pred_region
          _
        $region28: #{tpu_custom_call.1} parent=11 // pred_fallthru
          _
      $region12: #{tpu_custom_call.1} parent=5 // pred_fallthru
        _
      %p177 = scmp.lt.s32.totalorder %s14, 2
      // Predicated region
      $region29: #{tpu_custom_call.1} parent=5 // pred_check
        %p178 = pneg %p177
      $region30: #{tpu_custom_call.1} parent=5 // pred_check_branch
        %180 = sbr.rel (%p178) target = $region32
      $region31: #{tpu_custom_call.1} parent=5 // pred_region
        // Predicated region
        $region33: #{tpu_custom_call.1} parent=31 // pred_check
          %p181 = pneg %p34
        $region34: #{tpu_custom_call.1} parent=31 // pred_check_branch
          %183 = sbr.rel (%p181) target = $region36
        $region35: #{tpu_custom_call.1} parent=31 // pred_region
          %s184 = smul.u32 8, %s14
          %p185 = scmp.lt.s32.totalorder %s184, 15
          %s186 = scalar_select %p185, %s184, 15
          %s187 = smul.addr %s186, 8
          %s188 = scalar_lea.vmem %s0, %s187
          %s189 = smul.u32 8, %s14
        $region36: #{tpu_custom_call.1} parent=31 // pred_fallthru
          _
      $region32: #{tpu_custom_call.1} parent=5 // pred_fallthru
        _
      %p190 = scmp.le.s32.totalorder 1, %s14
      %p191 = scmp.lt.s32.totalorder %s14, 3
      %p192 = pnand %p190, %p191
      %p193 = pneg %p192
      // Predicated region
      $region37: #{tpu_custom_call.1} parent=5 // pred_check
        _
      $region38: #{tpu_custom_call.1} parent=5 // pred_check_branch
        %195 = sbr.rel (%p192) target = $region40
      $region39: #{tpu_custom_call.1} parent=5 // pred_region
        %s196 = ssub.s32 %s14, 1
        %s197 = smul.u32 8, %s19
        %p198 = scmp.lt.s32.totalorder %s197, 15
        %s199 = scalar_select %p198, %s197, 15
        %s200 = smul.addr %s199, 8
        %s201 = scalar_lea.vmem %s0, %s200
        %p202 = pneg %p40
        %p203 = pneg %p37
        %p204 = pneg %p61
        %p205 = pneg %p58
        %p206 = pneg %p82
        %p207 = pneg %p79
        %p208 = pneg %p103
        %p209 = pneg %p100
        %p210 = pneg %p124
        %p211 = pneg %p121
        %p212 = pneg %p150
        %p213 = pneg %p147
        %s214 = sand.u32 %s137, 1
        %s215 = scalar_lea.sflag [#allocation3], %s214
        %s216 = sand.u32 %s137, 1
        %s217 = smul.addr %s216, 64
        %s218 = scalar_lea.vmem [#allocation2], %s217
        %s219 = smul.u32 8, %s19
        %p220 = scmp.lt.s32.totalorder %s219, 15
        %s221 = scalar_select %p220, %s219, 15
        %s222 = smul.addr %s221, 8
        %s223 = scalar_lea.vmem %s0, %s222
        %s224 = smul.u32 8, %s19
        %s225 = smul.u32 8, %s19
        %v226 = vld [vmem:[%s223] sm:$0xff]
        %v227 = vld [vmem:[%s223 + $0x8] sm:$0xff]
        %v228 = vld [vmem:[%s223 + $0x10] sm:$0xff]
        %v229 = vld [vmem:[%s223 + $0x18] sm:$0xff]
        %v230 = vld [vmem:[%s223 + $0x20] sm:$0xff]
        %v231 = vld [vmem:[%s223 + $0x28] sm:$0xff]
        %v232 = vld [vmem:[%s223 + $0x30] sm:$0xff]
        %v233 = vld [vmem:[%s223 + $0x38] sm:$0xff]
        %v234 = vld [vmem:[%s3] sm:$0xff]
        %v235 = vld [vmem:[%s3 + $0x8] sm:$0xff]
        %v236 = vld [vmem:[%s3 + $0x10] sm:$0xff]
        %v237 = vld [vmem:[%s3 + $0x18] sm:$0xff]
        %v238 = vld [vmem:[%s3 + $0x20] sm:$0xff]
        %v239 = vld [vmem:[%s3 + $0x28] sm:$0xff]
        %v240 = vld [vmem:[%s3 + $0x30] sm:$0xff]
        %v241 = vld [vmem:[%s3 + $0x38] sm:$0xff]
        %v242 = vld [vmem:[%s3 + $0x40] sm:$0xff]
        %v243 = vld [vmem:[%s3 + $0x48] sm:$0xff]
        %v244 = vld [vmem:[%s3 + $0x50] sm:$0xff]
        %v245 = vld [vmem:[%s3 + $0x58] sm:$0xff]
        %v246 = vld [vmem:[%s3 + $0x60] sm:$0xff]
        %v247 = vld [vmem:[%s3 + $0x68] sm:$0xff]
        %v248 = vld [vmem:[%s3 + $0x70] sm:$0xff]
        %v249 = vld [vmem:[%s3 + $0x78] sm:$0xff]
        %v250 = vld [vmem:[%s4] sm:$0xff]
        %v251 = vld [vmem:[%s1] sm:$0x1]
        %v252 = vld [vmem:[%s2] sm:$0x1]
        %253 = vmatprep.subr.mxu0 0.0
        %v254 = vand.u32 %v234, 4294901760
        %255 = vmatpush1.msra.mxu0 %v254
        %256 = vmatprep.subr.mxu0 0.0
        %v257 = vand.u32 %v235, 4294901760
        %258 = vmatpush1.msra.mxu0 %v257
        %259 = vmatprep.subr.mxu0 0.0
        %v260 = vand.u32 %v236, 4294901760
        %261 = vmatpush1.msra.mxu0 %v260
        %262 = vmatprep.subr.mxu0 0.0
        %v263 = vand.u32 %v237, 4294901760
        %264 = vmatpush1.msra.mxu0 %v263
        %265 = vmatprep.subr.mxu0 0.0
        %v266 = vand.u32 %v238, 4294901760
        %267 = vmatpush1.msra.mxu0 %v266
        %268 = vmatprep.subr.mxu0 0.0
        %v269 = vand.u32 %v239, 4294901760
        %270 = vmatpush1.msra.mxu0 %v269
        %271 = vmatprep.subr.mxu0 0.0
        %v272 = vand.u32 %v240, 4294901760
        %273 = vmatpush1.msra.mxu0 %v272
        %274 = vmatprep.subr.mxu0 0.0
        %v275 = vand.u32 %v241, 4294901760
        %276 = vmatpush1.msra.mxu0 %v275
        %277 = vmatprep.subr.mxu0 0.0
        %v278 = vand.u32 %v242, 4294901760
        %279 = vmatpush1.msra.mxu0 %v278
        %280 = vmatprep.subr.mxu0 0.0
        %v281 = vand.u32 %v243, 4294901760
        %282 = vmatpush1.msra.mxu0 %v281
        %283 = vmatprep.subr.mxu0 0.0
        %v284 = vand.u32 %v244, 4294901760
        %285 = vmatpush1.msra.mxu0 %v284
        %286 = vmatprep.subr.mxu0 0.0
        %v287 = vand.u32 %v245, 4294901760
        %288 = vmatpush1.msra.mxu0 %v287
        %289 = vmatprep.subr.mxu0 0.0
        %v290 = vand.u32 %v246, 4294901760
        %291 = vmatpush1.msra.mxu0 %v290
        %292 = vmatprep.subr.mxu0 0.0
        %v293 = vand.u32 %v247, 4294901760
        %294 = vmatpush1.msra.mxu0 %v293
        %295 = vmatprep.subr.mxu0 0.0
        %v296 = vand.u32 %v248, 4294901760
        %297 = vmatpush1.msra.mxu0 %v296
        %298 = vmatprep.subr.mxu0 0.0
        %v299 = vand.u32 %v249, 4294901760
        %300 = vmatpush1.msra.mxu0 %v299
        %301 = vmatprep.subr.mxu0 0.0
        %302 = vmatpush1.msra.mxu0 0.0
        %303 = vmatprep.subr.mxu0 0.0
        %304 = vmatpush1.msra.mxu0 0.0
        %305 = vmatprep.subr.mxu0 0.0
        %306 = vmatpush1.msra.mxu0 0.0
        %307 = vmatprep.subr.mxu0 0.0
        %308 = vmatpush1.msra.mxu0 0.0
        %309 = vmatprep.subr.mxu0 0.0
        %310 = vmatpush1.msra.mxu0 0.0
        %311 = vmatprep.subr.mxu0 0.0
        %312 = vmatpush1.msra.mxu0 0.0
        %313 = vmatprep.subr.mxu0 0.0
        %314 = vmatpush1.msra.mxu0 0.0
        %315 = vmatprep.subr.mxu0 0.0
        %316 = vmatpush1.msra.mxu0 0.0
        %317 = vmatprep.subr.mxu0 0.0
        %318 = vmatpush1.msra.mxu0 0.0
        %319 = vmatprep.subr.mxu0 0.0
        %320 = vmatpush1.msra.mxu0 0.0
        %321 = vmatprep.subr.mxu0 0.0
        %322 = vmatpush1.msra.mxu0 0.0
        %323 = vmatprep.subr.mxu0 0.0
        %324 = vmatpush1.msra.mxu0 0.0
        %325 = vmatprep.subr.mxu0 0.0
        %326 = vmatpush1.msra.mxu0 0.0
        %327 = vmatprep.subr.mxu0 0.0
        %328 = vmatpush1.msra.mxu0 0.0
        %329 = vmatprep.subr.mxu0 0.0
        %330 = vmatpush1.msra.mxu0 0.0
        %331 = vmatprep.subr.mxu0 0.0
        %332 = vmatpush1.msra.mxu0 0.0
        %333 = vmatprep.mubr.f32.mxu0 0.0
        %v334 = vand.u32 %v226, 4294901760
        %v335 = vsub.f32 %v226, %v334
        %v336 = vand.u32 %v335, 4294901760
        %v337 = vsub.f32 %v335, %v336
        %v338 = vand.u32 %v337, 4294901760
        %339 = vmatmul.mubr.f32.gmra.mrb[0].mxu0 %v338
        %v340 = vpop.f32.mrb[0].mxu0
        %v341 = vadd.f32 0.0, %v340
        %v342 = vpop.f32.mrb[0].mxu0
        %343 = vmatprep.mubr.f32.mxu0 0.0
        %v344 = vand.u32 %v227, 4294901760
        %v345 = vsub.f32 %v227, %v344
        %v346 = vand.u32 %v345, 4294901760
        %v347 = vsub.f32 %v345, %v346
        %v348 = vand.u32 %v347, 4294901760
        %349 = vmatmul.mubr.f32.gmra.mrb[0].mxu0 %v348
        %v350 = vpop.f32.mrb[0].mxu0
        %v351 = vadd.f32 0.0, %v350
        %v352 = vpop.f32.mrb[0].mxu0
        %353 = vmatprep.mubr.f32.mxu0 0.0
        %v354 = vand.u32 %v228, 4294901760
        %v355 = vsub.f32 %v228, %v354
        %v356 = vand.u32 %v355, 4294901760
        %v357 = vsub.f32 %v355, %v356
        %v358 = vand.u32 %v357, 4294901760
        %359 = vmatmul.mubr.f32.gmra.mrb[0].mxu0 %v358
        %v360 = vpop.f32.mrb[0].mxu0
        %v361 = vadd.f32 0.0, %v360
        %v362 = vpop.f32.mrb[0].mxu0
        %363 = vmatprep.mubr.f32.mxu0 0.0
        %v364 = vand.u32 %v229, 4294901760
        %v365 = vsub.f32 %v229, %v364
        %v366 = vand.u32 %v365, 4294901760
        %v367 = vsub.f32 %v365, %v366
        %v368 = vand.u32 %v367, 4294901760
        %369 = vmatmul.mubr.f32.gmra.mrb[0].mxu0 %v368
        %v370 = vpop.f32.mrb[0].mxu0
        %v371 = vadd.f32 0.0, %v370
        %v372 = vpop.f32.mrb[0].mxu0
        %373 = vmatprep.mubr.f32.mxu0 0.0
        %v374 = vand.u32 %v230, 4294901760
        %v375 = vsub.f32 %v230, %v374
        %v376 = vand.u32 %v375, 4294901760
        %v377 = vsub.f32 %v375, %v376
        %v378 = vand.u32 %v377, 4294901760
        %379 = vmatmul.mubr.f32.gmra.mrb[0].mxu0 %v378
        %v380 = vpop.f32.mrb[0].mxu0
        %v381 = vadd.f32 0.0, %v380
        %v382 = vpop.f32.mrb[0].mxu0
        %383 = vmatprep.mubr.f32.mxu0 0.0
        %v384 = vand.u32 %v231, 4294901760
        %v385 = vsub.f32 %v231, %v384
        %v386 = vand.u32 %v385, 4294901760
        %v387 = vsub.f32 %v385, %v386
        %v388 = vand.u32 %v387, 4294901760
        %389 = vmatmul.mubr.f32.gmra.mrb[0].mxu0 %v388
        %v390 = vpop.f32.mrb[0].mxu0
        %v391 = vadd.f32 0.0, %v390
        %v392 = vpop.f32.mrb[0].mxu0
        %393 = vmatprep.mubr.f32.mxu0 0.0
        %v394 = vand.u32 %v232, 4294901760
        %v395 = vsub.f32 %v232, %v394
        %v396 = vand.u32 %v395, 4294901760
        %v397 = vsub.f32 %v395, %v396
        %v398 = vand.u32 %v397, 4294901760
        %399 = vmatmul.mubr.f32.gmra.mrb[0].mxu0 %v398
        %v400 = vpop.f32.mrb[0].mxu0
        %v401 = vadd.f32 0.0, %v400
        %v402 = vpop.f32.mrb[0].mxu0
        %403 = vmatprep.mubr.f32.mxu0 0.0
        %v404 = vand.u32 %v233, 4294901760
        %v405 = vsub.f32 %v233, %v404
        %v406 = vand.u32 %v405, 4294901760
        %v407 = vsub.f32 %v405, %v406
        %v408 = vand.u32 %v407, 4294901760
        %409 = vmatmul.mubr.f32.gmra.mrb[0].mxu0 %v408
        %v410 = vpop.f32.mrb[0].mxu0
        %v411 = vadd.f32 0.0, %v410
        %v412 = vpop.f32.mrb[0].mxu0
        %413 = vdwg.mxu0
        %414 = vmatprep.subr.mxu0 0.0
        %v415 = vand.u32 %v234, 4294901760
        %v416 = vsub.f32 %v234, %v415
        %v417 = vand.u32 %v416, 4294901760
        %v418 = vsub.f32 %v416, %v417
        %v419 = vand.u32 %v418, 4294901760
        %420 = vmatpush1.msra.mxu0 %v419
        %421 = vmatprep.subr.mxu0 0.0
        %v422 = vand.u32 %v235, 4294901760
        %v423 = vsub.f32 %v235, %v422
        %v424 = vand.u32 %v423, 4294901760
        %v425 = vsub.f32 %v423, %v424
        %v426 = vand.u32 %v425, 4294901760
        %427 = vmatpush1.msra.mxu0 %v426
        %428 = vmatprep.subr.mxu0 0.0
        %v429 = vand.u32 %v236, 4294901760
        %v430 = vsub.f32 %v236, %v429
        %v431 = vand.u32 %v430, 4294901760
        %v432 = vsub.f32 %v430, %v431
        %v433 = vand.u32 %v432, 4294901760
        %434 = vmatpush1.msra.mxu0 %v433
        %435 = vmatprep.subr.mxu0 0.0
        %v436 = vand.u32 %v237, 4294901760
        %v437 = vsub.f32 %v237, %v436
        %v438 = vand.u32 %v437, 4294901760
        %v439 = vsub.f32 %v437, %v438
        %v440 = vand.u32 %v439, 4294901760
        %441 = vmatpush1.msra.mxu0 %v440
        %442 = vmatprep.subr.mxu0 0.0
        %v443 = vand.u32 %v238, 4294901760
        %v444 = vsub.f32 %v238, %v443
        %v445 = vand.u32 %v444, 4294901760
        %v446 = vsub.f32 %v444, %v445
        %v447 = vand.u32 %v446, 4294901760
        %448 = vmatpush1.msra.mxu0 %v447
        %449 = vmatprep.subr.mxu0 0.0
        %v450 = vand.u32 %v239, 4294901760
        %v451 = vsub.f32 %v239, %v450
        %v452 = vand.u32 %v451, 4294901760
        %v453 = vsub.f32 %v451, %v452
        %v454 = vand.u32 %v453, 4294901760
        %455 = vmatpush1.msra.mxu0 %v454
        %456 = vmatprep.subr.mxu0 0.0
        %v457 = vand.u32 %v240, 4294901760
        %v458 = vsub.f32 %v240, %v457
        %v459 = vand.u32 %v458, 4294901760
        %v460 = vsub.f32 %v458, %v459
        %v461 = vand.u32 %v460, 4294901760
        %462 = vmatpush1.msra.mxu0 %v461
        %463 = vmatprep.subr.mxu0 0.0
        %v464 = vand.u32 %v241, 4294901760
        %v465 = vsub.f32 %v241, %v464
        %v466 = vand.u32 %v465, 4294901760
        %v467 = vsub.f32 %v465, %v466
        %v468 = vand.u32 %v467, 4294901760
        %469 = vmatpush1.msra.mxu0 %v468
        %470 = vmatprep.subr.mxu0 0.0
        %v471 = vand.u32 %v242, 4294901760
        %v472 = vsub.f32 %v242, %v471
        %v473 = vand.u32 %v472, 4294901760
        %v474 = vsub.f32 %v472, %v473
        %v475 = vand.u32 %v474, 4294901760
        %476 = vmatpush1.msra.mxu0 %v475
        %477 = vmatprep.subr.mxu0 0.0
        %v478 = vand.u32 %v243, 4294901760
        %v479 = vsub.f32 %v243, %v478
        %v480 = vand.u32 %v479, 4294901760
        %v481 = vsub.f32 %v479, %v480
        %v482 = vand.u32 %v481, 4294901760
        %483 = vmatpush1.msra.mxu0 %v482
        %484 = vmatprep.subr.mxu0 0.0
        %v485 = vand.u32 %v244, 4294901760
        %v486 = vsub.f32 %v244, %v485
        %v487 = vand.u32 %v486, 4294901760
        %v488 = vsub.f32 %v486, %v487
        %v489 = vand.u32 %v488, 4294901760
        %490 = vmatpush1.msra.mxu0 %v489
        %491 = vmatprep.subr.mxu0 0.0
        %v492 = vand.u32 %v245, 4294901760
        %v493 = vsub.f32 %v245, %v492
        %v494 = vand.u32 %v493, 4294901760
        %v495 = vsub.f32 %v493, %v494
        %v496 = vand.u32 %v495, 4294901760
        %497 = vmatpush1.msra.mxu0 %v496
        %498 = vmatprep.subr.mxu0 0.0
        %v499 = vand.u32 %v246, 4294901760
        %v500 = vsub.f32 %v246, %v499
        %v501 = vand.u32 %v500, 4294901760
        %v502 = vsub.f32 %v500, %v501
        %v503 = vand.u32 %v502, 4294901760
        %504 = vmatpush1.msra.mxu0 %v503
        %505 = vmatprep.subr.mxu0 0.0
        %v506 = vand.u32 %v247, 4294901760
        %v507 = vsub.f32 %v247, %v506
        %v508 = vand.u32 %v507, 4294901760
        %v509 = vsub.f32 %v507, %v508
        %v510 = vand.u32 %v509, 4294901760
        %511 = vmatpush1.msra.mxu0 %v510
        %512 = vmatprep.subr.mxu0 0.0
        %v513 = vand.u32 %v248, 4294901760
        %v514 = vsub.f32 %v248, %v513
        %v515 = vand.u32 %v514, 4294901760
        %v516 = vsub.f32 %v514, %v515
        %v517 = vand.u32 %v516, 4294901760
        %518 = vmatpush1.msra.mxu0 %v517
        %519 = vmatprep.subr.mxu0 0.0
        %v520 = vand.u32 %v249, 4294901760
        %v521 = vsub.f32 %v249, %v520
        %v522 = vand.u32 %v521, 4294901760
        %v523 = vsub.f32 %v521, %v522
        %v524 = vand.u32 %v523, 4294901760
        %525 = vmatpush1.msra.mxu0 %v524
        %526 = vmatprep.subr.mxu0 0.0
        %527 = vmatpush1.msra.mxu0 0.0
        %528 = vmatprep.subr.mxu0 0.0
        %529 = vmatpush1.msra.mxu0 0.0
        %530 = vmatprep.subr.mxu0 0.0
        %531 = vmatpush1.msra.mxu0 0.0
        %532 = vmatprep.subr.mxu0 0.0
        %533 = vmatpush1.msra.mxu0 0.0
        %534 = vmatprep.subr.mxu0 0.0
        %535 = vmatpush1.msra.mxu0 0.0
        %536 = vmatprep.subr.mxu0 0.0
        %537 = vmatpush1.msra.mxu0 0.0
        %538 = vmatprep.subr.mxu0 0.0
        %539 = vmatpush1.msra.mxu0 0.0
        %540 = vmatprep.subr.mxu0 0.0
        %541 = vmatpush1.msra.mxu0 0.0
        %542 = vmatprep.subr.mxu0 0.0
        %543 = vmatpush1.msra.mxu0 0.0
        %544 = vmatprep.subr.mxu0 0.0
        %545 = vmatpush1.msra.mxu0 0.0
        %546 = vmatprep.subr.mxu0 0.0
        %547 = vmatpush1.msra.mxu0 0.0
        %548 = vmatprep.subr.mxu0 0.0
        %549 = vmatpush1.msra.mxu0 0.0
        %550 = vmatprep.subr.mxu0 0.0
        %551 = vmatpush1.msra.mxu0 0.0
        %552 = vmatprep.subr.mxu0 0.0
        %553 = vmatpush1.msra.mxu0 0.0
        %554 = vmatprep.subr.mxu0 0.0
        %555 = vmatpush1.msra.mxu0 0.0
        %556 = vmatprep.subr.mxu0 0.0
        %557 = vmatpush1.msra.mxu0 0.0
        %558 = vmatprep.mubr.f32.mxu0 0.0
        %v559 = vand.u32 %v226, 4294901760
        %560 = vmatmul.mubr.f32.gmra.mrb[0].mxu0 %v559
        %v561 = vpop.f32.mrb[0].mxu0
        %v562 = vadd.f32 %v341, %v561
        %v563 = vpop.f32.mrb[0].mxu0
        %564 = vmatprep.mubr.f32.mxu0 0.0
        %v565 = vand.u32 %v227, 4294901760
        %566 = vmatmul.mubr.f32.gmra.mrb[0].mxu0 %v565
        %v567 = vpop.f32.mrb[0].mxu0
        %v568 = vadd.f32 %v351, %v567
        %v569 = vpop.f32.mrb[0].mxu0
        %570 = vmatprep.mubr.f32.mxu0 0.0
        %v571 = vand.u32 %v228, 4294901760
        %572 = vmatmul.mubr.f32.gmra.mrb[0].mxu0 %v571
        %v573 = vpop.f32.mrb[0].mxu0
        %v574 = vadd.f32 %v361, %v573
        %v575 = vpop.f32.mrb[0].mxu0
        %576 = vmatprep.mubr.f32.mxu0 0.0
        %v577 = vand.u32 %v229, 4294901760
        %578 = vmatmul.mubr.f32.gmra.mrb[0].mxu0 %v577
        %v579 = vpop.f32.mrb[0].mxu0
        %v580 = vadd.f32 %v371, %v579
        %v581 = vpop.f32.mrb[0].mxu0
        %582 = vmatprep.mubr.f32.mxu0 0.0
        %v583 = vand.u32 %v230, 4294901760
        %584 = vmatmul.mubr.f32.gmra.mrb[0].mxu0 %v583
        %v585 = vpop.f32.mrb[0].mxu0
        %v586 = vadd.f32 %v381, %v585
        %v587 = vpop.f32.mrb[0].mxu0
        %588 = vmatprep.mubr.f32.mxu0 0.0
        %v589 = vand.u32 %v231, 4294901760
        %590 = vmatmul.mubr.f32.gmra.mrb[0].mxu0 %v589
        %v591 = vpop.f32.mrb[0].mxu0
        %v592 = vadd.f32 %v391, %v591
        %v593 = vpop.f32.mrb[0].mxu0
        %594 = vmatprep.mubr.f32.mxu0 0.0
        %v595 = vand.u32 %v232, 4294901760
        %596 = vmatmul.mubr.f32.gmra.mrb[0].mxu0 %v595
        %v597 = vpop.f32.mrb[0].mxu0
        %v598 = vadd.f32 %v401, %v597
        %v599 = vpop.f32.mrb[0].mxu0
        %600 = vmatprep.mubr.f32.mxu0 0.0
        %v601 = vand.u32 %v233, 4294901760
        %602 = vmatmul.mubr.f32.gmra.mrb[0].mxu0 %v601
        %v603 = vpop.f32.mrb[0].mxu0
        %v604 = vadd.f32 %v411, %v603
        %v605 = vpop.f32.mrb[0].mxu0
        %606 = vdwg.mxu0
        %607 = vmatprep.subr.mxu0 0.0
        %v608 = vand.u32 %v234, 4294901760
        %v609 = vsub.f32 %v234, %v608
        %610 = vmatpush1.msra.mxu0 %v609
        %611 = vmatprep.subr.mxu0 0.0
        %v612 = vand.u32 %v235, 4294901760
        %v613 = vsub.f32 %v235, %v612
        %614 = vmatpush1.msra.mxu0 %v613
        %615 = vmatprep.subr.mxu0 0.0
        %v616 = vand.u32 %v236, 4294901760
        %v617 = vsub.f32 %v236, %v616
        %618 = vmatpush1.msra.mxu0 %v617
        %619 = vmatprep.subr.mxu0 0.0
        %v620 = vand.u32 %v237, 4294901760
        %v621 = vsub.f32 %v237, %v620
        %622 = vmatpush1.msra.mxu0 %v621
        %623 = vmatprep.subr.mxu0 0.0
        %v624 = vand.u32 %v238, 4294901760
        %v625 = vsub.f32 %v238, %v624
        %626 = vmatpush1.msra.mxu0 %v625
        %627 = vmatprep.subr.mxu0 0.0
        %v628 = vand.u32 %v239, 4294901760
        %v629 = vsub.f32 %v239, %v628
        %630 = vmatpush1.msra.mxu0 %v629
        %631 = vmatprep.subr.mxu0 0.0
        %v632 = vand.u32 %v240, 4294901760
        %v633 = vsub.f32 %v240, %v632
        %634 = vmatpush1.msra.mxu0 %v633
        %635 = vmatprep.subr.mxu0 0.0
        %v636 = vand.u32 %v241, 4294901760
        %v637 = vsub.f32 %v241, %v636
        %638 = vmatpush1.msra.mxu0 %v637
        %639 = vmatprep.subr.mxu0 0.0
        %v640 = vand.u32 %v242, 4294901760
        %v641 = vsub.f32 %v242, %v640
        %642 = vmatpush1.msra.mxu0 %v641
        %643 = vmatprep.subr.mxu0 0.0
        %v644 = vand.u32 %v243, 4294901760
        %v645 = vsub.f32 %v243, %v644
        %646 = vmatpush1.msra.mxu0 %v645
        %647 = vmatprep.subr.mxu0 0.0
        %v648 = vand.u32 %v244, 4294901760
        %v649 = vsub.f32 %v244, %v648
        %650 = vmatpush1.msra.mxu0 %v649
        %651 = vmatprep.subr.mxu0 0.0
        %v652 = vand.u32 %v245, 4294901760
        %v653 = vsub.f32 %v245, %v652
        %654 = vmatpush1.msra.mxu0 %v653
        %655 = vmatprep.subr.mxu0 0.0
        %v656 = vand.u32 %v246, 4294901760
        %v657 = vsub.f32 %v246, %v656
        %658 = vmatpush1.msra.mxu0 %v657
        %659 = vmatprep.subr.mxu0 0.0
        %v660 = vand.u32 %v247, 4294901760
        %v661 = vsub.f32 %v247, %v660
        %662 = vmatpush1.msra.mxu0 %v661
        %663 = vmatprep.subr.mxu0 0.0
        %v664 = vand.u32 %v248, 4294901760
        %v665 = vsub.f32 %v248, %v664
        %666 = vmatpush1.msra.mxu0 %v665
        %667 = vmatprep.subr.mxu0 0.0
        %v668 = vand.u32 %v249, 4294901760
        %v669 = vsub.f32 %v249, %v668
        %670 = vmatpush1.msra.mxu0 %v669
        %671 = vmatprep.subr.mxu0 0.0
        %672 = vmatpush1.msra.mxu0 0.0
        %673 = vmatprep.subr.mxu0 0.0
        %674 = vmatpush1.msra.mxu0 0.0
        %675 = vmatprep.subr.mxu0 0.0
        %676 = vmatpush1.msra.mxu0 0.0
        %677 = vmatprep.subr.mxu0 0.0
        %678 = vmatpush1.msra.mxu0 0.0
        %679 = vmatprep.subr.mxu0 0.0
        %680 = vmatpush1.msra.mxu0 0.0
        %681 = vmatprep.subr.mxu0 0.0
        %682 = vmatpush1.msra.mxu0 0.0
        %683 = vmatprep.subr.mxu0 0.0
        %684 = vmatpush1.msra.mxu0 0.0
        %685 = vmatprep.subr.mxu0 0.0
        %686 = vmatpush1.msra.mxu0 0.0
        %687 = vmatprep.subr.mxu0 0.0
        %688 = vmatpush1.msra.mxu0 0.0
        %689 = vmatprep.subr.mxu0 0.0
        %690 = vmatpush1.msra.mxu0 0.0
        %691 = vmatprep.subr.mxu0 0.0
        %692 = vmatpush1.msra.mxu0 0.0
        %693 = vmatprep.subr.mxu0 0.0
        %694 = vmatpush1.msra.mxu0 0.0
        %695 = vmatprep.subr.mxu0 0.0
        %696 = vmatpush1.msra.mxu0 0.0
        %697 = vmatprep.subr.mxu0 0.0
        %698 = vmatpush1.msra.mxu0 0.0
        %699 = vmatprep.subr.mxu0 0.0
        %700 = vmatpush1.msra.mxu0 0.0
        %701 = vmatprep.subr.mxu0 0.0
        %702 = vmatpush1.msra.mxu0 0.0
        %703 = vmatprep.mubr.f32.mxu0 0.0
        %v704 = vand.u32 %v226, 4294901760
        %v705 = vsub.f32 %v226, %v704
        %706 = vmatmul.mubr.f32.gmra.mrb[0].mxu0 %v705
        %v707 = vpop.f32.mrb[0].mxu0
        %v708 = vadd.f32 %v562, %v707
        %v709 = vpop.f32.mrb[0].mxu0
        %710 = vmatprep.mubr.f32.mxu0 0.0
        %v711 = vand.u32 %v227, 4294901760
        %v712 = vsub.f32 %v227, %v711
        %713 = vmatmul.mubr.f32.gmra.mrb[0].mxu0 %v712
        %v714 = vpop.f32.mrb[0].mxu0
        %v715 = vadd.f32 %v568, %v714
        %v716 = vpop.f32.mrb[0].mxu0
        %717 = vmatprep.mubr.f32.mxu0 0.0
        %v718 = vand.u32 %v228, 4294901760
        %v719 = vsub.f32 %v228, %v718
        %720 = vmatmul.mubr.f32.gmra.mrb[0].mxu0 %v719
        %v721 = vpop.f32.mrb[0].mxu0
        %v722 = vadd.f32 %v574, %v721
        %v723 = vpop.f32.mrb[0].mxu0
        %724 = vmatprep.mubr.f32.mxu0 0.0
        %v725 = vand.u32 %v229, 4294901760
        %v726 = vsub.f32 %v229, %v725
        %727 = vmatmul.mubr.f32.gmra.mrb[0].mxu0 %v726
        %v728 = vpop.f32.mrb[0].mxu0
        %v729 = vadd.f32 %v580, %v728
        %v730 = vpop.f32.mrb[0].mxu0
        %731 = vmatprep.mubr.f32.mxu0 0.0
        %v732 = vand.u32 %v230, 4294901760
        %v733 = vsub.f32 %v230, %v732
        %734 = vmatmul.mubr.f32.gmra.mrb[0].mxu0 %v733
        %v735 = vpop.f32.mrb[0].mxu0
        %v736 = vadd.f32 %v586, %v735
        %v737 = vpop.f32.mrb[0].mxu0
        %738 = vmatprep.mubr.f32.mxu0 0.0
        %v739 = vand.u32 %v231, 4294901760
        %v740 = vsub.f32 %v231, %v739
        %741 = vmatmul.mubr.f32.gmra.mrb[0].mxu0 %v740
        %v742 = vpop.f32.mrb[0].mxu0
        %v743 = vadd.f32 %v592, %v742
        %v744 = vpop.f32.mrb[0].mxu0
        %745 = vmatprep.mubr.f32.mxu0 0.0
        %v746 = vand.u32 %v232, 4294901760
        %v747 = vsub.f32 %v232, %v746
        %748 = vmatmul.mubr.f32.gmra.mrb[0].mxu0 %v747
        %v749 = vpop.f32.mrb[0].mxu0
        %v750 = vadd.f32 %v598, %v749
        %v751 = vpop.f32.mrb[0].mxu0
        %752 = vmatprep.mubr.f32.mxu0 0.0
        %v753 = vand.u32 %v233, 4294901760
        %v754 = vsub.f32 %v233, %v753
        %755 = vmatmul.mubr.f32.gmra.mrb[0].mxu0 %v754
        %v756 = vpop.f32.mrb[0].mxu0
        %v757 = vadd.f32 %v604, %v756
        %v758 = vpop.f32.mrb[0].mxu0
        %759 = vdwg.mxu0
        %760 = vmatprep.subr.mxu0 0.0
        %v761 = vand.u32 %v234, 4294901760
        %762 = vmatpush1.msra.mxu0 %v761
        %763 = vmatprep.subr.mxu0 0.0
        %v764 = vand.u32 %v235, 4294901760
        %765 = vmatpush1.msra.mxu0 %v764
        %766 = vmatprep.subr.mxu0 0.0
        %v767 = vand.u32 %v236, 4294901760
        %768 = vmatpush1.msra.mxu0 %v767
        %769 = vmatprep.subr.mxu0 0.0
        %v770 = vand.u32 %v237, 4294901760
        %771 = vmatpush1.msra.mxu0 %v770
        %772 = vmatprep.subr.mxu0 0.0
        %v773 = vand.u32 %v238, 4294901760
        %774 = vmatpush1.msra.mxu0 %v773
        %775 = vmatprep.subr.mxu0 0.0
        %v776 = vand.u32 %v239, 4294901760
        %777 = vmatpush1.msra.mxu0 %v776
        %778 = vmatprep.subr.mxu0 0.0
        %v779 = vand.u32 %v240, 4294901760
        %780 = vmatpush1.msra.mxu0 %v779
        %781 = vmatprep.subr.mxu0 0.0
        %v782 = vand.u32 %v241, 4294901760
        %783 = vmatpush1.msra.mxu0 %v782
        %784 = vmatprep.subr.mxu0 0.0
        %v785 = vand.u32 %v242, 4294901760
        %786 = vmatpush1.msra.mxu0 %v785
        %787 = vmatprep.subr.mxu0 0.0
        %v788 = vand.u32 %v243, 4294901760
        %789 = vmatpush1.msra.mxu0 %v788
        %790 = vmatprep.subr.mxu0 0.0
        %v791 = vand.u32 %v244, 4294901760
        %792 = vmatpush1.msra.mxu0 %v791
        %793 = vmatprep.subr.mxu0 0.0
        %v794 = vand.u32 %v245, 4294901760
        %795 = vmatpush1.msra.mxu0 %v794
        %796 = vmatprep.subr.mxu0 0.0
        %v797 = vand.u32 %v246, 4294901760
        %798 = vmatpush1.msra.mxu0 %v797
        %799 = vmatprep.subr.mxu0 0.0
        %v800 = vand.u32 %v247, 4294901760
        %801 = vmatpush1.msra.mxu0 %v800
        %802 = vmatprep.subr.mxu0 0.0
        %v803 = vand.u32 %v248, 4294901760
        %804 = vmatpush1.msra.mxu0 %v803
        %805 = vmatprep.subr.mxu0 0.0
        %v806 = vand.u32 %v249, 4294901760
        %807 = vmatpush1.msra.mxu0 %v806
        %808 = vmatprep.subr.mxu0 0.0
        %809 = vmatpush1.msra.mxu0 0.0
        %810 = vmatprep.subr.mxu0 0.0
        %811 = vmatpush1.msra.mxu0 0.0
        %812 = vmatprep.subr.mxu0 0.0
        %813 = vmatpush1.msra.mxu0 0.0
        %814 = vmatprep.subr.mxu0 0.0
        %815 = vmatpush1.msra.mxu0 0.0
        %816 = vmatprep.subr.mxu0 0.0
        %817 = vmatpush1.msra.mxu0 0.0
        %818 = vmatprep.subr.mxu0 0.0
        %819 = vmatpush1.msra.mxu0 0.0
        %820 = vmatprep.subr.mxu0 0.0
        %821 = vmatpush1.msra.mxu0 0.0
        %822 = vmatprep.subr.mxu0 0.0
        %823 = vmatpush1.msra.mxu0 0.0
        %824 = vmatprep.subr.mxu0 0.0
        %825 = vmatpush1.msra.mxu0 0.0
        %826 = vmatprep.subr.mxu0 0.0
        %827 = vmatpush1.msra.mxu0 0.0
        %828 = vmatprep.subr.mxu0 0.0
        %829 = vmatpush1.msra.mxu0 0.0
        %830 = vmatprep.subr.mxu0 0.0
        %831 = vmatpush1.msra.mxu0 0.0
        %832 = vmatprep.subr.mxu0 0.0
        %833 = vmatpush1.msra.mxu0 0.0
        %834 = vmatprep.subr.mxu0 0.0
        %835 = vmatpush1.msra.mxu0 0.0
        %836 = vmatprep.subr.mxu0 0.0
        %837 = vmatpush1.msra.mxu0 0.0
        %838 = vmatprep.subr.mxu0 0.0
        %839 = vmatpush1.msra.mxu0 0.0
        %840 = vmatprep.mubr.f32.mxu0 0.0
        %v841 = vand.u32 %v226, 4294901760
        %v842 = vsub.f32 %v226, %v841
        %v843 = vand.u32 %v842, 4294901760
        %844 = vmatmul.mubr.f32.gmra.mrb[0].mxu0 %v843
        %v845 = vpop.f32.mrb[0].mxu0
        %v846 = vadd.f32 %v708, %v845
        %v847 = vpop.f32.mrb[0].mxu0
        %848 = vmatprep.mubr.f32.mxu0 0.0
        %v849 = vand.u32 %v227, 4294901760
        %v850 = vsub.f32 %v227, %v849
        %v851 = vand.u32 %v850, 4294901760
        %852 = vmatmul.mubr.f32.gmra.mrb[0].mxu0 %v851
        %v853 = vpop.f32.mrb[0].mxu0
        %v854 = vadd.f32 %v715, %v853
        %v855 = vpop.f32.mrb[0].mxu0
        %856 = vmatprep.mubr.f32.mxu0 0.0
        %v857 = vand.u32 %v228, 4294901760
        %v858 = vsub.f32 %v228, %v857
        %v859 = vand.u32 %v858, 4294901760
        %860 = vmatmul.mubr.f32.gmra.mrb[0].mxu0 %v859
        %v861 = vpop.f32.mrb[0].mxu0
        %v862 = vadd.f32 %v722, %v861
        %v863 = vpop.f32.mrb[0].mxu0
        %864 = vmatprep.mubr.f32.mxu0 0.0
        %v865 = vand.u32 %v229, 4294901760
        %v866 = vsub.f32 %v229, %v865
        %v867 = vand.u32 %v866, 4294901760
        %868 = vmatmul.mubr.f32.gmra.mrb[0].mxu0 %v867
        %v869 = vpop.f32.mrb[0].mxu0
        %v870 = vadd.f32 %v729, %v869
        %v871 = vpop.f32.mrb[0].mxu0
        %872 = vmatprep.mubr.f32.mxu0 0.0
        %v873 = vand.u32 %v230, 4294901760
        %v874 = vsub.f32 %v230, %v873
        %v875 = vand.u32 %v874, 4294901760
        %876 = vmatmul.mubr.f32.gmra.mrb[0].mxu0 %v875
        %v877 = vpop.f32.mrb[0].mxu0
        %v878 = vadd.f32 %v736, %v877
        %v879 = vpop.f32.mrb[0].mxu0
        %880 = vmatprep.mubr.f32.mxu0 0.0
        %v881 = vand.u32 %v231, 4294901760
        %v882 = vsub.f32 %v231, %v881
        %v883 = vand.u32 %v882, 4294901760
        %884 = vmatmul.mubr.f32.gmra.mrb[0].mxu0 %v883
        %v885 = vpop.f32.mrb[0].mxu0
        %v886 = vadd.f32 %v743, %v885
        %v887 = vpop.f32.mrb[0].mxu0
        %888 = vmatprep.mubr.f32.mxu0 0.0
        %v889 = vand.u32 %v232, 4294901760
        %v890 = vsub.f32 %v232, %v889
        %v891 = vand.u32 %v890, 4294901760
        %892 = vmatmul.mubr.f32.gmra.mrb[0].mxu0 %v891
        %v893 = vpop.f32.mrb[0].mxu0
        %v894 = vadd.f32 %v750, %v893
        %v895 = vpop.f32.mrb[0].mxu0
        %896 = vmatprep.mubr.f32.mxu0 0.0
        %v897 = vand.u32 %v233, 4294901760
        %v898 = vsub.f32 %v233, %v897
        %v899 = vand.u32 %v898, 4294901760
        %900 = vmatmul.mubr.f32.gmra.mrb[0].mxu0 %v899
        %v901 = vpop.f32.mrb[0].mxu0
        %v902 = vadd.f32 %v757, %v901
        %v903 = vpop.f32.mrb[0].mxu0
        %904 = vdwg.mxu0
        %905 = vmatprep.subr.mxu0 0.0
        %v906 = vand.u32 %v234, 4294901760
        %v907 = vsub.f32 %v234, %v906
        %v908 = vand.u32 %v907, 4294901760
        %909 = vmatpush1.msra.mxu0 %v908
        %910 = vmatprep.subr.mxu0 0.0
        %v911 = vand.u32 %v235, 4294901760
        %v912 = vsub.f32 %v235, %v911
        %v913 = vand.u32 %v912, 4294901760
        %914 = vmatpush1.msra.mxu0 %v913
        %915 = vmatprep.subr.mxu0 0.0
        %v916 = vand.u32 %v236, 4294901760
        %v917 = vsub.f32 %v236, %v916
        %v918 = vand.u32 %v917, 4294901760
        %919 = vmatpush1.msra.mxu0 %v918
        %920 = vmatprep.subr.mxu0 0.0
        %v921 = vand.u32 %v237, 4294901760
        %v922 = vsub.f32 %v237, %v921
        %v923 = vand.u32 %v922, 4294901760
        %924 = vmatpush1.msra.mxu0 %v923
        %925 = vmatprep.subr.mxu0 0.0
        %v926 = vand.u32 %v238, 4294901760
        %v927 = vsub.f32 %v238, %v926
        %v928 = vand.u32 %v927, 4294901760
        %929 = vmatpush1.msra.mxu0 %v928
        %930 = vmatprep.subr.mxu0 0.0
        %v931 = vand.u32 %v239, 4294901760
        %v932 = vsub.f32 %v239, %v931
        %v933 = vand.u32 %v932, 4294901760
        %934 = vmatpush1.msra.mxu0 %v933
        %935 = vmatprep.subr.mxu0 0.0
        %v936 = vand.u32 %v240, 4294901760
        %v937 = vsub.f32 %v240, %v936
        %v938 = vand.u32 %v937, 4294901760
        %939 = vmatpush1.msra.mxu0 %v938
        %940 = vmatprep.subr.mxu0 0.0
        %v941 = vand.u32 %v241, 4294901760
        %v942 = vsub.f32 %v241, %v941
        %v943 = vand.u32 %v942, 4294901760
        %944 = vmatpush1.msra.mxu0 %v943
        %945 = vmatprep.subr.mxu0 0.0
        %v946 = vand.u32 %v242, 4294901760
        %v947 = vsub.f32 %v242, %v946
        %v948 = vand.u32 %v947, 4294901760
        %949 = vmatpush1.msra.mxu0 %v948
        %950 = vmatprep.subr.mxu0 0.0
        %v951 = vand.u32 %v243, 4294901760
        %v952 = vsub.f32 %v243, %v951
        %v953 = vand.u32 %v952, 4294901760
        %954 = vmatpush1.msra.mxu0 %v953
        %955 = vmatprep.subr.mxu0 0.0
        %v956 = vand.u32 %v244, 4294901760
        %v957 = vsub.f32 %v244, %v956
        %v958 = vand.u32 %v957, 4294901760
        %959 = vmatpush1.msra.mxu0 %v958
        %960 = vmatprep.subr.mxu0 0.0
        %v961 = vand.u32 %v245, 4294901760
        %v962 = vsub.f32 %v245, %v961
        %v963 = vand.u32 %v962, 4294901760
        %964 = vmatpush1.msra.mxu0 %v963
        %965 = vmatprep.subr.mxu0 0.0
        %v966 = vand.u32 %v246, 4294901760
        %v967 = vsub.f32 %v246, %v966
        %v968 = vand.u32 %v967, 4294901760
        %969 = vmatpush1.msra.mxu0 %v968
        %970 = vmatprep.subr.mxu0 0.0
        %v971 = vand.u32 %v247, 4294901760
        %v972 = vsub.f32 %v247, %v971
        %v973 = vand.u32 %v972, 4294901760
        %974 = vmatpush1.msra.mxu0 %v973
        %975 = vmatprep.subr.mxu0 0.0
        %v976 = vand.u32 %v248, 4294901760
        %v977 = vsub.f32 %v248, %v976
        %v978 = vand.u32 %v977, 4294901760
        %979 = vmatpush1.msra.mxu0 %v978
        %980 = vmatprep.subr.mxu0 0.0
        %v981 = vand.u32 %v249, 4294901760
        %v982 = vsub.f32 %v249, %v981
        %v983 = vand.u32 %v982, 4294901760
        %984 = vmatpush1.msra.mxu0 %v983
        %985 = vmatprep.subr.mxu0 0.0
        %986 = vmatpush1.msra.mxu0 0.0
        %987 = vmatprep.subr.mxu0 0.0
        %988 = vmatpush1.msra.mxu0 0.0
        %989 = vmatprep.subr.mxu0 0.0
        %990 = vmatpush1.msra.mxu0 0.0
        %991 = vmatprep.subr.mxu0 0.0
        %992 = vmatpush1.msra.mxu0 0.0
        %993 = vmatprep.subr.mxu0 0.0
        %994 = vmatpush1.msra.mxu0 0.0
        %995 = vmatprep.subr.mxu0 0.0
        %996 = vmatpush1.msra.mxu0 0.0
        %997 = vmatprep.subr.mxu0 0.0
        %998 = vmatpush1.msra.mxu0 0.0
        %999 = vmatprep.subr.mxu0 0.0
        %1000 = vmatpush1.msra.mxu0 0.0
        %1001 = vmatprep.subr.mxu0 0.0
        %1002 = vmatpush1.msra.mxu0 0.0
        %1003 = vmatprep.subr.mxu0 0.0
        %1004 = vmatpush1.msra.mxu0 0.0
        %1005 = vmatprep.subr.mxu0 0.0
        %1006 = vmatpush1.msra.mxu0 0.0
        %1007 = vmatprep.subr.mxu0 0.0
        %1008 = vmatpush1.msra.mxu0 0.0
        %1009 = vmatprep.subr.mxu0 0.0
        %1010 = vmatpush1.msra.mxu0 0.0
        %1011 = vmatprep.subr.mxu0 0.0
        %1012 = vmatpush1.msra.mxu0 0.0
        %1013 = vmatprep.subr.mxu0 0.0
        %1014 = vmatpush1.msra.mxu0 0.0
        %1015 = vmatprep.subr.mxu0 0.0
        %1016 = vmatpush1.msra.mxu0 0.0
        %1017 = vmatprep.mubr.f32.mxu0 0.0
        %v1018 = vand.u32 %v226, 4294901760
        %1019 = vmatmul.mubr.f32.gmra.mrb[0].mxu0 %v1018
        %v1020 = vpop.f32.mrb[0].mxu0
        %v1021 = vadd.f32 %v846, %v1020
        %v1022 = vpop.f32.mrb[0].mxu0
        %1023 = vmatprep.mubr.f32.mxu0 0.0
        %v1024 = vand.u32 %v227, 4294901760
        %1025 = vmatmul.mubr.f32.gmra.mrb[0].mxu0 %v1024
        %v1026 = vpop.f32.mrb[0].mxu0
        %v1027 = vadd.f32 %v854, %v1026
        %v1028 = vpop.f32.mrb[0].mxu0
        %1029 = vmatprep.mubr.f32.mxu0 0.0
        %v1030 = vand.u32 %v228, 4294901760
        %1031 = vmatmul.mubr.f32.gmra.mrb[0].mxu0 %v1030
        %v1032 = vpop.f32.mrb[0].mxu0
        %v1033 = vadd.f32 %v862, %v1032
        %v1034 = vpop.f32.mrb[0].mxu0
        %1035 = vmatprep.mubr.f32.mxu0 0.0
        %v1036 = vand.u32 %v229, 4294901760
        %1037 = vmatmul.mubr.f32.gmra.mrb[0].mxu0 %v1036
        %v1038 = vpop.f32.mrb[0].mxu0
        %v1039 = vadd.f32 %v870, %v1038
        %v1040 = vpop.f32.mrb[0].mxu0
        %1041 = vmatprep.mubr.f32.mxu0 0.0
        %v1042 = vand.u32 %v230, 4294901760
        %1043 = vmatmul.mubr.f32.gmra.mrb[0].mxu0 %v1042
        %v1044 = vpop.f32.mrb[0].mxu0
        %v1045 = vadd.f32 %v878, %v1044
        %v1046 = vpop.f32.mrb[0].mxu0
        %1047 = vmatprep.mubr.f32.mxu0 0.0
        %v1048 = vand.u32 %v231, 4294901760
        %1049 = vmatmul.mubr.f32.gmra.mrb[0].mxu0 %v1048
        %v1050 = vpop.f32.mrb[0].mxu0
        %v1051 = vadd.f32 %v886, %v1050
        %v1052 = vpop.f32.mrb[0].mxu0
        %1053 = vmatprep.mubr.f32.mxu0 0.0
        %v1054 = vand.u32 %v232, 4294901760
        %1055 = vmatmul.mubr.f32.gmra.mrb[0].mxu0 %v1054
        %v1056 = vpop.f32.mrb[0].mxu0
        %v1057 = vadd.f32 %v894, %v1056
        %v1058 = vpop.f32.mrb[0].mxu0
        %1059 = vmatprep.mubr.f32.mxu0 0.0
        %v1060 = vand.u32 %v233, 4294901760
        %1061 = vmatmul.mubr.f32.gmra.mrb[0].mxu0 %v1060
        %v1062 = vpop.f32.mrb[0].mxu0
        %v1063 = vadd.f32 %v902, %v1062
        %v1064 = vpop.f32.mrb[0].mxu0
        %1065 = vdwg.mxu0
        %1066 = vmatprep.subr.mxu0 0.0
        %v1067 = vand.u32 %v234, 4294901760
        %1068 = vmatpush1.msra.mxu0 %v1067
        %1069 = vmatprep.subr.mxu0 0.0
        %v1070 = vand.u32 %v235, 4294901760
        %1071 = vmatpush1.msra.mxu0 %v1070
        %1072 = vmatprep.subr.mxu0 0.0
        %v1073 = vand.u32 %v236, 4294901760
        %1074 = vmatpush1.msra.mxu0 %v1073
        %1075 = vmatprep.subr.mxu0 0.0
        %v1076 = vand.u32 %v237, 4294901760
        %1077 = vmatpush1.msra.mxu0 %v1076
        %1078 = vmatprep.subr.mxu0 0.0
        %v1079 = vand.u32 %v238, 4294901760
        %1080 = vmatpush1.msra.mxu0 %v1079
        %1081 = vmatprep.subr.mxu0 0.0
        %v1082 = vand.u32 %v239, 4294901760
        %1083 = vmatpush1.msra.mxu0 %v1082
        %1084 = vmatprep.subr.mxu0 0.0
        %v1085 = vand.u32 %v240, 4294901760
        %1086 = vmatpush1.msra.mxu0 %v1085
        %1087 = vmatprep.subr.mxu0 0.0
        %v1088 = vand.u32 %v241, 4294901760
        %1089 = vmatpush1.msra.mxu0 %v1088
        %1090 = vmatprep.subr.mxu0 0.0
        %v1091 = vand.u32 %v242, 4294901760
        %1092 = vmatpush1.msra.mxu0 %v1091
        %1093 = vmatprep.subr.mxu0 0.0
        %v1094 = vand.u32 %v243, 4294901760
        %1095 = vmatpush1.msra.mxu0 %v1094
        %1096 = vmatprep.subr.mxu0 0.0
        %v1097 = vand.u32 %v244, 4294901760
        %1098 = vmatpush1.msra.mxu0 %v1097
        %1099 = vmatprep.subr.mxu0 0.0
        %v1100 = vand.u32 %v245, 4294901760
        %1101 = vmatpush1.msra.mxu0 %v1100
        %1102 = vmatprep.subr.mxu0 0.0
        %v1103 = vand.u32 %v246, 4294901760
        %1104 = vmatpush1.msra.mxu0 %v1103
        %1105 = vmatprep.subr.mxu0 0.0
        %v1106 = vand.u32 %v247, 4294901760
        %1107 = vmatpush1.msra.mxu0 %v1106
        %1108 = vmatprep.subr.mxu0 0.0
        %v1109 = vand.u32 %v248, 4294901760
        %1110 = vmatpush1.msra.mxu0 %v1109
        %1111 = vmatprep.subr.mxu0 0.0
        %v1112 = vand.u32 %v249, 4294901760
        %1113 = vmatpush1.msra.mxu0 %v1112
        %1114 = vmatprep.subr.mxu0 0.0
        %1115 = vmatpush1.msra.mxu0 0.0
        %1116 = vmatprep.subr.mxu0 0.0
        %1117 = vmatpush1.msra.mxu0 0.0
        %1118 = vmatprep.subr.mxu0 0.0
        %1119 = vmatpush1.msra.mxu0 0.0
        %1120 = vmatprep.subr.mxu0 0.0
        %1121 = vmatpush1.msra.mxu0 0.0
        %1122 = vmatprep.subr.mxu0 0.0
        %1123 = vmatpush1.msra.mxu0 0.0
        %1124 = vmatprep.subr.mxu0 0.0
        %1125 = vmatpush1.msra.mxu0 0.0
        %1126 = vmatprep.subr.mxu0 0.0
        %1127 = vmatpush1.msra.mxu0 0.0
        %1128 = vmatprep.subr.mxu0 0.0
        %1129 = vmatpush1.msra.mxu0 0.0
        %1130 = vmatprep.subr.mxu0 0.0
        %1131 = vmatpush1.msra.mxu0 0.0
        %1132 = vmatprep.subr.mxu0 0.0
        %1133 = vmatpush1.msra.mxu0 0.0
        %1134 = vmatprep.subr.mxu0 0.0
        %1135 = vmatpush1.msra.mxu0 0.0
        %1136 = vmatprep.subr.mxu0 0.0
        %1137 = vmatpush1.msra.mxu0 0.0
        %1138 = vmatprep.subr.mxu0 0.0
        %1139 = vmatpush1.msra.mxu0 0.0
        %1140 = vmatprep.subr.mxu0 0.0
        %1141 = vmatpush1.msra.mxu0 0.0
        %1142 = vmatprep.subr.mxu0 0.0
        %1143 = vmatpush1.msra.mxu0 0.0
        %1144 = vmatprep.subr.mxu0 0.0
        %1145 = vmatpush1.msra.mxu0 0.0
        %1146 = vmatprep.mubr.f32.mxu0 0.0
        %v1147 = vand.u32 %v226, 4294901760
        %1148 = vmatmul.mubr.f32.gmra.mrb[0].mxu0 %v1147
        %v1149 = vpop.f32.mrb[0].mxu0
        %v1150 = vadd.f32 %v1021, %v1149
        %v1151 = vpop.f32.mrb[0].mxu0
        %1152 = vmatprep.mubr.f32.mxu0 0.0
        %v1153 = vand.u32 %v227, 4294901760
        %1154 = vmatmul.mubr.f32.gmra.mrb[0].mxu0 %v1153
        %v1155 = vpop.f32.mrb[0].mxu0
        %v1156 = vadd.f32 %v1027, %v1155
        %v1157 = vpop.f32.mrb[0].mxu0
        %1158 = vmatprep.mubr.f32.mxu0 0.0
        %v1159 = vand.u32 %v228, 4294901760
        %1160 = vmatmul.mubr.f32.gmra.mrb[0].mxu0 %v1159
        %v1161 = vpop.f32.mrb[0].mxu0
        %v1162 = vadd.f32 %v1033, %v1161
        %v1163 = vpop.f32.mrb[0].mxu0
        %1164 = vmatprep.mubr.f32.mxu0 0.0
        %v1165 = vand.u32 %v229, 4294901760
        %1166 = vmatmul.mubr.f32.gmra.mrb[0].mxu0 %v1165
        %v1167 = vpop.f32.mrb[0].mxu0
        %v1168 = vadd.f32 %v1039, %v1167
        %v1169 = vpop.f32.mrb[0].mxu0
        %1170 = vmatprep.mubr.f32.mxu0 0.0
        %v1171 = vand.u32 %v230, 4294901760
        %1172 = vmatmul.mubr.f32.gmra.mrb[0].mxu0 %v1171
        %v1173 = vpop.f32.mrb[0].mxu0
        %v1174 = vadd.f32 %v1045, %v1173
        %v1175 = vpop.f32.mrb[0].mxu0
        %1176 = vmatprep.mubr.f32.mxu0 0.0
        %v1177 = vand.u32 %v231, 4294901760
        %1178 = vmatmul.mubr.f32.gmra.mrb[0].mxu0 %v1177
        %v1179 = vpop.f32.mrb[0].mxu0
        %v1180 = vadd.f32 %v1051, %v1179
        %v1181 = vpop.f32.mrb[0].mxu0
        %1182 = vmatprep.mubr.f32.mxu0 0.0
        %v1183 = vand.u32 %v232, 4294901760
        %1184 = vmatmul.mubr.f32.gmra.mrb[0].mxu0 %v1183
        %v1185 = vpop.f32.mrb[0].mxu0
        %v1186 = vadd.f32 %v1057, %v1185
        %v1187 = vpop.f32.mrb[0].mxu0
        %1188 = vmatprep.mubr.f32.mxu0 0.0
        %v1189 = vand.u32 %v233, 4294901760
        %1190 = vmatmul.mubr.f32.gmra.mrb[0].mxu0 %v1189
        %v1191 = vpop.f32.mrb[0].mxu0
        %v1192 = vadd.f32 %v1063, %v1191
        %v1193 = vpop.f32.mrb[0].mxu0
        %1194 = vdwg.mxu0
        %v1195 = vmul.f32 %v1150, 0.03125
        %v1196 = vmul.f32 %v1156, 0.03125
        %v1197 = vmul.f32 %v1162, 0.03125
        %v1198 = vmul.f32 %v1168, 0.03125
        %v1199 = vmul.f32 %v1174, 0.03125
        %v1200 = vmul.f32 %v1180, 0.03125
        %v1201 = vmul.f32 %v1186, 0.03125
        %v1202 = vmul.f32 %v1192, 0.03125
        %vm1203 = vcmask 64512
        %v1205 = vsel %vm1203, %v1195, 0
        %v1208 = vsel %vm1203, %v1196, 0
        %v1211 = vsel %vm1203, %v1197, 0
        %v1214 = vsel %vm1203, %v1198, 0
        %v1217 = vsel %vm1203, %v1199, 0
        %v1220 = vsel %vm1203, %v1200, 0
        %v1223 = vsel %vm1203, %v1201, 0
        %v1226 = vsel %vm1203, %v1202, 0
        %1228 = vmatprep.subr.mxu0 0.0
        %v1229 = vand.u32 %v250, 4294901760
        %1230 = vmatpush1.msra.mxu0 %v1229
        %1231 = vmatprep.subr.mxu0 0.0
        %1232 = vmatpush1.msra.mxu0 0.0
        %1233 = vmatprep.subr.mxu0 0.0
        %1234 = vmatpush1.msra.mxu0 0.0
        %1235 = vmatprep.subr.mxu0 0.0
        %1236 = vmatpush1.msra.mxu0 0.0
        %1237 = vmatprep.subr.mxu0 0.0
        %1238 = vmatpush1.msra.mxu0 0.0
        %1239 = vmatprep.subr.mxu0 0.0
        %1240 = vmatpush1.msra.mxu0 0.0
        %1241 = vmatprep.subr.mxu0 0.0
        %1242 = vmatpush1.msra.mxu0 0.0
        %1243 = vmatprep.subr.mxu0 0.0
        %1244 = vmatpush1.msra.mxu0 0.0
        %1245 = vmatprep.subr.mxu0 0.0
        %1246 = vmatpush1.msra.mxu0 0.0
        %1247 = vmatprep.subr.mxu0 0.0
        %1248 = vmatpush1.msra.mxu0 0.0
        %1249 = vmatprep.subr.mxu0 0.0
        %1250 = vmatpush1.msra.mxu0 0.0
        %1251 = vmatprep.subr.mxu0 0.0
        %1252 = vmatpush1.msra.mxu0 0.0
        %1253 = vmatprep.subr.mxu0 0.0
        %1254 = vmatpush1.msra.mxu0 0.0
        %1255 = vmatprep.subr.mxu0 0.0
        %1256 = vmatpush1.msra.mxu0 0.0
        %1257 = vmatprep.subr.mxu0 0.0
        %1258 = vmatpush1.msra.mxu0 0.0
        %1259 = vmatprep.subr.mxu0 0.0
        %1260 = vmatpush1.msra.mxu0 0.0
        %1261 = vmatprep.subr.mxu0 0.0
        %1262 = vmatpush1.msra.mxu0 0.0
        %1263 = vmatprep.subr.mxu0 0.0
        %1264 = vmatpush1.msra.mxu0 0.0
        %1265 = vmatprep.subr.mxu0 0.0
        %1266 = vmatpush1.msra.mxu0 0.0
        %1267 = vmatprep.subr.mxu0 0.0
        %1268 = vmatpush1.msra.mxu0 0.0
        %1269 = vmatprep.subr.mxu0 0.0
        %1270 = vmatpush1.msra.mxu0 0.0
        %1271 = vmatprep.subr.mxu0 0.0
        %1272 = vmatpush1.msra.mxu0 0.0
        %1273 = vmatprep.subr.mxu0 0.0
        %1274 = vmatpush1.msra.mxu0 0.0
        %1275 = vmatprep.subr.mxu0 0.0
        %1276 = vmatpush1.msra.mxu0 0.0
        %1277 = vmatprep.subr.mxu0 0.0
        %1278 = vmatpush1.msra.mxu0 0.0
        %1279 = vmatprep.subr.mxu0 0.0
        %1280 = vmatpush1.msra.mxu0 0.0
        %1281 = vmatprep.subr.mxu0 0.0
        %1282 = vmatpush1.msra.mxu0 0.0
        %1283 = vmatprep.subr.mxu0 0.0
        %1284 = vmatpush1.msra.mxu0 0.0
        %1285 = vmatprep.subr.mxu0 0.0
        %1286 = vmatpush1.msra.mxu0 0.0
        %1287 = vmatprep.subr.mxu0 0.0
        %1288 = vmatpush1.msra.mxu0 0.0
        %1289 = vmatprep.subr.mxu0 0.0
        %1290 = vmatpush1.msra.mxu0 0.0
        %1291 = vmatprep.subr.mxu0 0.0
        %1292 = vmatpush1.msra.mxu0 0.0
        %1293 = vmatprep.mubr.f32.mxu0 0.0
        %v1294 = vand.u32 %v1205, 4294901760
        %v1295 = vsub.f32 %v1205, %v1294
        %v1296 = vand.u32 %v1295, 4294901760
        %v1297 = vsub.f32 %v1295, %v1296
        %v1298 = vand.u32 %v1297, 4294901760
        %1299 = vmatmul.mubr.f32.gmra.mrb[0].mxu0 %v1298
        %v1300 = vpop.f32.mrb[0].mxu0
        %v1301 = vadd.f32 0.0, %v1300
        %v1302 = vpop.f32.mrb[0].mxu0
        %1303 = vmatprep.mubr.f32.mxu0 0.0
        %v1304 = vand.u32 %v1208, 4294901760
        %v1305 = vsub.f32 %v1208, %v1304
        %v1306 = vand.u32 %v1305, 4294901760
        %v1307 = vsub.f32 %v1305, %v1306
        %v1308 = vand.u32 %v1307, 4294901760
        %1309 = vmatmul.mubr.f32.gmra.mrb[0].mxu0 %v1308
        %v1310 = vpop.f32.mrb[0].mxu0
        %v1311 = vadd.f32 0.0, %v1310
        %v1312 = vpop.f32.mrb[0].mxu0
        %1313 = vmatprep.mubr.f32.mxu0 0.0
        %v1314 = vand.u32 %v1211, 4294901760
        %v1315 = vsub.f32 %v1211, %v1314
        %v1316 = vand.u32 %v1315, 4294901760
        %v1317 = vsub.f32 %v1315, %v1316
        %v1318 = vand.u32 %v1317, 4294901760
        %1319 = vmatmul.mubr.f32.gmra.mrb[0].mxu0 %v1318
        %v1320 = vpop.f32.mrb[0].mxu0
        %v1321 = vadd.f32 0.0, %v1320
        %v1322 = vpop.f32.mrb[0].mxu0
        %1323 = vmatprep.mubr.f32.mxu0 0.0
        %v1324 = vand.u32 %v1214, 4294901760
        %v1325 = vsub.f32 %v1214, %v1324
        %v1326 = vand.u32 %v1325, 4294901760
        %v1327 = vsub.f32 %v1325, %v1326
        %v1328 = vand.u32 %v1327, 4294901760
        %1329 = vmatmul.mubr.f32.gmra.mrb[0].mxu0 %v1328
        %v1330 = vpop.f32.mrb[0].mxu0
        %v1331 = vadd.f32 0.0, %v1330
        %v1332 = vpop.f32.mrb[0].mxu0
        %1333 = vmatprep.mubr.f32.mxu0 0.0
        %v1334 = vand.u32 %v1217, 4294901760
        %v1335 = vsub.f32 %v1217, %v1334
        %v1336 = vand.u32 %v1335, 4294901760
        %v1337 = vsub.f32 %v1335, %v1336
        %v1338 = vand.u32 %v1337, 4294901760
        %1339 = vmatmul.mubr.f32.gmra.mrb[0].mxu0 %v1338
        %v1340 = vpop.f32.mrb[0].mxu0
        %v1341 = vadd.f32 0.0, %v1340
        %v1342 = vpop.f32.mrb[0].mxu0
        %1343 = vmatprep.mubr.f32.mxu0 0.0
        %v1344 = vand.u32 %v1220, 4294901760
        %v1345 = vsub.f32 %v1220, %v1344
        %v1346 = vand.u32 %v1345, 4294901760
        %v1347 = vsub.f32 %v1345, %v1346
        %v1348 = vand.u32 %v1347, 4294901760
        %1349 = vmatmul.mubr.f32.gmra.mrb[0].mxu0 %v1348
        %v1350 = vpop.f32.mrb[0].mxu0
        %v1351 = vadd.f32 0.0, %v1350
        %v1352 = vpop.f32.mrb[0].mxu0
        %1353 = vmatprep.mubr.f32.mxu0 0.0
        %v1354 = vand.u32 %v1223, 4294901760
        %v1355 = vsub.f32 %v1223, %v1354
        %v1356 = vand.u32 %v1355, 4294901760
        %v1357 = vsub.f32 %v1355, %v1356
        %v1358 = vand.u32 %v1357, 4294901760
        %1359 = vmatmul.mubr.f32.gmra.mrb[0].mxu0 %v1358
        %v1360 = vpop.f32.mrb[0].mxu0
        %v1361 = vadd.f32 0.0, %v1360
        %v1362 = vpop.f32.mrb[0].mxu0
        %1363 = vmatprep.mubr.f32.mxu0 0.0
        %v1364 = vand.u32 %v1226, 4294901760
        %v1365 = vsub.f32 %v1226, %v1364
        %v1366 = vand.u32 %v1365, 4294901760
        %v1367 = vsub.f32 %v1365, %v1366
        %v1368 = vand.u32 %v1367, 4294901760
        %1369 = vmatmul.mubr.f32.gmra.mrb[0].mxu0 %v1368
        %v1370 = vpop.f32.mrb[0].mxu0
        %v1371 = vadd.f32 0.0, %v1370
        %v1372 = vpop.f32.mrb[0].mxu0
        %1373 = vdwg.mxu0
        %1374 = vmatprep.subr.mxu0 0.0
        %v1375 = vand.u32 %v250, 4294901760
        %v1376 = vsub.f32 %v250, %v1375
        %v1377 = vand.u32 %v1376, 4294901760
        %v1378 = vsub.f32 %v1376, %v1377
        %v1379 = vand.u32 %v1378, 4294901760
        %1380 = vmatpush1.msra.mxu0 %v1379
        %1381 = vmatprep.subr.mxu0 0.0
        %1382 = vmatpush1.msra.mxu0 0.0
        %1383 = vmatprep.subr.mxu0 0.0
        %1384 = vmatpush1.msra.mxu0 0.0
        %1385 = vmatprep.subr.mxu0 0.0
        %1386 = vmatpush1.msra.mxu0 0.0
        %1387 = vmatprep.subr.mxu0 0.0
        %1388 = vmatpush1.msra.mxu0 0.0
        %1389 = vmatprep.subr.mxu0 0.0
        %1390 = vmatpush1.msra.mxu0 0.0
        %1391 = vmatprep.subr.mxu0 0.0
        %1392 = vmatpush1.msra.mxu0 0.0
        %1393 = vmatprep.subr.mxu0 0.0
        %1394 = vmatpush1.msra.mxu0 0.0
        %1395 = vmatprep.subr.mxu0 0.0
        %1396 = vmatpush1.msra.mxu0 0.0
        %1397 = vmatprep.subr.mxu0 0.0
        %1398 = vmatpush1.msra.mxu0 0.0
        %1399 = vmatprep.subr.mxu0 0.0
        %1400 = vmatpush1.msra.mxu0 0.0
        %1401 = vmatprep.subr.mxu0 0.0
        %1402 = vmatpush1.msra.mxu0 0.0
        %1403 = vmatprep.subr.mxu0 0.0
        %1404 = vmatpush1.msra.mxu0 0.0
        %1405 = vmatprep.subr.mxu0 0.0
        %1406 = vmatpush1.msra.mxu0 0.0
        %1407 = vmatprep.subr.mxu0 0.0
        %1408 = vmatpush1.msra.mxu0 0.0
        %1409 = vmatprep.subr.mxu0 0.0
        %1410 = vmatpush1.msra.mxu0 0.0
        %1411 = vmatprep.subr.mxu0 0.0
        %1412 = vmatpush1.msra.mxu0 0.0
        %1413 = vmatprep.subr.mxu0 0.0
        %1414 = vmatpush1.msra.mxu0 0.0
        %1415 = vmatprep.subr.mxu0 0.0
        %1416 = vmatpush1.msra.mxu0 0.0
        %1417 = vmatprep.subr.mxu0 0.0
        %1418 = vmatpush1.msra.mxu0 0.0
        %1419 = vmatprep.subr.mxu0 0.0
        %1420 = vmatpush1.msra.mxu0 0.0
        %1421 = vmatprep.subr.mxu0 0.0
        %1422 = vmatpush1.msra.mxu0 0.0
        %1423 = vmatprep.subr.mxu0 0.0
        %1424 = vmatpush1.msra.mxu0 0.0
        %1425 = vmatprep.subr.mxu0 0.0
        %1426 = vmatpush1.msra.mxu0 0.0
        %1427 = vmatprep.subr.mxu0 0.0
        %1428 = vmatpush1.msra.mxu0 0.0
        %1429 = vmatprep.subr.mxu0 0.0
        %1430 = vmatpush1.msra.mxu0 0.0
        %1431 = vmatprep.subr.mxu0 0.0
        %1432 = vmatpush1.msra.mxu0 0.0
        %1433 = vmatprep.subr.mxu0 0.0
        %1434 = vmatpush1.msra.mxu0 0.0
        %1435 = vmatprep.subr.mxu0 0.0
        %1436 = vmatpush1.msra.mxu0 0.0
        %1437 = vmatprep.subr.mxu0 0.0
        %1438 = vmatpush1.msra.mxu0 0.0
        %1439 = vmatprep.subr.mxu0 0.0
        %1440 = vmatpush1.msra.mxu0 0.0
        %1441 = vmatprep.subr.mxu0 0.0
        %1442 = vmatpush1.msra.mxu0 0.0
        %1443 = vmatprep.mubr.f32.mxu0 0.0
        %v1444 = vand.u32 %v1205, 4294901760
        %1445 = vmatmul.mubr.f32.gmra.mrb[0].mxu0 %v1444
        %v1446 = vpop.f32.mrb[0].mxu0
        %v1447 = vadd.f32 %v1301, %v1446
        %v1448 = vpop.f32.mrb[0].mxu0
        %1449 = vmatprep.mubr.f32.mxu0 0.0
        %v1450 = vand.u32 %v1208, 4294901760
        %1451 = vmatmul.mubr.f32.gmra.mrb[0].mxu0 %v1450
        %v1452 = vpop.f32.mrb[0].mxu0
        %v1453 = vadd.f32 %v1311, %v1452
        %v1454 = vpop.f32.mrb[0].mxu0
        %1455 = vmatprep.mubr.f32.mxu0 0.0
        %v1456 = vand.u32 %v1211, 4294901760
        %1457 = vmatmul.mubr.f32.gmra.mrb[0].mxu0 %v1456
        %v1458 = vpop.f32.mrb[0].mxu0
        %v1459 = vadd.f32 %v1321, %v1458
        %v1460 = vpop.f32.mrb[0].mxu0
        %1461 = vmatprep.mubr.f32.mxu0 0.0
        %v1462 = vand.u32 %v1214, 4294901760
        %1463 = vmatmul.mubr.f32.gmra.mrb[0].mxu0 %v1462
        %v1464 = vpop.f32.mrb[0].mxu0
        %v1465 = vadd.f32 %v1331, %v1464
        %v1466 = vpop.f32.mrb[0].mxu0
        %1467 = vmatprep.mubr.f32.mxu0 0.0
        %v1468 = vand.u32 %v1217, 4294901760
        %1469 = vmatmul.mubr.f32.gmra.mrb[0].mxu0 %v1468
        %v1470 = vpop.f32.mrb[0].mxu0
        %v1471 = vadd.f32 %v1341, %v1470
        %v1472 = vpop.f32.mrb[0].mxu0
        %1473 = vmatprep.mubr.f32.mxu0 0.0
        %v1474 = vand.u32 %v1220, 4294901760
        %1475 = vmatmul.mubr.f32.gmra.mrb[0].mxu0 %v1474
        %v1476 = vpop.f32.mrb[0].mxu0
        %v1477 = vadd.f32 %v1351, %v1476
        %v1478 = vpop.f32.mrb[0].mxu0
        %1479 = vmatprep.mubr.f32.mxu0 0.0
        %v1480 = vand.u32 %v1223, 4294901760
        %1481 = vmatmul.mubr.f32.gmra.mrb[0].mxu0 %v1480
        %v1482 = vpop.f32.mrb[0].mxu0
        %v1483 = vadd.f32 %v1361, %v1482
        %v1484 = vpop.f32.mrb[0].mxu0
        %1485 = vmatprep.mubr.f32.mxu0 0.0
        %v1486 = vand.u32 %v1226, 4294901760
        %1487 = vmatmul.mubr.f32.gmra.mrb[0].mxu0 %v1486
        %v1488 = vpop.f32.mrb[0].mxu0
        %v1489 = vadd.f32 %v1371, %v1488
        %v1490 = vpop.f32.mrb[0].mxu0
        %1491 = vdwg.mxu0
        %1492 = vmatprep.subr.mxu0 0.0
        %v1493 = vand.u32 %v250, 4294901760
        %v1494 = vsub.f32 %v250, %v1493
        %1495 = vmatpush1.msra.mxu0 %v1494
        %1496 = vmatprep.subr.mxu0 0.0
        %1497 = vmatpush1.msra.mxu0 0.0
        %1498 = vmatprep.subr.mxu0 0.0
        %1499 = vmatpush1.msra.mxu0 0.0
        %1500 = vmatprep.subr.mxu0 0.0
        %1501 = vmatpush1.msra.mxu0 0.0
        %1502 = vmatprep.subr.mxu0 0.0
        %1503 = vmatpush1.msra.mxu0 0.0
        %1504 = vmatprep.subr.mxu0 0.0
        %1505 = vmatpush1.msra.mxu0 0.0
        %1506 = vmatprep.subr.mxu0 0.0
        %1507 = vmatpush1.msra.mxu0 0.0
        %1508 = vmatprep.subr.mxu0 0.0
        %1509 = vmatpush1.msra.mxu0 0.0
        %1510 = vmatprep.subr.mxu0 0.0
        %1511 = vmatpush1.msra.mxu0 0.0
        %1512 = vmatprep.subr.mxu0 0.0
        %1513 = vmatpush1.msra.mxu0 0.0
        %1514 = vmatprep.subr.mxu0 0.0
        %1515 = vmatpush1.msra.mxu0 0.0
        %1516 = vmatprep.subr.mxu0 0.0
        %1517 = vmatpush1.msra.mxu0 0.0
        %1518 = vmatprep.subr.mxu0 0.0
        %1519 = vmatpush1.msra.mxu0 0.0
        %1520 = vmatprep.subr.mxu0 0.0
        %1521 = vmatpush1.msra.mxu0 0.0
        %1522 = vmatprep.subr.mxu0 0.0
        %1523 = vmatpush1.msra.mxu0 0.0
        %1524 = vmatprep.subr.mxu0 0.0
        %1525 = vmatpush1.msra.mxu0 0.0
        %1526 = vmatprep.subr.mxu0 0.0
        %1527 = vmatpush1.msra.mxu0 0.0
        %1528 = vmatprep.subr.mxu0 0.0
        %1529 = vmatpush1.msra.mxu0 0.0
        %1530 = vmatprep.subr.mxu0 0.0
        %1531 = vmatpush1.msra.mxu0 0.0
        %1532 = vmatprep.subr.mxu0 0.0
        %1533 = vmatpush1.msra.mxu0 0.0
        %1534 = vmatprep.subr.mxu0 0.0
        %1535 = vmatpush1.msra.mxu0 0.0
        %1536 = vmatprep.subr.mxu0 0.0
        %1537 = vmatpush1.msra.mxu0 0.0
        %1538 = vmatprep.subr.mxu0 0.0
        %1539 = vmatpush1.msra.mxu0 0.0
        %1540 = vmatprep.subr.mxu0 0.0
        %1541 = vmatpush1.msra.mxu0 0.0
        %1542 = vmatprep.subr.mxu0 0.0
        %1543 = vmatpush1.msra.mxu0 0.0
        %1544 = vmatprep.subr.mxu0 0.0
        %1545 = vmatpush1.msra.mxu0 0.0
        %1546 = vmatprep.subr.mxu0 0.0
        %1547 = vmatpush1.msra.mxu0 0.0
        %1548 = vmatprep.subr.mxu0 0.0
        %1549 = vmatpush1.msra.mxu0 0.0
        %1550 = vmatprep.subr.mxu0 0.0
        %1551 = vmatpush1.msra.mxu0 0.0
        %1552 = vmatprep.subr.mxu0 0.0
        %1553 = vmatpush1.msra.mxu0 0.0
        %1554 = vmatprep.subr.mxu0 0.0
        %1555 = vmatpush1.msra.mxu0 0.0
        %1556 = vmatprep.subr.mxu0 0.0
        %1557 = vmatpush1.msra.mxu0 0.0
        %1558 = vmatprep.mubr.f32.mxu0 0.0
        %v1559 = vand.u32 %v1205, 4294901760
        %v1560 = vsub.f32 %v1205, %v1559
        %1561 = vmatmul.mubr.f32.gmra.mrb[0].mxu0 %v1560
        %v1562 = vpop.f32.mrb[0].mxu0
        %v1563 = vadd.f32 %v1447, %v1562
        %v1564 = vpop.f32.mrb[0].mxu0
        %1565 = vmatprep.mubr.f32.mxu0 0.0
        %v1566 = vand.u32 %v1208, 4294901760
        %v1567 = vsub.f32 %v1208, %v1566
        %1568 = vmatmul.mubr.f32.gmra.mrb[0].mxu0 %v1567
        %v1569 = vpop.f32.mrb[0].mxu0
        %v1570 = vadd.f32 %v1453, %v1569
        %v1571 = vpop.f32.mrb[0].mxu0
        %1572 = vmatprep.mubr.f32.mxu0 0.0
        %v1573 = vand.u32 %v1211, 4294901760
        %v1574 = vsub.f32 %v1211, %v1573
        %1575 = vmatmul.mubr.f32.gmra.mrb[0].mxu0 %v1574
        %v1576 = vpop.f32.mrb[0].mxu0
        %v1577 = vadd.f32 %v1459, %v1576
        %v1578 = vpop.f32.mrb[0].mxu0
        %1579 = vmatprep.mubr.f32.mxu0 0.0
        %v1580 = vand.u32 %v1214, 4294901760
        %v1581 = vsub.f32 %v1214, %v1580
        %1582 = vmatmul.mubr.f32.gmra.mrb[0].mxu0 %v1581
        %v1583 = vpop.f32.mrb[0].mxu0
        %v1584 = vadd.f32 %v1465, %v1583
        %v1585 = vpop.f32.mrb[0].mxu0
        %1586 = vmatprep.mubr.f32.mxu0 0.0
        %v1587 = vand.u32 %v1217, 4294901760
        %v1588 = vsub.f32 %v1217, %v1587
        %1589 = vmatmul.mubr.f32.gmra.mrb[0].mxu0 %v1588
        %v1590 = vpop.f32.mrb[0].mxu0
        %v1591 = vadd.f32 %v1471, %v1590
        %v1592 = vpop.f32.mrb[0].mxu0
        %1593 = vmatprep.mubr.f32.mxu0 0.0
        %v1594 = vand.u32 %v1220, 4294901760
        %v1595 = vsub.f32 %v1220, %v1594
        %1596 = vmatmul.mubr.f32.gmra.mrb[0].mxu0 %v1595
        %v1597 = vpop.f32.mrb[0].mxu0
        %v1598 = vadd.f32 %v1477, %v1597
        %v1599 = vpop.f32.mrb[0].mxu0
        %1600 = vmatprep.mubr.f32.mxu0 0.0
        %v1601 = vand.u32 %v1223, 4294901760
        %v1602 = vsub.f32 %v1223, %v1601
        %1603 = vmatmul.mubr.f32.gmra.mrb[0].mxu0 %v1602
        %v1604 = vpop.f32.mrb[0].mxu0
        %v1605 = vadd.f32 %v1483, %v1604
        %v1606 = vpop.f32.mrb[0].mxu0
        %1607 = vmatprep.mubr.f32.mxu0 0.0
        %v1608 = vand.u32 %v1226, 4294901760
        %v1609 = vsub.f32 %v1226, %v1608
        %1610 = vmatmul.mubr.f32.gmra.mrb[0].mxu0 %v1609
        %v1611 = vpop.f32.mrb[0].mxu0
        %v1612 = vadd.f32 %v1489, %v1611
        %v1613 = vpop.f32.mrb[0].mxu0
        %1614 = vdwg.mxu0
        %1615 = vmatprep.subr.mxu0 0.0
        %v1616 = vand.u32 %v250, 4294901760
        %1617 = vmatpush1.msra.mxu0 %v1616
        %1618 = vmatprep.subr.mxu0 0.0
        %1619 = vmatpush1.msra.mxu0 0.0
        %1620 = vmatprep.subr.mxu0 0.0
        %1621 = vmatpush1.msra.mxu0 0.0
        %1622 = vmatprep.subr.mxu0 0.0
        %1623 = vmatpush1.msra.mxu0 0.0
        %1624 = vmatprep.subr.mxu0 0.0
        %1625 = vmatpush1.msra.mxu0 0.0
        %1626 = vmatprep.subr.mxu0 0.0
        %1627 = vmatpush1.msra.mxu0 0.0
        %1628 = vmatprep.subr.mxu0 0.0
        %1629 = vmatpush1.msra.mxu0 0.0
        %1630 = vmatprep.subr.mxu0 0.0
        %1631 = vmatpush1.msra.mxu0 0.0
        %1632 = vmatprep.subr.mxu0 0.0
        %1633 = vmatpush1.msra.mxu0 0.0
        %1634 = vmatprep.subr.mxu0 0.0
        %1635 = vmatpush1.msra.mxu0 0.0
        %1636 = vmatprep.subr.mxu0 0.0
        %1637 = vmatpush1.msra.mxu0 0.0
        %1638 = vmatprep.subr.mxu0 0.0
        %1639 = vmatpush1.msra.mxu0 0.0
        %1640 = vmatprep.subr.mxu0 0.0
        %1641 = vmatpush1.msra.mxu0 0.0
        %1642 = vmatprep.subr.mxu0 0.0
        %1643 = vmatpush1.msra.mxu0 0.0
        %1644 = vmatprep.subr.mxu0 0.0
        %1645 = vmatpush1.msra.mxu0 0.0
        %1646 = vmatprep.subr.mxu0 0.0
        %1647 = vmatpush1.msra.mxu0 0.0
        %1648 = vmatprep.subr.mxu0 0.0
        %1649 = vmatpush1.msra.mxu0 0.0
        %1650 = vmatprep.subr.mxu0 0.0
        %1651 = vmatpush1.msra.mxu0 0.0
        %1652 = vmatprep.subr.mxu0 0.0
        %1653 = vmatpush1.msra.mxu0 0.0
        %1654 = vmatprep.subr.mxu0 0.0
        %1655 = vmatpush1.msra.mxu0 0.0
        %1656 = vmatprep.subr.mxu0 0.0
        %1657 = vmatpush1.msra.mxu0 0.0
        %1658 = vmatprep.subr.mxu0 0.0
        %1659 = vmatpush1.msra.mxu0 0.0
        %1660 = vmatprep.subr.mxu0 0.0
        %1661 = vmatpush1.msra.mxu0 0.0
        %1662 = vmatprep.subr.mxu0 0.0
        %1663 = vmatpush1.msra.mxu0 0.0
        %1664 = vmatprep.subr.mxu0 0.0
        %1665 = vmatpush1.msra.mxu0 0.0
        %1666 = vmatprep.subr.mxu0 0.0
        %1667 = vmatpush1.msra.mxu0 0.0
        %1668 = vmatprep.subr.mxu0 0.0
        %1669 = vmatpush1.msra.mxu0 0.0
        %1670 = vmatprep.subr.mxu0 0.0
        %1671 = vmatpush1.msra.mxu0 0.0
        %1672 = vmatprep.subr.mxu0 0.0
        %1673 = vmatpush1.msra.mxu0 0.0
        %1674 = vmatprep.subr.mxu0 0.0
        %1675 = vmatpush1.msra.mxu0 0.0
        %1676 = vmatprep.subr.mxu0 0.0
        %1677 = vmatpush1.msra.mxu0 0.0
        %1678 = vmatprep.subr.mxu0 0.0
        %1679 = vmatpush1.msra.mxu0 0.0
        %1680 = vmatprep.mubr.f32.mxu0 0.0
        %v1681 = vand.u32 %v1205, 4294901760
        %v1682 = vsub.f32 %v1205, %v1681
        %v1683 = vand.u32 %v1682, 4294901760
        %1684 = vmatmul.mubr.f32.gmra.mrb[0].mxu0 %v1683
        %v1685 = vpop.f32.mrb[0].mxu0
        %v1686 = vadd.f32 %v1563, %v1685
        %v1687 = vpop.f32.mrb[0].mxu0
        %1688 = vmatprep.mubr.f32.mxu0 0.0
        %v1689 = vand.u32 %v1208, 4294901760
        %v1690 = vsub.f32 %v1208, %v1689
        %v1691 = vand.u32 %v1690, 4294901760
        %1692 = vmatmul.mubr.f32.gmra.mrb[0].mxu0 %v1691
        %v1693 = vpop.f32.mrb[0].mxu0
        %v1694 = vadd.f32 %v1570, %v1693
        %v1695 = vpop.f32.mrb[0].mxu0
        %1696 = vmatprep.mubr.f32.mxu0 0.0
        %v1697 = vand.u32 %v1211, 4294901760
        %v1698 = vsub.f32 %v1211, %v1697
        %v1699 = vand.u32 %v1698, 4294901760
        %1700 = vmatmul.mubr.f32.gmra.mrb[0].mxu0 %v1699
        %v1701 = vpop.f32.mrb[0].mxu0
        %v1702 = vadd.f32 %v1577, %v1701
        %v1703 = vpop.f32.mrb[0].mxu0
        %1704 = vmatprep.mubr.f32.mxu0 0.0
        %v1705 = vand.u32 %v1214, 4294901760
        %v1706 = vsub.f32 %v1214, %v1705
        %v1707 = vand.u32 %v1706, 4294901760
        %1708 = vmatmul.mubr.f32.gmra.mrb[0].mxu0 %v1707
        %v1709 = vpop.f32.mrb[0].mxu0
        %v1710 = vadd.f32 %v1584, %v1709
        %v1711 = vpop.f32.mrb[0].mxu0
        %1712 = vmatprep.mubr.f32.mxu0 0.0
        %v1713 = vand.u32 %v1217, 4294901760
        %v1714 = vsub.f32 %v1217, %v1713
        %v1715 = vand.u32 %v1714, 4294901760
        %1716 = vmatmul.mubr.f32.gmra.mrb[0].mxu0 %v1715
        %v1717 = vpop.f32.mrb[0].mxu0
        %v1718 = vadd.f32 %v1591, %v1717
        %v1719 = vpop.f32.mrb[0].mxu0
        %1720 = vmatprep.mubr.f32.mxu0 0.0
        %v1721 = vand.u32 %v1220, 4294901760
        %v1722 = vsub.f32 %v1220, %v1721
        %v1723 = vand.u32 %v1722, 4294901760
        %1724 = vmatmul.mubr.f32.gmra.mrb[0].mxu0 %v1723
        %v1725 = vpop.f32.mrb[0].mxu0
        %v1726 = vadd.f32 %v1598, %v1725
        %v1727 = vpop.f32.mrb[0].mxu0
        %1728 = vmatprep.mubr.f32.mxu0 0.0
        %v1729 = vand.u32 %v1223, 4294901760
        %v1730 = vsub.f32 %v1223, %v1729
        %v1731 = vand.u32 %v1730, 4294901760
        %1732 = vmatmul.mubr.f32.gmra.mrb[0].mxu0 %v1731
        %v1733 = vpop.f32.mrb[0].mxu0
        %v1734 = vadd.f32 %v1605, %v1733
        %v1735 = vpop.f32.mrb[0].mxu0
        %1736 = vmatprep.mubr.f32.mxu0 0.0
        %v1737 = vand.u32 %v1226, 4294901760
        %v1738 = vsub.f32 %v1226, %v1737
        %v1739 = vand.u32 %v1738, 4294901760
        %1740 = vmatmul.mubr.f32.gmra.mrb[0].mxu0 %v1739
        %v1741 = vpop.f32.mrb[0].mxu0
        %v1742 = vadd.f32 %v1612, %v1741
        %v1743 = vpop.f32.mrb[0].mxu0
        %1744 = vdwg.mxu0
        %1745 = vmatprep.subr.mxu0 0.0
        %v1746 = vand.u32 %v250, 4294901760
        %v1747 = vsub.f32 %v250, %v1746
        %v1748 = vand.u32 %v1747, 4294901760
        %1749 = vmatpush1.msra.mxu0 %v1748
        %1750 = vmatprep.subr.mxu0 0.0
        %1751 = vmatpush1.msra.mxu0 0.0
        %1752 = vmatprep.subr.mxu0 0.0
        %1753 = vmatpush1.msra.mxu0 0.0
        %1754 = vmatprep.subr.mxu0 0.0
        %1755 = vmatpush1.msra.mxu0 0.0
        %1756 = vmatprep.subr.mxu0 0.0
        %1757 = vmatpush1.msra.mxu0 0.0
        %1758 = vmatprep.subr.mxu0 0.0
        %1759 = vmatpush1.msra.mxu0 0.0
        %1760 = vmatprep.subr.mxu0 0.0
        %1761 = vmatpush1.msra.mxu0 0.0
        %1762 = vmatprep.subr.mxu0 0.0
        %1763 = vmatpush1.msra.mxu0 0.0
        %1764 = vmatprep.subr.mxu0 0.0
        %1765 = vmatpush1.msra.mxu0 0.0
        %1766 = vmatprep.subr.mxu0 0.0
        %1767 = vmatpush1.msra.mxu0 0.0
        %1768 = vmatprep.subr.mxu0 0.0
        %1769 = vmatpush1.msra.mxu0 0.0
        %1770 = vmatprep.subr.mxu0 0.0
        %1771 = vmatpush1.msra.mxu0 0.0
        %1772 = vmatprep.subr.mxu0 0.0
        %1773 = vmatpush1.msra.mxu0 0.0
        %1774 = vmatprep.subr.mxu0 0.0
        %1775 = vmatpush1.msra.mxu0 0.0
        %1776 = vmatprep.subr.mxu0 0.0
        %1777 = vmatpush1.msra.mxu0 0.0
        %1778 = vmatprep.subr.mxu0 0.0
        %1779 = vmatpush1.msra.mxu0 0.0
        %1780 = vmatprep.subr.mxu0 0.0
        %1781 = vmatpush1.msra.mxu0 0.0
        %1782 = vmatprep.subr.mxu0 0.0
        %1783 = vmatpush1.msra.mxu0 0.0
        %1784 = vmatprep.subr.mxu0 0.0
        %1785 = vmatpush1.msra.mxu0 0.0
        %1786 = vmatprep.subr.mxu0 0.0
        %1787 = vmatpush1.msra.mxu0 0.0
        %1788 = vmatprep.subr.mxu0 0.0
        %1789 = vmatpush1.msra.mxu0 0.0
        %1790 = vmatprep.subr.mxu0 0.0
        %1791 = vmatpush1.msra.mxu0 0.0
        %1792 = vmatprep.subr.mxu0 0.0
        %1793 = vmatpush1.msra.mxu0 0.0
        %1794 = vmatprep.subr.mxu0 0.0
        %1795 = vmatpush1.msra.mxu0 0.0
        %1796 = vmatprep.subr.mxu0 0.0
        %1797 = vmatpush1.msra.mxu0 0.0
        %1798 = vmatprep.subr.mxu0 0.0
        %1799 = vmatpush1.msra.mxu0 0.0
        %1800 = vmatprep.subr.mxu0 0.0
        %1801 = vmatpush1.msra.mxu0 0.0
        %1802 = vmatprep.subr.mxu0 0.0
        %1803 = vmatpush1.msra.mxu0 0.0
        %1804 = vmatprep.subr.mxu0 0.0
        %1805 = vmatpush1.msra.mxu0 0.0
        %1806 = vmatprep.subr.mxu0 0.0
        %1807 = vmatpush1.msra.mxu0 0.0
        %1808 = vmatprep.subr.mxu0 0.0
        %1809 = vmatpush1.msra.mxu0 0.0
        %1810 = vmatprep.subr.mxu0 0.0
        %1811 = vmatpush1.msra.mxu0 0.0
        %1812 = vmatprep.mubr.f32.mxu0 0.0
        %v1813 = vand.u32 %v1205, 4294901760
        %1814 = vmatmul.mubr.f32.gmra.mrb[0].mxu0 %v1813
        %v1815 = vpop.f32.mrb[0].mxu0
        %v1816 = vadd.f32 %v1686, %v1815
        %v1817 = vpop.f32.mrb[0].mxu0
        %1818 = vmatprep.mubr.f32.mxu0 0.0
        %v1819 = vand.u32 %v1208, 4294901760
        %1820 = vmatmul.mubr.f32.gmra.mrb[0].mxu0 %v1819
        %v1821 = vpop.f32.mrb[0].mxu0
        %v1822 = vadd.f32 %v1694, %v1821
        %v1823 = vpop.f32.mrb[0].mxu0
        %1824 = vmatprep.mubr.f32.mxu0 0.0
        %v1825 = vand.u32 %v1211, 4294901760
        %1826 = vmatmul.mubr.f32.gmra.mrb[0].mxu0 %v1825
        %v1827 = vpop.f32.mrb[0].mxu0
        %v1828 = vadd.f32 %v1702, %v1827
        %v1829 = vpop.f32.mrb[0].mxu0
        %1830 = vmatprep.mubr.f32.mxu0 0.0
        %v1831 = vand.u32 %v1214, 4294901760
        %1832 = vmatmul.mubr.f32.gmra.mrb[0].mxu0 %v1831
        %v1833 = vpop.f32.mrb[0].mxu0
        %v1834 = vadd.f32 %v1710, %v1833
        %v1835 = vpop.f32.mrb[0].mxu0
        %1836 = vmatprep.mubr.f32.mxu0 0.0
        %v1837 = vand.u32 %v1217, 4294901760
        %1838 = vmatmul.mubr.f32.gmra.mrb[0].mxu0 %v1837
        %v1839 = vpop.f32.mrb[0].mxu0
        %v1840 = vadd.f32 %v1718, %v1839
        %v1841 = vpop.f32.mrb[0].mxu0
        %1842 = vmatprep.mubr.f32.mxu0 0.0
        %v1843 = vand.u32 %v1220, 4294901760
        %1844 = vmatmul.mubr.f32.gmra.mrb[0].mxu0 %v1843
        %v1845 = vpop.f32.mrb[0].mxu0
        %v1846 = vadd.f32 %v1726, %v1845
        %v1847 = vpop.f32.mrb[0].mxu0
        %1848 = vmatprep.mubr.f32.mxu0 0.0
        %v1849 = vand.u32 %v1223, 4294901760
        %1850 = vmatmul.mubr.f32.gmra.mrb[0].mxu0 %v1849
        %v1851 = vpop.f32.mrb[0].mxu0
        %v1852 = vadd.f32 %v1734, %v1851
        %v1853 = vpop.f32.mrb[0].mxu0
        %1854 = vmatprep.mubr.f32.mxu0 0.0
        %v1855 = vand.u32 %v1226, 4294901760
        %1856 = vmatmul.mubr.f32.gmra.mrb[0].mxu0 %v1855
        %v1857 = vpop.f32.mrb[0].mxu0
        %v1858 = vadd.f32 %v1742, %v1857
        %v1859 = vpop.f32.mrb[0].mxu0
        %1860 = vdwg.mxu0
        %1861 = vmatprep.subr.mxu0 0.0
        %v1862 = vand.u32 %v250, 4294901760
        %1863 = vmatpush1.msra.mxu0 %v1862
        %1864 = vmatprep.subr.mxu0 0.0
        %1865 = vmatpush1.msra.mxu0 0.0
        %1866 = vmatprep.subr.mxu0 0.0
        %1867 = vmatpush1.msra.mxu0 0.0
        %1868 = vmatprep.subr.mxu0 0.0
        %1869 = vmatpush1.msra.mxu0 0.0
        %1870 = vmatprep.subr.mxu0 0.0
        %1871 = vmatpush1.msra.mxu0 0.0
        %1872 = vmatprep.subr.mxu0 0.0
        %1873 = vmatpush1.msra.mxu0 0.0
        %1874 = vmatprep.subr.mxu0 0.0
        %1875 = vmatpush1.msra.mxu0 0.0
        %1876 = vmatprep.subr.mxu0 0.0
        %1877 = vmatpush1.msra.mxu0 0.0
        %1878 = vmatprep.subr.mxu0 0.0
        %1879 = vmatpush1.msra.mxu0 0.0
        %1880 = vmatprep.subr.mxu0 0.0
        %1881 = vmatpush1.msra.mxu0 0.0
        %1882 = vmatprep.subr.mxu0 0.0
        %1883 = vmatpush1.msra.mxu0 0.0
        %1884 = vmatprep.subr.mxu0 0.0
        %1885 = vmatpush1.msra.mxu0 0.0
        %1886 = vmatprep.subr.mxu0 0.0
        %1887 = vmatpush1.msra.mxu0 0.0
        %1888 = vmatprep.subr.mxu0 0.0
        %1889 = vmatpush1.msra.mxu0 0.0
        %1890 = vmatprep.subr.mxu0 0.0
        %1891 = vmatpush1.msra.mxu0 0.0
        %1892 = vmatprep.subr.mxu0 0.0
        %1893 = vmatpush1.msra.mxu0 0.0
        %1894 = vmatprep.subr.mxu0 0.0
        %1895 = vmatpush1.msra.mxu0 0.0
        %1896 = vmatprep.subr.mxu0 0.0
        %1897 = vmatpush1.msra.mxu0 0.0
        %1898 = vmatprep.subr.mxu0 0.0
        %1899 = vmatpush1.msra.mxu0 0.0
        %1900 = vmatprep.subr.mxu0 0.0
        %1901 = vmatpush1.msra.mxu0 0.0
        %1902 = vmatprep.subr.mxu0 0.0
        %1903 = vmatpush1.msra.mxu0 0.0
        %1904 = vmatprep.subr.mxu0 0.0
        %1905 = vmatpush1.msra.mxu0 0.0
        %1906 = vmatprep.subr.mxu0 0.0
        %1907 = vmatpush1.msra.mxu0 0.0
        %1908 = vmatprep.subr.mxu0 0.0
        %1909 = vmatpush1.msra.mxu0 0.0
        %1910 = vmatprep.subr.mxu0 0.0
        %1911 = vmatpush1.msra.mxu0 0.0
        %1912 = vmatprep.subr.mxu0 0.0
        %1913 = vmatpush1.msra.mxu0 0.0
        %1914 = vmatprep.subr.mxu0 0.0
        %1915 = vmatpush1.msra.mxu0 0.0
        %1916 = vmatprep.subr.mxu0 0.0
        %1917 = vmatpush1.msra.mxu0 0.0
        %1918 = vmatprep.subr.mxu0 0.0
        %1919 = vmatpush1.msra.mxu0 0.0
        %1920 = vmatprep.subr.mxu0 0.0
        %1921 = vmatpush1.msra.mxu0 0.0
        %1922 = vmatprep.subr.mxu0 0.0
        %1923 = vmatpush1.msra.mxu0 0.0
        %1924 = vmatprep.subr.mxu0 0.0
        %1925 = vmatpush1.msra.mxu0 0.0
        %1926 = vmatprep.mubr.f32.mxu0 0.0
        %v1927 = vand.u32 %v1205, 4294901760
        %1928 = vmatmul.mubr.f32.gmra.mrb[0].mxu0 %v1927
        %v1929 = vpop.f32.mrb[0].mxu0
        %v1930 = vadd.f32 %v1816, %v1929
        %v1931 = vpop.f32.mrb[0].mxu0
        %1932 = vmatprep.mubr.f32.mxu0 0.0
        %v1933 = vand.u32 %v1208, 4294901760
        %1934 = vmatmul.mubr.f32.gmra.mrb[0].mxu0 %v1933
        %v1935 = vpop.f32.mrb[0].mxu0
        %v1936 = vadd.f32 %v1822, %v1935
        %v1937 = vpop.f32.mrb[0].mxu0
        %1938 = vmatprep.mubr.f32.mxu0 0.0
        %v1939 = vand.u32 %v1211, 4294901760
        %1940 = vmatmul.mubr.f32.gmra.mrb[0].mxu0 %v1939
        %v1941 = vpop.f32.mrb[0].mxu0
        %v1942 = vadd.f32 %v1828, %v1941
        %v1943 = vpop.f32.mrb[0].mxu0
        %1944 = vmatprep.mubr.f32.mxu0 0.0
        %v1945 = vand.u32 %v1214, 4294901760
        %1946 = vmatmul.mubr.f32.gmra.mrb[0].mxu0 %v1945
        %v1947 = vpop.f32.mrb[0].mxu0
        %v1948 = vadd.f32 %v1834, %v1947
        %v1949 = vpop.f32.mrb[0].mxu0
        %1950 = vmatprep.mubr.f32.mxu0 0.0
        %v1951 = vand.u32 %v1217, 4294901760
        %1952 = vmatmul.mubr.f32.gmra.mrb[0].mxu0 %v1951
        %v1953 = vpop.f32.mrb[0].mxu0
        %v1954 = vadd.f32 %v1840, %v1953
        %v1955 = vpop.f32.mrb[0].mxu0
        %1956 = vmatprep.mubr.f32.mxu0 0.0
        %v1957 = vand.u32 %v1220, 4294901760
        %1958 = vmatmul.mubr.f32.gmra.mrb[0].mxu0 %v1957
        %v1959 = vpop.f32.mrb[0].mxu0
        %v1960 = vadd.f32 %v1846, %v1959
        %v1961 = vpop.f32.mrb[0].mxu0
        %1962 = vmatprep.mubr.f32.mxu0 0.0
        %v1963 = vand.u32 %v1223, 4294901760
        %1964 = vmatmul.mubr.f32.gmra.mrb[0].mxu0 %v1963
        %v1965 = vpop.f32.mrb[0].mxu0
        %v1966 = vadd.f32 %v1852, %v1965
        %v1967 = vpop.f32.mrb[0].mxu0
        %1968 = vmatprep.mubr.f32.mxu0 0.0
        %v1969 = vand.u32 %v1226, 4294901760
        %1970 = vmatmul.mubr.f32.gmra.mrb[0].mxu0 %v1969
        %v1971 = vpop.f32.mrb[0].mxu0
        %v1972 = vadd.f32 %v1858, %v1971
        %v1973 = vpop.f32.mrb[0].mxu0
        %1974 = vdwg.mxu0
        %v1975 = vsub.f32 %v226, %v1930
        %v1976 = vsub.f32 %v227, %v1936
        %v1977 = vsub.f32 %v228, %v1942
        %v1978 = vsub.f32 %v229, %v1948
        %v1979 = vsub.f32 %v230, %v1954
        %v1980 = vsub.f32 %v231, %v1960
        %v1981 = vsub.f32 %v232, %v1966
        %v1982 = vsub.f32 %v233, %v1972
        %v1983 = vmul.f32 %v1975, %v1975
        %v1984 = vmul.f32 %v1976, %v1976
        %v1985 = vmul.f32 %v1977, %v1977
        %v1986 = vmul.f32 %v1978, %v1978
        %v1987 = vmul.f32 %v1979, %v1979
        %v1988 = vmul.f32 %v1980, %v1980
        %v1989 = vmul.f32 %v1981, %v1981
        %v1990 = vmul.f32 %v1982, %v1982
        %1991 = vmatprep.subr.mxu0 0.0
        %v1992 = vand.u32 %v234, 4294901760
        %1993 = vmatpush1.msra.mxu0 %v1992
        %1994 = vmatprep.subr.mxu0 0.0
        %v1995 = vand.u32 %v235, 4294901760
        %1996 = vmatpush1.msra.mxu0 %v1995
        %1997 = vmatprep.subr.mxu0 0.0
        %v1998 = vand.u32 %v236, 4294901760
        %1999 = vmatpush1.msra.mxu0 %v1998
        %2000 = vmatprep.subr.mxu0 0.0
        %v2001 = vand.u32 %v237, 4294901760
        %2002 = vmatpush1.msra.mxu0 %v2001
        %2003 = vmatprep.subr.mxu0 0.0
        %v2004 = vand.u32 %v238, 4294901760
        %2005 = vmatpush1.msra.mxu0 %v2004
        %2006 = vmatprep.subr.mxu0 0.0
        %v2007 = vand.u32 %v239, 4294901760
        %2008 = vmatpush1.msra.mxu0 %v2007
        %2009 = vmatprep.subr.mxu0 0.0
        %v2010 = vand.u32 %v240, 4294901760
        %2011 = vmatpush1.msra.mxu0 %v2010
        %2012 = vmatprep.subr.mxu0 0.0
        %v2013 = vand.u32 %v241, 4294901760
        %2014 = vmatpush1.msra.mxu0 %v2013
        %2015 = vmatprep.subr.mxu0 0.0
        %v2016 = vand.u32 %v242, 4294901760
        %2017 = vmatpush1.msra.mxu0 %v2016
        %2018 = vmatprep.subr.mxu0 0.0
        %v2019 = vand.u32 %v243, 4294901760
        %2020 = vmatpush1.msra.mxu0 %v2019
        %2021 = vmatprep.subr.mxu0 0.0
        %v2022 = vand.u32 %v244, 4294901760
        %2023 = vmatpush1.msra.mxu0 %v2022
        %2024 = vmatprep.subr.mxu0 0.0
        %v2025 = vand.u32 %v245, 4294901760
        %2026 = vmatpush1.msra.mxu0 %v2025
        %2027 = vmatprep.subr.mxu0 0.0
        %v2028 = vand.u32 %v246, 4294901760
        %2029 = vmatpush1.msra.mxu0 %v2028
        %2030 = vmatprep.subr.mxu0 0.0
        %v2031 = vand.u32 %v247, 4294901760
        %2032 = vmatpush1.msra.mxu0 %v2031
        %2033 = vmatprep.subr.mxu0 0.0
        %v2034 = vand.u32 %v248, 4294901760
        %2035 = vmatpush1.msra.mxu0 %v2034
        %2036 = vmatprep.subr.mxu0 0.0
        %v2037 = vand.u32 %v249, 4294901760
        %2038 = vmatpush1.msra.mxu0 %v2037
        %2039 = vmatprep.subr.mxu0 0.0
        %2040 = vmatpush1.msra.mxu0 0.0
        %2041 = vmatprep.subr.mxu0 0.0
        %2042 = vmatpush1.msra.mxu0 0.0
        %2043 = vmatprep.subr.mxu0 0.0
        %2044 = vmatpush1.msra.mxu0 0.0
        %2045 = vmatprep.subr.mxu0 0.0
        %2046 = vmatpush1.msra.mxu0 0.0
        %2047 = vmatprep.subr.mxu0 0.0
        %2048 = vmatpush1.msra.mxu0 0.0
        %2049 = vmatprep.subr.mxu0 0.0
        %2050 = vmatpush1.msra.mxu0 0.0
        %2051 = vmatprep.subr.mxu0 0.0
        %2052 = vmatpush1.msra.mxu0 0.0
        %2053 = vmatprep.subr.mxu0 0.0
        %2054 = vmatpush1.msra.mxu0 0.0
        %2055 = vmatprep.subr.mxu0 0.0
        %2056 = vmatpush1.msra.mxu0 0.0
        %2057 = vmatprep.subr.mxu0 0.0
        %2058 = vmatpush1.msra.mxu0 0.0
        %2059 = vmatprep.subr.mxu0 0.0
        %2060 = vmatpush1.msra.mxu0 0.0
        %2061 = vmatprep.subr.mxu0 0.0
        %2062 = vmatpush1.msra.mxu0 0.0
        %2063 = vmatprep.subr.mxu0 0.0
        %2064 = vmatpush1.msra.mxu0 0.0
        %2065 = vmatprep.subr.mxu0 0.0
        %2066 = vmatpush1.msra.mxu0 0.0
        %2067 = vmatprep.subr.mxu0 0.0
        %2068 = vmatpush1.msra.mxu0 0.0
        %2069 = vmatprep.subr.mxu0 0.0
        %2070 = vmatpush1.msra.mxu0 0.0
        %2071 = vmatprep.mubr.f32.mxu0 0.0
        %v2072 = vand.u32 %v1983, 4294901760
        %v2073 = vsub.f32 %v1983, %v2072
        %v2074 = vand.u32 %v2073, 4294901760
        %v2075 = vsub.f32 %v2073, %v2074
        %v2076 = vand.u32 %v2075, 4294901760
        %2077 = vmatmul.mubr.f32.gmra.mrb[0].mxu0 %v2076
        %v2078 = vpop.f32.mrb[0].mxu0
        %v2079 = vadd.f32 0.0, %v2078
        %v2080 = vpop.f32.mrb[0].mxu0
        %2081 = vmatprep.mubr.f32.mxu0 0.0
        %v2082 = vand.u32 %v1984, 4294901760
        %v2083 = vsub.f32 %v1984, %v2082
        %v2084 = vand.u32 %v2083, 4294901760
        %v2085 = vsub.f32 %v2083, %v2084
        %v2086 = vand.u32 %v2085, 4294901760
        %2087 = vmatmul.mubr.f32.gmra.mrb[0].mxu0 %v2086
        %v2088 = vpop.f32.mrb[0].mxu0
        %v2089 = vadd.f32 0.0, %v2088
        %v2090 = vpop.f32.mrb[0].mxu0
        %2091 = vmatprep.mubr.f32.mxu0 0.0
        %v2092 = vand.u32 %v1985, 4294901760
        %v2093 = vsub.f32 %v1985, %v2092
        %v2094 = vand.u32 %v2093, 4294901760
        %v2095 = vsub.f32 %v2093, %v2094
        %v2096 = vand.u32 %v2095, 4294901760
        %2097 = vmatmul.mubr.f32.gmra.mrb[0].mxu0 %v2096
        %v2098 = vpop.f32.mrb[0].mxu0
        %v2099 = vadd.f32 0.0, %v2098
        %v2100 = vpop.f32.mrb[0].mxu0
        %2101 = vmatprep.mubr.f32.mxu0 0.0
        %v2102 = vand.u32 %v1986, 4294901760
        %v2103 = vsub.f32 %v1986, %v2102
        %v2104 = vand.u32 %v2103, 4294901760
        %v2105 = vsub.f32 %v2103, %v2104
        %v2106 = vand.u32 %v2105, 4294901760
        %2107 = vmatmul.mubr.f32.gmra.mrb[0].mxu0 %v2106
        %v2108 = vpop.f32.mrb[0].mxu0
        %v2109 = vadd.f32 0.0, %v2108
        %v2110 = vpop.f32.mrb[0].mxu0
        %2111 = vmatprep.mubr.f32.mxu0 0.0
        %v2112 = vand.u32 %v1987, 4294901760
        %v2113 = vsub.f32 %v1987, %v2112
        %v2114 = vand.u32 %v2113, 4294901760
        %v2115 = vsub.f32 %v2113, %v2114
        %v2116 = vand.u32 %v2115, 4294901760
        %2117 = vmatmul.mubr.f32.gmra.mrb[0].mxu0 %v2116
        %v2118 = vpop.f32.mrb[0].mxu0
        %v2119 = vadd.f32 0.0, %v2118
        %v2120 = vpop.f32.mrb[0].mxu0
        %2121 = vmatprep.mubr.f32.mxu0 0.0
        %v2122 = vand.u32 %v1988, 4294901760
        %v2123 = vsub.f32 %v1988, %v2122
        %v2124 = vand.u32 %v2123, 4294901760
        %v2125 = vsub.f32 %v2123, %v2124
        %v2126 = vand.u32 %v2125, 4294901760
        %2127 = vmatmul.mubr.f32.gmra.mrb[0].mxu0 %v2126
        %v2128 = vpop.f32.mrb[0].mxu0
        %v2129 = vadd.f32 0.0, %v2128
        %v2130 = vpop.f32.mrb[0].mxu0
        %2131 = vmatprep.mubr.f32.mxu0 0.0
        %v2132 = vand.u32 %v1989, 4294901760
        %v2133 = vsub.f32 %v1989, %v2132
        %v2134 = vand.u32 %v2133, 4294901760
        %v2135 = vsub.f32 %v2133, %v2134
        %v2136 = vand.u32 %v2135, 4294901760
        %2137 = vmatmul.mubr.f32.gmra.mrb[0].mxu0 %v2136
        %v2138 = vpop.f32.mrb[0].mxu0
        %v2139 = vadd.f32 0.0, %v2138
        %v2140 = vpop.f32.mrb[0].mxu0
        %2141 = vmatprep.mubr.f32.mxu0 0.0
        %v2142 = vand.u32 %v1990, 4294901760
        %v2143 = vsub.f32 %v1990, %v2142
        %v2144 = vand.u32 %v2143, 4294901760
        %v2145 = vsub.f32 %v2143, %v2144
        %v2146 = vand.u32 %v2145, 4294901760
        %2147 = vmatmul.mubr.f32.gmra.mrb[0].mxu0 %v2146
        %v2148 = vpop.f32.mrb[0].mxu0
        %v2149 = vadd.f32 0.0, %v2148
        %v2150 = vpop.f32.mrb[0].mxu0
        %2151 = vdwg.mxu0
        %2152 = vmatprep.subr.mxu0 0.0
        %v2153 = vand.u32 %v234, 4294901760
        %v2154 = vsub.f32 %v234, %v2153
        %v2155 = vand.u32 %v2154, 4294901760
        %v2156 = vsub.f32 %v2154, %v2155
        %v2157 = vand.u32 %v2156, 4294901760
        %2158 = vmatpush1.msra.mxu0 %v2157
        %2159 = vmatprep.subr.mxu0 0.0
        %v2160 = vand.u32 %v235, 4294901760
        %v2161 = vsub.f32 %v235, %v2160
        %v2162 = vand.u32 %v2161, 4294901760
        %v2163 = vsub.f32 %v2161, %v2162
        %v2164 = vand.u32 %v2163, 4294901760
        %2165 = vmatpush1.msra.mxu0 %v2164
        %2166 = vmatprep.subr.mxu0 0.0
        %v2167 = vand.u32 %v236, 4294901760
        %v2168 = vsub.f32 %v236, %v2167
        %v2169 = vand.u32 %v2168, 4294901760
        %v2170 = vsub.f32 %v2168, %v2169
        %v2171 = vand.u32 %v2170, 4294901760
        %2172 = vmatpush1.msra.mxu0 %v2171
        %2173 = vmatprep.subr.mxu0 0.0
        %v2174 = vand.u32 %v237, 4294901760
        %v2175 = vsub.f32 %v237, %v2174
        %v2176 = vand.u32 %v2175, 4294901760
        %v2177 = vsub.f32 %v2175, %v2176
        %v2178 = vand.u32 %v2177, 4294901760
        %2179 = vmatpush1.msra.mxu0 %v2178
        %2180 = vmatprep.subr.mxu0 0.0
        %v2181 = vand.u32 %v238, 4294901760
        %v2182 = vsub.f32 %v238, %v2181
        %v2183 = vand.u32 %v2182, 4294901760
        %v2184 = vsub.f32 %v2182, %v2183
        %v2185 = vand.u32 %v2184, 4294901760
        %2186 = vmatpush1.msra.mxu0 %v2185
        %2187 = vmatprep.subr.mxu0 0.0
        %v2188 = vand.u32 %v239, 4294901760
        %v2189 = vsub.f32 %v239, %v2188
        %v2190 = vand.u32 %v2189, 4294901760
        %v2191 = vsub.f32 %v2189, %v2190
        %v2192 = vand.u32 %v2191, 4294901760
        %2193 = vmatpush1.msra.mxu0 %v2192
        %2194 = vmatprep.subr.mxu0 0.0
        %v2195 = vand.u32 %v240, 4294901760
        %v2196 = vsub.f32 %v240, %v2195
        %v2197 = vand.u32 %v2196, 4294901760
        %v2198 = vsub.f32 %v2196, %v2197
        %v2199 = vand.u32 %v2198, 4294901760
        %2200 = vmatpush1.msra.mxu0 %v2199
        %2201 = vmatprep.subr.mxu0 0.0
        %v2202 = vand.u32 %v241, 4294901760
        %v2203 = vsub.f32 %v241, %v2202
        %v2204 = vand.u32 %v2203, 4294901760
        %v2205 = vsub.f32 %v2203, %v2204
        %v2206 = vand.u32 %v2205, 4294901760
        %2207 = vmatpush1.msra.mxu0 %v2206
        %2208 = vmatprep.subr.mxu0 0.0
        %v2209 = vand.u32 %v242, 4294901760
        %v2210 = vsub.f32 %v242, %v2209
        %v2211 = vand.u32 %v2210, 4294901760
        %v2212 = vsub.f32 %v2210, %v2211
        %v2213 = vand.u32 %v2212, 4294901760
        %2214 = vmatpush1.msra.mxu0 %v2213
        %2215 = vmatprep.subr.mxu0 0.0
        %v2216 = vand.u32 %v243, 4294901760
        %v2217 = vsub.f32 %v243, %v2216
        %v2218 = vand.u32 %v2217, 4294901760
        %v2219 = vsub.f32 %v2217, %v2218
        %v2220 = vand.u32 %v2219, 4294901760
        %2221 = vmatpush1.msra.mxu0 %v2220
        %2222 = vmatprep.subr.mxu0 0.0
        %v2223 = vand.u32 %v244, 4294901760
        %v2224 = vsub.f32 %v244, %v2223
        %v2225 = vand.u32 %v2224, 4294901760
        %v2226 = vsub.f32 %v2224, %v2225
        %v2227 = vand.u32 %v2226, 4294901760
        %2228 = vmatpush1.msra.mxu0 %v2227
        %2229 = vmatprep.subr.mxu0 0.0
        %v2230 = vand.u32 %v245, 4294901760
        %v2231 = vsub.f32 %v245, %v2230
        %v2232 = vand.u32 %v2231, 4294901760
        %v2233 = vsub.f32 %v2231, %v2232
        %v2234 = vand.u32 %v2233, 4294901760
        %2235 = vmatpush1.msra.mxu0 %v2234
        %2236 = vmatprep.subr.mxu0 0.0
        %v2237 = vand.u32 %v246, 4294901760
        %v2238 = vsub.f32 %v246, %v2237
        %v2239 = vand.u32 %v2238, 4294901760
        %v2240 = vsub.f32 %v2238, %v2239
        %v2241 = vand.u32 %v2240, 4294901760
        %2242 = vmatpush1.msra.mxu0 %v2241
        %2243 = vmatprep.subr.mxu0 0.0
        %v2244 = vand.u32 %v247, 4294901760
        %v2245 = vsub.f32 %v247, %v2244
        %v2246 = vand.u32 %v2245, 4294901760
        %v2247 = vsub.f32 %v2245, %v2246
        %v2248 = vand.u32 %v2247, 4294901760
        %2249 = vmatpush1.msra.mxu0 %v2248
        %2250 = vmatprep.subr.mxu0 0.0
        %v2251 = vand.u32 %v248, 4294901760
        %v2252 = vsub.f32 %v248, %v2251
        %v2253 = vand.u32 %v2252, 4294901760
        %v2254 = vsub.f32 %v2252, %v2253
        %v2255 = vand.u32 %v2254, 4294901760
        %2256 = vmatpush1.msra.mxu0 %v2255
        %2257 = vmatprep.subr.mxu0 0.0
        %v2258 = vand.u32 %v249, 4294901760
        %v2259 = vsub.f32 %v249, %v2258
        %v2260 = vand.u32 %v2259, 4294901760
        %v2261 = vsub.f32 %v2259, %v2260
        %v2262 = vand.u32 %v2261, 4294901760
        %2263 = vmatpush1.msra.mxu0 %v2262
        %2264 = vmatprep.subr.mxu0 0.0
        %2265 = vmatpush1.msra.mxu0 0.0
        %2266 = vmatprep.subr.mxu0 0.0
        %2267 = vmatpush1.msra.mxu0 0.0
        %2268 = vmatprep.subr.mxu0 0.0
        %2269 = vmatpush1.msra.mxu0 0.0
        %2270 = vmatprep.subr.mxu0 0.0
        %2271 = vmatpush1.msra.mxu0 0.0
        %2272 = vmatprep.subr.mxu0 0.0
        %2273 = vmatpush1.msra.mxu0 0.0
        %2274 = vmatprep.subr.mxu0 0.0
        %2275 = vmatpush1.msra.mxu0 0.0
        %2276 = vmatprep.subr.mxu0 0.0
        %2277 = vmatpush1.msra.mxu0 0.0
        %2278 = vmatprep.subr.mxu0 0.0
        %2279 = vmatpush1.msra.mxu0 0.0
        %2280 = vmatprep.subr.mxu0 0.0
        %2281 = vmatpush1.msra.mxu0 0.0
        %2282 = vmatprep.subr.mxu0 0.0
        %2283 = vmatpush1.msra.mxu0 0.0
        %2284 = vmatprep.subr.mxu0 0.0
        %2285 = vmatpush1.msra.mxu0 0.0
        %2286 = vmatprep.subr.mxu0 0.0
        %2287 = vmatpush1.msra.mxu0 0.0
        %2288 = vmatprep.subr.mxu0 0.0
        %2289 = vmatpush1.msra.mxu0 0.0
        %2290 = vmatprep.subr.mxu0 0.0
        %2291 = vmatpush1.msra.mxu0 0.0
        %2292 = vmatprep.subr.mxu0 0.0
        %2293 = vmatpush1.msra.mxu0 0.0
        %2294 = vmatprep.subr.mxu0 0.0
        %2295 = vmatpush1.msra.mxu0 0.0
        %2296 = vmatprep.mubr.f32.mxu0 0.0
        %v2297 = vand.u32 %v1983, 4294901760
        %2298 = vmatmul.mubr.f32.gmra.mrb[0].mxu0 %v2297
        %v2299 = vpop.f32.mrb[0].mxu0
        %v2300 = vadd.f32 %v2079, %v2299
        %v2301 = vpop.f32.mrb[0].mxu0
        %2302 = vmatprep.mubr.f32.mxu0 0.0
        %v2303 = vand.u32 %v1984, 4294901760
        %2304 = vmatmul.mubr.f32.gmra.mrb[0].mxu0 %v2303
        %v2305 = vpop.f32.mrb[0].mxu0
        %v2306 = vadd.f32 %v2089, %v2305
        %v2307 = vpop.f32.mrb[0].mxu0
        %2308 = vmatprep.mubr.f32.mxu0 0.0
        %v2309 = vand.u32 %v1985, 4294901760
        %2310 = vmatmul.mubr.f32.gmra.mrb[0].mxu0 %v2309
        %v2311 = vpop.f32.mrb[0].mxu0
        %v2312 = vadd.f32 %v2099, %v2311
        %v2313 = vpop.f32.mrb[0].mxu0
        %2314 = vmatprep.mubr.f32.mxu0 0.0
        %v2315 = vand.u32 %v1986, 4294901760
        %2316 = vmatmul.mubr.f32.gmra.mrb[0].mxu0 %v2315
        %v2317 = vpop.f32.mrb[0].mxu0
        %v2318 = vadd.f32 %v2109, %v2317
        %v2319 = vpop.f32.mrb[0].mxu0
        %2320 = vmatprep.mubr.f32.mxu0 0.0
        %v2321 = vand.u32 %v1987, 4294901760
        %2322 = vmatmul.mubr.f32.gmra.mrb[0].mxu0 %v2321
        %v2323 = vpop.f32.mrb[0].mxu0
        %v2324 = vadd.f32 %v2119, %v2323
        %v2325 = vpop.f32.mrb[0].mxu0
        %2326 = vmatprep.mubr.f32.mxu0 0.0
        %v2327 = vand.u32 %v1988, 4294901760
        %2328 = vmatmul.mubr.f32.gmra.mrb[0].mxu0 %v2327
        %v2329 = vpop.f32.mrb[0].mxu0
        %v2330 = vadd.f32 %v2129, %v2329
        %v2331 = vpop.f32.mrb[0].mxu0
        %2332 = vmatprep.mubr.f32.mxu0 0.0
        %v2333 = vand.u32 %v1989, 4294901760
        %2334 = vmatmul.mubr.f32.gmra.mrb[0].mxu0 %v2333
        %v2335 = vpop.f32.mrb[0].mxu0
        %v2336 = vadd.f32 %v2139, %v2335
        %v2337 = vpop.f32.mrb[0].mxu0
        %2338 = vmatprep.mubr.f32.mxu0 0.0
        %v2339 = vand.u32 %v1990, 4294901760
        %2340 = vmatmul.mubr.f32.gmra.mrb[0].mxu0 %v2339
        %v2341 = vpop.f32.mrb[0].mxu0
        %v2342 = vadd.f32 %v2149, %v2341
        %v2343 = vpop.f32.mrb[0].mxu0
        %2344 = vdwg.mxu0
        %2345 = vmatprep.subr.mxu0 0.0
        %v2346 = vand.u32 %v234, 4294901760
        %v2347 = vsub.f32 %v234, %v2346
        %2348 = vmatpush1.msra.mxu0 %v2347
        %2349 = vmatprep.subr.mxu0 0.0
        %v2350 = vand.u32 %v235, 4294901760
        %v2351 = vsub.f32 %v235, %v2350
        %2352 = vmatpush1.msra.mxu0 %v2351
        %2353 = vmatprep.subr.mxu0 0.0
        %v2354 = vand.u32 %v236, 4294901760
        %v2355 = vsub.f32 %v236, %v2354
        %2356 = vmatpush1.msra.mxu0 %v2355
        %2357 = vmatprep.subr.mxu0 0.0
        %v2358 = vand.u32 %v237, 4294901760
        %v2359 = vsub.f32 %v237, %v2358
        %2360 = vmatpush1.msra.mxu0 %v2359
        %2361 = vmatprep.subr.mxu0 0.0
        %v2362 = vand.u32 %v238, 4294901760
        %v2363 = vsub.f32 %v238, %v2362
        %2364 = vmatpush1.msra.mxu0 %v2363
        %2365 = vmatprep.subr.mxu0 0.0
        %v2366 = vand.u32 %v239, 4294901760
        %v2367 = vsub.f32 %v239, %v2366
        %2368 = vmatpush1.msra.mxu0 %v2367
        %2369 = vmatprep.subr.mxu0 0.0
        %v2370 = vand.u32 %v240, 4294901760
        %v2371 = vsub.f32 %v240, %v2370
        %2372 = vmatpush1.msra.mxu0 %v2371
        %2373 = vmatprep.subr.mxu0 0.0
        %v2374 = vand.u32 %v241, 4294901760
        %v2375 = vsub.f32 %v241, %v2374
        %2376 = vmatpush1.msra.mxu0 %v2375
        %2377 = vmatprep.subr.mxu0 0.0
        %v2378 = vand.u32 %v242, 4294901760
        %v2379 = vsub.f32 %v242, %v2378
        %2380 = vmatpush1.msra.mxu0 %v2379
        %2381 = vmatprep.subr.mxu0 0.0
        %v2382 = vand.u32 %v243, 4294901760
        %v2383 = vsub.f32 %v243, %v2382
        %2384 = vmatpush1.msra.mxu0 %v2383
        %2385 = vmatprep.subr.mxu0 0.0
        %v2386 = vand.u32 %v244, 4294901760
        %v2387 = vsub.f32 %v244, %v2386
        %2388 = vmatpush1.msra.mxu0 %v2387
        %2389 = vmatprep.subr.mxu0 0.0
        %v2390 = vand.u32 %v245, 4294901760
        %v2391 = vsub.f32 %v245, %v2390
        %2392 = vmatpush1.msra.mxu0 %v2391
        %2393 = vmatprep.subr.mxu0 0.0
        %v2394 = vand.u32 %v246, 4294901760
        %v2395 = vsub.f32 %v246, %v2394
        %2396 = vmatpush1.msra.mxu0 %v2395
        %2397 = vmatprep.subr.mxu0 0.0
        %v2398 = vand.u32 %v247, 4294901760
        %v2399 = vsub.f32 %v247, %v2398
        %2400 = vmatpush1.msra.mxu0 %v2399
        %2401 = vmatprep.subr.mxu0 0.0
        %v2402 = vand.u32 %v248, 4294901760
        %v2403 = vsub.f32 %v248, %v2402
        %2404 = vmatpush1.msra.mxu0 %v2403
        %2405 = vmatprep.subr.mxu0 0.0
        %v2406 = vand.u32 %v249, 4294901760
        %v2407 = vsub.f32 %v249, %v2406
        %2408 = vmatpush1.msra.mxu0 %v2407
        %2409 = vmatprep.subr.mxu0 0.0
        %2410 = vmatpush1.msra.mxu0 0.0
        %2411 = vmatprep.subr.mxu0 0.0
        %2412 = vmatpush1.msra.mxu0 0.0
        %2413 = vmatprep.subr.mxu0 0.0
        %2414 = vmatpush1.msra.mxu0 0.0
        %2415 = vmatprep.subr.mxu0 0.0
        %2416 = vmatpush1.msra.mxu0 0.0
        %2417 = vmatprep.subr.mxu0 0.0
        %2418 = vmatpush1.msra.mxu0 0.0
        %2419 = vmatprep.subr.mxu0 0.0
        %2420 = vmatpush1.msra.mxu0 0.0
        %2421 = vmatprep.subr.mxu0 0.0
        %2422 = vmatpush1.msra.mxu0 0.0
        %2423 = vmatprep.subr.mxu0 0.0
        %2424 = vmatpush1.msra.mxu0 0.0
        %2425 = vmatprep.subr.mxu0 0.0
        %2426 = vmatpush1.msra.mxu0 0.0
        %2427 = vmatprep.subr.mxu0 0.0
        %2428 = vmatpush1.msra.mxu0 0.0
        %2429 = vmatprep.subr.mxu0 0.0
        %2430 = vmatpush1.msra.mxu0 0.0
        %2431 = vmatprep.subr.mxu0 0.0
        %2432 = vmatpush1.msra.mxu0 0.0
        %2433 = vmatprep.subr.mxu0 0.0
        %2434 = vmatpush1.msra.mxu0 0.0
        %2435 = vmatprep.subr.mxu0 0.0
        %2436 = vmatpush1.msra.mxu0 0.0
        %2437 = vmatprep.subr.mxu0 0.0
        %2438 = vmatpush1.msra.mxu0 0.0
        %2439 = vmatprep.subr.mxu0 0.0
        %2440 = vmatpush1.msra.mxu0 0.0
        %2441 = vmatprep.mubr.f32.mxu0 0.0
        %v2442 = vand.u32 %v1983, 4294901760
        %v2443 = vsub.f32 %v1983, %v2442
        %2444 = vmatmul.mubr.f32.gmra.mrb[0].mxu0 %v2443
        %v2445 = vpop.f32.mrb[0].mxu0
        %v2446 = vadd.f32 %v2300, %v2445
        %v2447 = vpop.f32.mrb[0].mxu0
        %2448 = vmatprep.mubr.f32.mxu0 0.0
        %v2449 = vand.u32 %v1984, 4294901760
        %v2450 = vsub.f32 %v1984, %v2449
        %2451 = vmatmul.mubr.f32.gmra.mrb[0].mxu0 %v2450
        %v2452 = vpop.f32.mrb[0].mxu0
        %v2453 = vadd.f32 %v2306, %v2452
        %v2454 = vpop.f32.mrb[0].mxu0
        %2455 = vmatprep.mubr.f32.mxu0 0.0
        %v2456 = vand.u32 %v1985, 4294901760
        %v2457 = vsub.f32 %v1985, %v2456
        %2458 = vmatmul.mubr.f32.gmra.mrb[0].mxu0 %v2457
        %v2459 = vpop.f32.mrb[0].mxu0
        %v2460 = vadd.f32 %v2312, %v2459
        %v2461 = vpop.f32.mrb[0].mxu0
        %2462 = vmatprep.mubr.f32.mxu0 0.0
        %v2463 = vand.u32 %v1986, 4294901760
        %v2464 = vsub.f32 %v1986, %v2463
        %2465 = vmatmul.mubr.f32.gmra.mrb[0].mxu0 %v2464
        %v2466 = vpop.f32.mrb[0].mxu0
        %v2467 = vadd.f32 %v2318, %v2466
        %v2468 = vpop.f32.mrb[0].mxu0
        %2469 = vmatprep.mubr.f32.mxu0 0.0
        %v2470 = vand.u32 %v1987, 4294901760
        %v2471 = vsub.f32 %v1987, %v2470
        %2472 = vmatmul.mubr.f32.gmra.mrb[0].mxu0 %v2471
        %v2473 = vpop.f32.mrb[0].mxu0
        %v2474 = vadd.f32 %v2324, %v2473
        %v2475 = vpop.f32.mrb[0].mxu0
        %2476 = vmatprep.mubr.f32.mxu0 0.0
        %v2477 = vand.u32 %v1988, 4294901760
        %v2478 = vsub.f32 %v1988, %v2477
        %2479 = vmatmul.mubr.f32.gmra.mrb[0].mxu0 %v2478
        %v2480 = vpop.f32.mrb[0].mxu0
        %v2481 = vadd.f32 %v2330, %v2480
        %v2482 = vpop.f32.mrb[0].mxu0
        %2483 = vmatprep.mubr.f32.mxu0 0.0
        %v2484 = vand.u32 %v1989, 4294901760
        %v2485 = vsub.f32 %v1989, %v2484
        %2486 = vmatmul.mubr.f32.gmra.mrb[0].mxu0 %v2485
        %v2487 = vpop.f32.mrb[0].mxu0
        %v2488 = vadd.f32 %v2336, %v2487
        %v2489 = vpop.f32.mrb[0].mxu0
        %2490 = vmatprep.mubr.f32.mxu0 0.0
        %v2491 = vand.u32 %v1990, 4294901760
        %v2492 = vsub.f32 %v1990, %v2491
        %2493 = vmatmul.mubr.f32.gmra.mrb[0].mxu0 %v2492
        %v2494 = vpop.f32.mrb[0].mxu0
        %v2495 = vadd.f32 %v2342, %v2494
        %v2496 = vpop.f32.mrb[0].mxu0
        %2497 = vdwg.mxu0
        %2498 = vmatprep.subr.mxu0 0.0
        %v2499 = vand.u32 %v234, 4294901760
        %2500 = vmatpush1.msra.mxu0 %v2499
        %2501 = vmatprep.subr.mxu0 0.0
        %v2502 = vand.u32 %v235, 4294901760
        %2503 = vmatpush1.msra.mxu0 %v2502
        %2504 = vmatprep.subr.mxu0 0.0
        %v2505 = vand.u32 %v236, 4294901760
        %2506 = vmatpush1.msra.mxu0 %v2505
        %2507 = vmatprep.subr.mxu0 0.0
        %v2508 = vand.u32 %v237, 4294901760
        %2509 = vmatpush1.msra.mxu0 %v2508
        %2510 = vmatprep.subr.mxu0 0.0
        %v2511 = vand.u32 %v238, 4294901760
        %2512 = vmatpush1.msra.mxu0 %v2511
        %2513 = vmatprep.subr.mxu0 0.0
        %v2514 = vand.u32 %v239, 4294901760
        %2515 = vmatpush1.msra.mxu0 %v2514
        %2516 = vmatprep.subr.mxu0 0.0
        %v2517 = vand.u32 %v240, 4294901760
        %2518 = vmatpush1.msra.mxu0 %v2517
        %2519 = vmatprep.subr.mxu0 0.0
        %v2520 = vand.u32 %v241, 4294901760
        %2521 = vmatpush1.msra.mxu0 %v2520
        %2522 = vmatprep.subr.mxu0 0.0
        %v2523 = vand.u32 %v242, 4294901760
        %2524 = vmatpush1.msra.mxu0 %v2523
        %2525 = vmatprep.subr.mxu0 0.0
        %v2526 = vand.u32 %v243, 4294901760
        %2527 = vmatpush1.msra.mxu0 %v2526
        %2528 = vmatprep.subr.mxu0 0.0
        %v2529 = vand.u32 %v244, 4294901760
        %2530 = vmatpush1.msra.mxu0 %v2529
        %2531 = vmatprep.subr.mxu0 0.0
        %v2532 = vand.u32 %v245, 4294901760
        %2533 = vmatpush1.msra.mxu0 %v2532
        %2534 = vmatprep.subr.mxu0 0.0
        %v2535 = vand.u32 %v246, 4294901760
        %2536 = vmatpush1.msra.mxu0 %v2535
        %2537 = vmatprep.subr.mxu0 0.0
        %v2538 = vand.u32 %v247, 4294901760
        %2539 = vmatpush1.msra.mxu0 %v2538
        %2540 = vmatprep.subr.mxu0 0.0
        %v2541 = vand.u32 %v248, 4294901760
        %2542 = vmatpush1.msra.mxu0 %v2541
        %2543 = vmatprep.subr.mxu0 0.0
        %v2544 = vand.u32 %v249, 4294901760
        %2545 = vmatpush1.msra.mxu0 %v2544
        %2546 = vmatprep.subr.mxu0 0.0
        %2547 = vmatpush1.msra.mxu0 0.0
        %2548 = vmatprep.subr.mxu0 0.0
        %2549 = vmatpush1.msra.mxu0 0.0
        %2550 = vmatprep.subr.mxu0 0.0
        %2551 = vmatpush1.msra.mxu0 0.0
        %2552 = vmatprep.subr.mxu0 0.0
        %2553 = vmatpush1.msra.mxu0 0.0
        %2554 = vmatprep.subr.mxu0 0.0
        %2555 = vmatpush1.msra.mxu0 0.0
        %2556 = vmatprep.subr.mxu0 0.0
        %2557 = vmatpush1.msra.mxu0 0.0
        %2558 = vmatprep.subr.mxu0 0.0
        %2559 = vmatpush1.msra.mxu0 0.0
        %2560 = vmatprep.subr.mxu0 0.0
        %2561 = vmatpush1.msra.mxu0 0.0
        %2562 = vmatprep.subr.mxu0 0.0
        %2563 = vmatpush1.msra.mxu0 0.0
        %2564 = vmatprep.subr.mxu0 0.0
        %2565 = vmatpush1.msra.mxu0 0.0
        %2566 = vmatprep.subr.mxu0 0.0
        %2567 = vmatpush1.msra.mxu0 0.0
        %2568 = vmatprep.subr.mxu0 0.0
        %2569 = vmatpush1.msra.mxu0 0.0
        %2570 = vmatprep.subr.mxu0 0.0
        %2571 = vmatpush1.msra.mxu0 0.0
        %2572 = vmatprep.subr.mxu0 0.0
        %2573 = vmatpush1.msra.mxu0 0.0
        %2574 = vmatprep.subr.mxu0 0.0
        %2575 = vmatpush1.msra.mxu0 0.0
        %2576 = vmatprep.subr.mxu0 0.0
        %2577 = vmatpush1.msra.mxu0 0.0
        %2578 = vmatprep.mubr.f32.mxu0 0.0
        %v2579 = vand.u32 %v1983, 4294901760
        %v2580 = vsub.f32 %v1983, %v2579
        %v2581 = vand.u32 %v2580, 4294901760
        %2582 = vmatmul.mubr.f32.gmra.mrb[0].mxu0 %v2581
        %v2583 = vpop.f32.mrb[0].mxu0
        %v2584 = vadd.f32 %v2446, %v2583
        %v2585 = vpop.f32.mrb[0].mxu0
        %2586 = vmatprep.mubr.f32.mxu0 0.0
        %v2587 = vand.u32 %v1984, 4294901760
        %v2588 = vsub.f32 %v1984, %v2587
        %v2589 = vand.u32 %v2588, 4294901760
        %2590 = vmatmul.mubr.f32.gmra.mrb[0].mxu0 %v2589
        %v2591 = vpop.f32.mrb[0].mxu0
        %v2592 = vadd.f32 %v2453, %v2591
        %v2593 = vpop.f32.mrb[0].mxu0
        %2594 = vmatprep.mubr.f32.mxu0 0.0
        %v2595 = vand.u32 %v1985, 4294901760
        %v2596 = vsub.f32 %v1985, %v2595
        %v2597 = vand.u32 %v2596, 4294901760
        %2598 = vmatmul.mubr.f32.gmra.mrb[0].mxu0 %v2597
        %v2599 = vpop.f32.mrb[0].mxu0
        %v2600 = vadd.f32 %v2460, %v2599
        %v2601 = vpop.f32.mrb[0].mxu0
        %2602 = vmatprep.mubr.f32.mxu0 0.0
        %v2603 = vand.u32 %v1986, 4294901760
        %v2604 = vsub.f32 %v1986, %v2603
        %v2605 = vand.u32 %v2604, 4294901760
        %2606 = vmatmul.mubr.f32.gmra.mrb[0].mxu0 %v2605
        %v2607 = vpop.f32.mrb[0].mxu0
        %v2608 = vadd.f32 %v2467, %v2607
        %v2609 = vpop.f32.mrb[0].mxu0
        %2610 = vmatprep.mubr.f32.mxu0 0.0
        %v2611 = vand.u32 %v1987, 4294901760
        %v2612 = vsub.f32 %v1987, %v2611
        %v2613 = vand.u32 %v2612, 4294901760
        %2614 = vmatmul.mubr.f32.gmra.mrb[0].mxu0 %v2613
        %v2615 = vpop.f32.mrb[0].mxu0
        %v2616 = vadd.f32 %v2474, %v2615
        %v2617 = vpop.f32.mrb[0].mxu0
        %2618 = vmatprep.mubr.f32.mxu0 0.0
        %v2619 = vand.u32 %v1988, 4294901760
        %v2620 = vsub.f32 %v1988, %v2619
        %v2621 = vand.u32 %v2620, 4294901760
        %2622 = vmatmul.mubr.f32.gmra.mrb[0].mxu0 %v2621
        %v2623 = vpop.f32.mrb[0].mxu0
        %v2624 = vadd.f32 %v2481, %v2623
        %v2625 = vpop.f32.mrb[0].mxu0
        %2626 = vmatprep.mubr.f32.mxu0 0.0
        %v2627 = vand.u32 %v1989, 4294901760
        %v2628 = vsub.f32 %v1989, %v2627
        %v2629 = vand.u32 %v2628, 4294901760
        %2630 = vmatmul.mubr.f32.gmra.mrb[0].mxu0 %v2629
        %v2631 = vpop.f32.mrb[0].mxu0
        %v2632 = vadd.f32 %v2488, %v2631
        %v2633 = vpop.f32.mrb[0].mxu0
        %2634 = vmatprep.mubr.f32.mxu0 0.0
        %v2635 = vand.u32 %v1990, 4294901760
        %v2636 = vsub.f32 %v1990, %v2635
        %v2637 = vand.u32 %v2636, 4294901760
        %2638 = vmatmul.mubr.f32.gmra.mrb[0].mxu0 %v2637
        %v2639 = vpop.f32.mrb[0].mxu0
        %v2640 = vadd.f32 %v2495, %v2639
        %v2641 = vpop.f32.mrb[0].mxu0
        %2642 = vdwg.mxu0
        %2643 = vmatprep.subr.mxu0 0.0
        %v2644 = vand.u32 %v234, 4294901760
        %v2645 = vsub.f32 %v234, %v2644
        %v2646 = vand.u32 %v2645, 4294901760
        %2647 = vmatpush1.msra.mxu0 %v2646
        %2648 = vmatprep.subr.mxu0 0.0
        %v2649 = vand.u32 %v235, 4294901760
        %v2650 = vsub.f32 %v235, %v2649
        %v2651 = vand.u32 %v2650, 4294901760
        %2652 = vmatpush1.msra.mxu0 %v2651
        %2653 = vmatprep.subr.mxu0 0.0
        %v2654 = vand.u32 %v236, 4294901760
        %v2655 = vsub.f32 %v236, %v2654
        %v2656 = vand.u32 %v2655, 4294901760
        %2657 = vmatpush1.msra.mxu0 %v2656
        %2658 = vmatprep.subr.mxu0 0.0
        %v2659 = vand.u32 %v237, 4294901760
        %v2660 = vsub.f32 %v237, %v2659
        %v2661 = vand.u32 %v2660, 4294901760
        %2662 = vmatpush1.msra.mxu0 %v2661
        %2663 = vmatprep.subr.mxu0 0.0
        %v2664 = vand.u32 %v238, 4294901760
        %v2665 = vsub.f32 %v238, %v2664
        %v2666 = vand.u32 %v2665, 4294901760
        %2667 = vmatpush1.msra.mxu0 %v2666
        %2668 = vmatprep.subr.mxu0 0.0
        %v2669 = vand.u32 %v239, 4294901760
        %v2670 = vsub.f32 %v239, %v2669
        %v2671 = vand.u32 %v2670, 4294901760
        %2672 = vmatpush1.msra.mxu0 %v2671
        %2673 = vmatprep.subr.mxu0 0.0
        %v2674 = vand.u32 %v240, 4294901760
        %v2675 = vsub.f32 %v240, %v2674
        %v2676 = vand.u32 %v2675, 4294901760
        %2677 = vmatpush1.msra.mxu0 %v2676
        %2678 = vmatprep.subr.mxu0 0.0
        %v2679 = vand.u32 %v241, 4294901760
        %v2680 = vsub.f32 %v241, %v2679
        %v2681 = vand.u32 %v2680, 4294901760
        %2682 = vmatpush1.msra.mxu0 %v2681
        %2683 = vmatprep.subr.mxu0 0.0
        %v2684 = vand.u32 %v242, 4294901760
        %v2685 = vsub.f32 %v242, %v2684
        %v2686 = vand.u32 %v2685, 4294901760
        %2687 = vmatpush1.msra.mxu0 %v2686
        %2688 = vmatprep.subr.mxu0 0.0
        %v2689 = vand.u32 %v243, 4294901760
        %v2690 = vsub.f32 %v243, %v2689
        %v2691 = vand.u32 %v2690, 4294901760
        %2692 = vmatpush1.msra.mxu0 %v2691
        %2693 = vmatprep.subr.mxu0 0.0
        %v2694 = vand.u32 %v244, 4294901760
        %v2695 = vsub.f32 %v244, %v2694
        %v2696 = vand.u32 %v2695, 4294901760
        %2697 = vmatpush1.msra.mxu0 %v2696
        %2698 = vmatprep.subr.mxu0 0.0
        %v2699 = vand.u32 %v245, 4294901760
        %v2700 = vsub.f32 %v245, %v2699
        %v2701 = vand.u32 %v2700, 4294901760
        %2702 = vmatpush1.msra.mxu0 %v2701
        %2703 = vmatprep.subr.mxu0 0.0
        %v2704 = vand.u32 %v246, 4294901760
        %v2705 = vsub.f32 %v246, %v2704
        %v2706 = vand.u32 %v2705, 4294901760
        %2707 = vmatpush1.msra.mxu0 %v2706
        %2708 = vmatprep.subr.mxu0 0.0
        %v2709 = vand.u32 %v247, 4294901760
        %v2710 = vsub.f32 %v247, %v2709
        %v2711 = vand.u32 %v2710, 4294901760
        %2712 = vmatpush1.msra.mxu0 %v2711
        %2713 = vmatprep.subr.mxu0 0.0
        %v2714 = vand.u32 %v248, 4294901760
        %v2715 = vsub.f32 %v248, %v2714
        %v2716 = vand.u32 %v2715, 4294901760
        %2717 = vmatpush1.msra.mxu0 %v2716
        %2718 = vmatprep.subr.mxu0 0.0
        %v2719 = vand.u32 %v249, 4294901760
        %v2720 = vsub.f32 %v249, %v2719
        %v2721 = vand.u32 %v2720, 4294901760
        %2722 = vmatpush1.msra.mxu0 %v2721
        %2723 = vmatprep.subr.mxu0 0.0
        %2724 = vmatpush1.msra.mxu0 0.0
        %2725 = vmatprep.subr.mxu0 0.0
        %2726 = vmatpush1.msra.mxu0 0.0
        %2727 = vmatprep.subr.mxu0 0.0
        %2728 = vmatpush1.msra.mxu0 0.0
        %2729 = vmatprep.subr.mxu0 0.0
        %2730 = vmatpush1.msra.mxu0 0.0
        %2731 = vmatprep.subr.mxu0 0.0
        %2732 = vmatpush1.msra.mxu0 0.0
        %2733 = vmatprep.subr.mxu0 0.0
        %2734 = vmatpush1.msra.mxu0 0.0
        %2735 = vmatprep.subr.mxu0 0.0
        %2736 = vmatpush1.msra.mxu0 0.0
        %2737 = vmatprep.subr.mxu0 0.0
        %2738 = vmatpush1.msra.mxu0 0.0
        %2739 = vmatprep.subr.mxu0 0.0
        %2740 = vmatpush1.msra.mxu0 0.0
        %2741 = vmatprep.subr.mxu0 0.0
        %2742 = vmatpush1.msra.mxu0 0.0
        %2743 = vmatprep.subr.mxu0 0.0
        %2744 = vmatpush1.msra.mxu0 0.0
        %2745 = vmatprep.subr.mxu0 0.0
        %2746 = vmatpush1.msra.mxu0 0.0
        %2747 = vmatprep.subr.mxu0 0.0
        %2748 = vmatpush1.msra.mxu0 0.0
        %2749 = vmatprep.subr.mxu0 0.0
        %2750 = vmatpush1.msra.mxu0 0.0
        %2751 = vmatprep.subr.mxu0 0.0
        %2752 = vmatpush1.msra.mxu0 0.0
        %2753 = vmatprep.subr.mxu0 0.0
        %2754 = vmatpush1.msra.mxu0 0.0
        %2755 = vmatprep.mubr.f32.mxu0 0.0
        %v2756 = vand.u32 %v1983, 4294901760
        %2757 = vmatmul.mubr.f32.gmra.mrb[0].mxu0 %v2756
        %v2758 = vpop.f32.mrb[0].mxu0
        %v2759 = vadd.f32 %v2584, %v2758
        %v2760 = vpop.f32.mrb[0].mxu0
        %2761 = vmatprep.mubr.f32.mxu0 0.0
        %v2762 = vand.u32 %v1984, 4294901760
        %2763 = vmatmul.mubr.f32.gmra.mrb[0].mxu0 %v2762
        %v2764 = vpop.f32.mrb[0].mxu0
        %v2765 = vadd.f32 %v2592, %v2764
        %v2766 = vpop.f32.mrb[0].mxu0
        %2767 = vmatprep.mubr.f32.mxu0 0.0
        %v2768 = vand.u32 %v1985, 4294901760
        %2769 = vmatmul.mubr.f32.gmra.mrb[0].mxu0 %v2768
        %v2770 = vpop.f32.mrb[0].mxu0
        %v2771 = vadd.f32 %v2600, %v2770
        %v2772 = vpop.f32.mrb[0].mxu0
        %2773 = vmatprep.mubr.f32.mxu0 0.0
        %v2774 = vand.u32 %v1986, 4294901760
        %2775 = vmatmul.mubr.f32.gmra.mrb[0].mxu0 %v2774
        %v2776 = vpop.f32.mrb[0].mxu0
        %v2777 = vadd.f32 %v2608, %v2776
        %v2778 = vpop.f32.mrb[0].mxu0
        %2779 = vmatprep.mubr.f32.mxu0 0.0
        %v2780 = vand.u32 %v1987, 4294901760
        %2781 = vmatmul.mubr.f32.gmra.mrb[0].mxu0 %v2780
        %v2782 = vpop.f32.mrb[0].mxu0
        %v2783 = vadd.f32 %v2616, %v2782
        %v2784 = vpop.f32.mrb[0].mxu0
        %2785 = vmatprep.mubr.f32.mxu0 0.0
        %v2786 = vand.u32 %v1988, 4294901760
        %2787 = vmatmul.mubr.f32.gmra.mrb[0].mxu0 %v2786
        %v2788 = vpop.f32.mrb[0].mxu0
        %v2789 = vadd.f32 %v2624, %v2788
        %v2790 = vpop.f32.mrb[0].mxu0
        %2791 = vmatprep.mubr.f32.mxu0 0.0
        %v2792 = vand.u32 %v1989, 4294901760
        %2793 = vmatmul.mubr.f32.gmra.mrb[0].mxu0 %v2792
        %v2794 = vpop.f32.mrb[0].mxu0
        %v2795 = vadd.f32 %v2632, %v2794
        %v2796 = vpop.f32.mrb[0].mxu0
        %2797 = vmatprep.mubr.f32.mxu0 0.0
        %v2798 = vand.u32 %v1990, 4294901760
        %2799 = vmatmul.mubr.f32.gmra.mrb[0].mxu0 %v2798
        %v2800 = vpop.f32.mrb[0].mxu0
        %v2801 = vadd.f32 %v2640, %v2800
        %v2802 = vpop.f32.mrb[0].mxu0
        %2803 = vdwg.mxu0
        %2804 = vmatprep.subr.mxu0 0.0
        %v2805 = vand.u32 %v234, 4294901760
        %2806 = vmatpush1.msra.mxu0 %v2805
        %2807 = vmatprep.subr.mxu0 0.0
        %v2808 = vand.u32 %v235, 4294901760
        %2809 = vmatpush1.msra.mxu0 %v2808
        %2810 = vmatprep.subr.mxu0 0.0
        %v2811 = vand.u32 %v236, 4294901760
        %2812 = vmatpush1.msra.mxu0 %v2811
        %2813 = vmatprep.subr.mxu0 0.0
        %v2814 = vand.u32 %v237, 4294901760
        %2815 = vmatpush1.msra.mxu0 %v2814
        %2816 = vmatprep.subr.mxu0 0.0
        %v2817 = vand.u32 %v238, 4294901760
        %2818 = vmatpush1.msra.mxu0 %v2817
        %2819 = vmatprep.subr.mxu0 0.0
        %v2820 = vand.u32 %v239, 4294901760
        %2821 = vmatpush1.msra.mxu0 %v2820
        %2822 = vmatprep.subr.mxu0 0.0
        %v2823 = vand.u32 %v240, 4294901760
        %2824 = vmatpush1.msra.mxu0 %v2823
        %2825 = vmatprep.subr.mxu0 0.0
        %v2826 = vand.u32 %v241, 4294901760
        %2827 = vmatpush1.msra.mxu0 %v2826
        %2828 = vmatprep.subr.mxu0 0.0
        %v2829 = vand.u32 %v242, 4294901760
        %2830 = vmatpush1.msra.mxu0 %v2829
        %2831 = vmatprep.subr.mxu0 0.0
        %v2832 = vand.u32 %v243, 4294901760
        %2833 = vmatpush1.msra.mxu0 %v2832
        %2834 = vmatprep.subr.mxu0 0.0
        %v2835 = vand.u32 %v244, 4294901760
        %2836 = vmatpush1.msra.mxu0 %v2835
        %2837 = vmatprep.subr.mxu0 0.0
        %v2838 = vand.u32 %v245, 4294901760
        %2839 = vmatpush1.msra.mxu0 %v2838
        %2840 = vmatprep.subr.mxu0 0.0
        %v2841 = vand.u32 %v246, 4294901760
        %2842 = vmatpush1.msra.mxu0 %v2841
        %2843 = vmatprep.subr.mxu0 0.0
        %v2844 = vand.u32 %v247, 4294901760
        %2845 = vmatpush1.msra.mxu0 %v2844
        %2846 = vmatprep.subr.mxu0 0.0
        %v2847 = vand.u32 %v248, 4294901760
        %2848 = vmatpush1.msra.mxu0 %v2847
        %2849 = vmatprep.subr.mxu0 0.0
        %v2850 = vand.u32 %v249, 4294901760
        %2851 = vmatpush1.msra.mxu0 %v2850
        %2852 = vmatprep.subr.mxu0 0.0
        %2853 = vmatpush1.msra.mxu0 0.0
        %2854 = vmatprep.subr.mxu0 0.0
        %2855 = vmatpush1.msra.mxu0 0.0
        %2856 = vmatprep.subr.mxu0 0.0
        %2857 = vmatpush1.msra.mxu0 0.0
        %2858 = vmatprep.subr.mxu0 0.0
        %2859 = vmatpush1.msra.mxu0 0.0
        %2860 = vmatprep.subr.mxu0 0.0
        %2861 = vmatpush1.msra.mxu0 0.0
        %2862 = vmatprep.subr.mxu0 0.0
        %2863 = vmatpush1.msra.mxu0 0.0
        %2864 = vmatprep.subr.mxu0 0.0
        %2865 = vmatpush1.msra.mxu0 0.0
        %2866 = vmatprep.subr.mxu0 0.0
        %2867 = vmatpush1.msra.mxu0 0.0
        %2868 = vmatprep.subr.mxu0 0.0
        %2869 = vmatpush1.msra.mxu0 0.0
        %2870 = vmatprep.subr.mxu0 0.0
        %2871 = vmatpush1.msra.mxu0 0.0
        %2872 = vmatprep.subr.mxu0 0.0
        %2873 = vmatpush1.msra.mxu0 0.0
        %2874 = vmatprep.subr.mxu0 0.0
        %2875 = vmatpush1.msra.mxu0 0.0
        %2876 = vmatprep.subr.mxu0 0.0
        %2877 = vmatpush1.msra.mxu0 0.0
        %2878 = vmatprep.subr.mxu0 0.0
        %2879 = vmatpush1.msra.mxu0 0.0
        %2880 = vmatprep.subr.mxu0 0.0
        %2881 = vmatpush1.msra.mxu0 0.0
        %2882 = vmatprep.subr.mxu0 0.0
        %2883 = vmatpush1.msra.mxu0 0.0
        %2884 = vmatprep.mubr.f32.mxu0 0.0
        %v2885 = vand.u32 %v1983, 4294901760
        %2886 = vmatmul.mubr.f32.gmra.mrb[0].mxu0 %v2885
        %v2887 = vpop.f32.mrb[0].mxu0
        %v2888 = vadd.f32 %v2759, %v2887
        %v2889 = vpop.f32.mrb[0].mxu0
        %2890 = vmatprep.mubr.f32.mxu0 0.0
        %v2891 = vand.u32 %v1984, 4294901760
        %2892 = vmatmul.mubr.f32.gmra.mrb[0].mxu0 %v2891
        %v2893 = vpop.f32.mrb[0].mxu0
        %v2894 = vadd.f32 %v2765, %v2893
        %v2895 = vpop.f32.mrb[0].mxu0
        %2896 = vmatprep.mubr.f32.mxu0 0.0
        %v2897 = vand.u32 %v1985, 4294901760
        %2898 = vmatmul.mubr.f32.gmra.mrb[0].mxu0 %v2897
        %v2899 = vpop.f32.mrb[0].mxu0
        %v2900 = vadd.f32 %v2771, %v2899
        %v2901 = vpop.f32.mrb[0].mxu0
        %2902 = vmatprep.mubr.f32.mxu0 0.0
        %v2903 = vand.u32 %v1986, 4294901760
        %2904 = vmatmul.mubr.f32.gmra.mrb[0].mxu0 %v2903
        %v2905 = vpop.f32.mrb[0].mxu0
        %v2906 = vadd.f32 %v2777, %v2905
        %v2907 = vpop.f32.mrb[0].mxu0
        %2908 = vmatprep.mubr.f32.mxu0 0.0
        %v2909 = vand.u32 %v1987, 4294901760
        %2910 = vmatmul.mubr.f32.gmra.mrb[0].mxu0 %v2909
        %v2911 = vpop.f32.mrb[0].mxu0
        %v2912 = vadd.f32 %v2783, %v2911
        %v2913 = vpop.f32.mrb[0].mxu0
        %2914 = vmatprep.mubr.f32.mxu0 0.0
        %v2915 = vand.u32 %v1988, 4294901760
        %2916 = vmatmul.mubr.f32.gmra.mrb[0].mxu0 %v2915
        %v2917 = vpop.f32.mrb[0].mxu0
        %v2918 = vadd.f32 %v2789, %v2917
        %v2919 = vpop.f32.mrb[0].mxu0
        %2920 = vmatprep.mubr.f32.mxu0 0.0
        %v2921 = vand.u32 %v1989, 4294901760
        %2922 = vmatmul.mubr.f32.gmra.mrb[0].mxu0 %v2921
        %v2923 = vpop.f32.mrb[0].mxu0
        %v2924 = vadd.f32 %v2795, %v2923
        %v2925 = vpop.f32.mrb[0].mxu0
        %2926 = vmatprep.mubr.f32.mxu0 0.0
        %v2927 = vand.u32 %v1990, 4294901760
        %2928 = vmatmul.mubr.f32.gmra.mrb[0].mxu0 %v2927
        %v2929 = vpop.f32.mrb[0].mxu0
        %v2930 = vadd.f32 %v2801, %v2929
        %v2931 = vpop.f32.mrb[0].mxu0
        %2932 = vdwg.mxu0
        %v2933 = vmul.f32 %v2888, 0.03125
        %v2934 = vmul.f32 %v2894, 0.03125
        %v2935 = vmul.f32 %v2900, 0.03125
        %v2936 = vmul.f32 %v2906, 0.03125
        %v2937 = vmul.f32 %v2912, 0.03125
        %v2938 = vmul.f32 %v2918, 0.03125
        %v2939 = vmul.f32 %v2924, 0.03125
        %v2940 = vmul.f32 %v2930, 0.03125
        %v2941 = vadd.f32 %v2933, 1e-05
        %v2942 = vadd.f32 %v2934, 1e-05
        %v2943 = vadd.f32 %v2935, 1e-05
        %v2944 = vadd.f32 %v2936, 1e-05
        %v2945 = vadd.f32 %v2937, 1e-05
        %v2946 = vadd.f32 %v2938, 1e-05
        %v2947 = vadd.f32 %v2939, 1e-05
        %v2948 = vadd.f32 %v2940, 1e-05
        %v2949 = vrsqrt.pop %v2941
        %v2950 = vrsqrt.pop %v2942
        %v2951 = vrsqrt.pop %v2943
        %v2952 = vrsqrt.pop %v2944
        %v2953 = vrsqrt.pop %v2945
        %v2954 = vrsqrt.pop %v2946
        %v2955 = vrsqrt.pop %v2947
        %v2956 = vrsqrt.pop %v2948
        %v2958 = vsel %vm1203, %v2949, 0
        %v2961 = vsel %vm1203, %v2950, 0
        %v2964 = vsel %vm1203, %v2951, 0
        %v2967 = vsel %vm1203, %v2952, 0
        %v2970 = vsel %vm1203, %v2953, 0
        %v2973 = vsel %vm1203, %v2954, 0
        %v2976 = vsel %vm1203, %v2955, 0
        %v2979 = vsel %vm1203, %v2956, 0
        %2981 = vmatprep.subr.mxu0 0.0
        %v2982 = vand.u32 %v250, 4294901760
        %2983 = vmatpush1.msra.mxu0 %v2982
        %2984 = vmatprep.subr.mxu0 0.0
        %2985 = vmatpush1.msra.mxu0 0.0
        %2986 = vmatprep.subr.mxu0 0.0
        %2987 = vmatpush1.msra.mxu0 0.0
        %2988 = vmatprep.subr.mxu0 0.0
        %2989 = vmatpush1.msra.mxu0 0.0
        %2990 = vmatprep.subr.mxu0 0.0
        %2991 = vmatpush1.msra.mxu0 0.0
        %2992 = vmatprep.subr.mxu0 0.0
        %2993 = vmatpush1.msra.mxu0 0.0
        %2994 = vmatprep.subr.mxu0 0.0
        %2995 = vmatpush1.msra.mxu0 0.0
        %2996 = vmatprep.subr.mxu0 0.0
        %2997 = vmatpush1.msra.mxu0 0.0
        %2998 = vmatprep.subr.mxu0 0.0
        %2999 = vmatpush1.msra.mxu0 0.0
        %3000 = vmatprep.subr.mxu0 0.0
        %3001 = vmatpush1.msra.mxu0 0.0
        %3002 = vmatprep.subr.mxu0 0.0
        %3003 = vmatpush1.msra.mxu0 0.0
        %3004 = vmatprep.subr.mxu0 0.0
        %3005 = vmatpush1.msra.mxu0 0.0
        %3006 = vmatprep.subr.mxu0 0.0
        %3007 = vmatpush1.msra.mxu0 0.0
        %3008 = vmatprep.subr.mxu0 0.0
        %3009 = vmatpush1.msra.mxu0 0.0
        %3010 = vmatprep.subr.mxu0 0.0
        %3011 = vmatpush1.msra.mxu0 0.0
        %3012 = vmatprep.subr.mxu0 0.0
        %3013 = vmatpush1.msra.mxu0 0.0
        %3014 = vmatprep.subr.mxu0 0.0
        %3015 = vmatpush1.msra.mxu0 0.0
        %3016 = vmatprep.subr.mxu0 0.0
        %3017 = vmatpush1.msra.mxu0 0.0
        %3018 = vmatprep.subr.mxu0 0.0
        %3019 = vmatpush1.msra.mxu0 0.0
        %3020 = vmatprep.subr.mxu0 0.0
        %3021 = vmatpush1.msra.mxu0 0.0
        %3022 = vmatprep.subr.mxu0 0.0
        %3023 = vmatpush1.msra.mxu0 0.0
        %3024 = vmatprep.subr.mxu0 0.0
        %3025 = vmatpush1.msra.mxu0 0.0
        %3026 = vmatprep.subr.mxu0 0.0
        %3027 = vmatpush1.msra.mxu0 0.0
        %3028 = vmatprep.subr.mxu0 0.0
        %3029 = vmatpush1.msra.mxu0 0.0
        %3030 = vmatprep.subr.mxu0 0.0
        %3031 = vmatpush1.msra.mxu0 0.0
        %3032 = vmatprep.subr.mxu0 0.0
        %3033 = vmatpush1.msra.mxu0 0.0
        %3034 = vmatprep.subr.mxu0 0.0
        %3035 = vmatpush1.msra.mxu0 0.0
        %3036 = vmatprep.subr.mxu0 0.0
        %3037 = vmatpush1.msra.mxu0 0.0
        %3038 = vmatprep.subr.mxu0 0.0
        %3039 = vmatpush1.msra.mxu0 0.0
        %3040 = vmatprep.subr.mxu0 0.0
        %3041 = vmatpush1.msra.mxu0 0.0
        %3042 = vmatprep.subr.mxu0 0.0
        %3043 = vmatpush1.msra.mxu0 0.0
        %3044 = vmatprep.subr.mxu0 0.0
        %3045 = vmatpush1.msra.mxu0 0.0
        %3046 = vmatprep.mubr.f32.mxu0 0.0
        %v3047 = vand.u32 %v2958, 4294901760
        %v3048 = vsub.f32 %v2958, %v3047
        %v3049 = vand.u32 %v3048, 4294901760
        %v3050 = vsub.f32 %v3048, %v3049
        %v3051 = vand.u32 %v3050, 4294901760
        %3052 = vmatmul.mubr.f32.gmra.mrb[0].mxu0 %v3051
        %v3053 = vpop.f32.mrb[0].mxu0
        %v3054 = vadd.f32 0.0, %v3053
        %v3055 = vpop.f32.mrb[0].mxu0
        %3056 = vmatprep.mubr.f32.mxu0 0.0
        %v3057 = vand.u32 %v2961, 4294901760
        %v3058 = vsub.f32 %v2961, %v3057
        %v3059 = vand.u32 %v3058, 4294901760
        %v3060 = vsub.f32 %v3058, %v3059
        %v3061 = vand.u32 %v3060, 4294901760
        %3062 = vmatmul.mubr.f32.gmra.mrb[0].mxu0 %v3061
        %v3063 = vpop.f32.mrb[0].mxu0
        %v3064 = vadd.f32 0.0, %v3063
        %v3065 = vpop.f32.mrb[0].mxu0
        %3066 = vmatprep.mubr.f32.mxu0 0.0
        %v3067 = vand.u32 %v2964, 4294901760
        %v3068 = vsub.f32 %v2964, %v3067
        %v3069 = vand.u32 %v3068, 4294901760
        %v3070 = vsub.f32 %v3068, %v3069
        %v3071 = vand.u32 %v3070, 4294901760
        %3072 = vmatmul.mubr.f32.gmra.mrb[0].mxu0 %v3071
        %v3073 = vpop.f32.mrb[0].mxu0
        %v3074 = vadd.f32 0.0, %v3073
        %v3075 = vpop.f32.mrb[0].mxu0
        %3076 = vmatprep.mubr.f32.mxu0 0.0
        %v3077 = vand.u32 %v2967, 4294901760
        %v3078 = vsub.f32 %v2967, %v3077
        %v3079 = vand.u32 %v3078, 4294901760
        %v3080 = vsub.f32 %v3078, %v3079
        %v3081 = vand.u32 %v3080, 4294901760
        %3082 = vmatmul.mubr.f32.gmra.mrb[0].mxu0 %v3081
        %v3083 = vpop.f32.mrb[0].mxu0
        %v3084 = vadd.f32 0.0, %v3083
        %v3085 = vpop.f32.mrb[0].mxu0
        %3086 = vmatprep.mubr.f32.mxu0 0.0
        %v3087 = vand.u32 %v2970, 4294901760
        %v3088 = vsub.f32 %v2970, %v3087
        %v3089 = vand.u32 %v3088, 4294901760
        %v3090 = vsub.f32 %v3088, %v3089
        %v3091 = vand.u32 %v3090, 4294901760
        %3092 = vmatmul.mubr.f32.gmra.mrb[0].mxu0 %v3091
        %v3093 = vpop.f32.mrb[0].mxu0
        %v3094 = vadd.f32 0.0, %v3093
        %v3095 = vpop.f32.mrb[0].mxu0
        %3096 = vmatprep.mubr.f32.mxu0 0.0
        %v3097 = vand.u32 %v2973, 4294901760
        %v3098 = vsub.f32 %v2973, %v3097
        %v3099 = vand.u32 %v3098, 4294901760
        %v3100 = vsub.f32 %v3098, %v3099
        %v3101 = vand.u32 %v3100, 4294901760
        %3102 = vmatmul.mubr.f32.gmra.mrb[0].mxu0 %v3101
        %v3103 = vpop.f32.mrb[0].mxu0
        %v3104 = vadd.f32 0.0, %v3103
        %v3105 = vpop.f32.mrb[0].mxu0
        %3106 = vmatprep.mubr.f32.mxu0 0.0
        %v3107 = vand.u32 %v2976, 4294901760
        %v3108 = vsub.f32 %v2976, %v3107
        %v3109 = vand.u32 %v3108, 4294901760
        %v3110 = vsub.f32 %v3108, %v3109
        %v3111 = vand.u32 %v3110, 4294901760
        %3112 = vmatmul.mubr.f32.gmra.mrb[0].mxu0 %v3111
        %v3113 = vpop.f32.mrb[0].mxu0
        %v3114 = vadd.f32 0.0, %v3113
        %v3115 = vpop.f32.mrb[0].mxu0
        %3116 = vmatprep.mubr.f32.mxu0 0.0
        %v3117 = vand.u32 %v2979, 4294901760
        %v3118 = vsub.f32 %v2979, %v3117
        %v3119 = vand.u32 %v3118, 4294901760
        %v3120 = vsub.f32 %v3118, %v3119
        %v3121 = vand.u32 %v3120, 4294901760
        %3122 = vmatmul.mubr.f32.gmra.mrb[0].mxu0 %v3121
        %v3123 = vpop.f32.mrb[0].mxu0
        %v3124 = vadd.f32 0.0, %v3123
        %v3125 = vpop.f32.mrb[0].mxu0
        %3126 = vdwg.mxu0
        %3127 = vmatprep.subr.mxu0 0.0
        %v3128 = vand.u32 %v250, 4294901760
        %v3129 = vsub.f32 %v250, %v3128
        %v3130 = vand.u32 %v3129, 4294901760
        %v3131 = vsub.f32 %v3129, %v3130
        %v3132 = vand.u32 %v3131, 4294901760
        %3133 = vmatpush1.msra.mxu0 %v3132
        %3134 = vmatprep.subr.mxu0 0.0
        %3135 = vmatpush1.msra.mxu0 0.0
        %3136 = vmatprep.subr.mxu0 0.0
        %3137 = vmatpush1.msra.mxu0 0.0
        %3138 = vmatprep.subr.mxu0 0.0
        %3139 = vmatpush1.msra.mxu0 0.0
        %3140 = vmatprep.subr.mxu0 0.0
        %3141 = vmatpush1.msra.mxu0 0.0
        %3142 = vmatprep.subr.mxu0 0.0
        %3143 = vmatpush1.msra.mxu0 0.0
        %3144 = vmatprep.subr.mxu0 0.0
        %3145 = vmatpush1.msra.mxu0 0.0
        %3146 = vmatprep.subr.mxu0 0.0
        %3147 = vmatpush1.msra.mxu0 0.0
        %3148 = vmatprep.subr.mxu0 0.0
        %3149 = vmatpush1.msra.mxu0 0.0
        %3150 = vmatprep.subr.mxu0 0.0
        %3151 = vmatpush1.msra.mxu0 0.0
        %3152 = vmatprep.subr.mxu0 0.0
        %3153 = vmatpush1.msra.mxu0 0.0
        %3154 = vmatprep.subr.mxu0 0.0
        %3155 = vmatpush1.msra.mxu0 0.0
        %3156 = vmatprep.subr.mxu0 0.0
        %3157 = vmatpush1.msra.mxu0 0.0
        %3158 = vmatprep.subr.mxu0 0.0
        %3159 = vmatpush1.msra.mxu0 0.0
        %3160 = vmatprep.subr.mxu0 0.0
        %3161 = vmatpush1.msra.mxu0 0.0
        %3162 = vmatprep.subr.mxu0 0.0
        %3163 = vmatpush1.msra.mxu0 0.0
        %3164 = vmatprep.subr.mxu0 0.0
        %3165 = vmatpush1.msra.mxu0 0.0
        %3166 = vmatprep.subr.mxu0 0.0
        %3167 = vmatpush1.msra.mxu0 0.0
        %3168 = vmatprep.subr.mxu0 0.0
        %3169 = vmatpush1.msra.mxu0 0.0
        %3170 = vmatprep.subr.mxu0 0.0
        %3171 = vmatpush1.msra.mxu0 0.0
        %3172 = vmatprep.subr.mxu0 0.0
        %3173 = vmatpush1.msra.mxu0 0.0
        %3174 = vmatprep.subr.mxu0 0.0
        %3175 = vmatpush1.msra.mxu0 0.0
        %3176 = vmatprep.subr.mxu0 0.0
        %3177 = vmatpush1.msra.mxu0 0.0
        %3178 = vmatprep.subr.mxu0 0.0
        %3179 = vmatpush1.msra.mxu0 0.0
        %3180 = vmatprep.subr.mxu0 0.0
        %3181 = vmatpush1.msra.mxu0 0.0
        %3182 = vmatprep.subr.mxu0 0.0
        %3183 = vmatpush1.msra.mxu0 0.0
        %3184 = vmatprep.subr.mxu0 0.0
        %3185 = vmatpush1.msra.mxu0 0.0
        %3186 = vmatprep.subr.mxu0 0.0
        %3187 = vmatpush1.msra.mxu0 0.0
        %3188 = vmatprep.subr.mxu0 0.0
        %3189 = vmatpush1.msra.mxu0 0.0
        %3190 = vmatprep.subr.mxu0 0.0
        %3191 = vmatpush1.msra.mxu0 0.0
        %3192 = vmatprep.subr.mxu0 0.0
        %3193 = vmatpush1.msra.mxu0 0.0
        %3194 = vmatprep.subr.mxu0 0.0
        %3195 = vmatpush1.msra.mxu0 0.0
        %3196 = vmatprep.mubr.f32.mxu0 0.0
        %v3197 = vand.u32 %v2958, 4294901760
        %3198 = vmatmul.mubr.f32.gmra.mrb[0].mxu0 %v3197
        %v3199 = vpop.f32.mrb[0].mxu0
        %v3200 = vadd.f32 %v3054, %v3199
        %v3201 = vpop.f32.mrb[0].mxu0
        %3202 = vmatprep.mubr.f32.mxu0 0.0
        %v3203 = vand.u32 %v2961, 4294901760
        %3204 = vmatmul.mubr.f32.gmra.mrb[0].mxu0 %v3203
        %v3205 = vpop.f32.mrb[0].mxu0
        %v3206 = vadd.f32 %v3064, %v3205
        %v3207 = vpop.f32.mrb[0].mxu0
        %3208 = vmatprep.mubr.f32.mxu0 0.0
        %v3209 = vand.u32 %v2964, 4294901760
        %3210 = vmatmul.mubr.f32.gmra.mrb[0].mxu0 %v3209
        %v3211 = vpop.f32.mrb[0].mxu0
        %v3212 = vadd.f32 %v3074, %v3211
        %v3213 = vpop.f32.mrb[0].mxu0
        %3214 = vmatprep.mubr.f32.mxu0 0.0
        %v3215 = vand.u32 %v2967, 4294901760
        %3216 = vmatmul.mubr.f32.gmra.mrb[0].mxu0 %v3215
        %v3217 = vpop.f32.mrb[0].mxu0
        %v3218 = vadd.f32 %v3084, %v3217
        %v3219 = vpop.f32.mrb[0].mxu0
        %3220 = vmatprep.mubr.f32.mxu0 0.0
        %v3221 = vand.u32 %v2970, 4294901760
        %3222 = vmatmul.mubr.f32.gmra.mrb[0].mxu0 %v3221
        %v3223 = vpop.f32.mrb[0].mxu0
        %v3224 = vadd.f32 %v3094, %v3223
        %v3225 = vpop.f32.mrb[0].mxu0
        %3226 = vmatprep.mubr.f32.mxu0 0.0
        %v3227 = vand.u32 %v2973, 4294901760
        %3228 = vmatmul.mubr.f32.gmra.mrb[0].mxu0 %v3227
        %v3229 = vpop.f32.mrb[0].mxu0
        %v3230 = vadd.f32 %v3104, %v3229
        %v3231 = vpop.f32.mrb[0].mxu0
        %3232 = vmatprep.mubr.f32.mxu0 0.0
        %v3233 = vand.u32 %v2976, 4294901760
        %3234 = vmatmul.mubr.f32.gmra.mrb[0].mxu0 %v3233
        %v3235 = vpop.f32.mrb[0].mxu0
        %v3236 = vadd.f32 %v3114, %v3235
        %v3237 = vpop.f32.mrb[0].mxu0
        %3238 = vmatprep.mubr.f32.mxu0 0.0
        %v3239 = vand.u32 %v2979, 4294901760
        %3240 = vmatmul.mubr.f32.gmra.mrb[0].mxu0 %v3239
        %v3241 = vpop.f32.mrb[0].mxu0
        %v3242 = vadd.f32 %v3124, %v3241
        %v3243 = vpop.f32.mrb[0].mxu0
        %3244 = vdwg.mxu0
        %3245 = vmatprep.subr.mxu0 0.0
        %v3246 = vand.u32 %v250, 4294901760
        %v3247 = vsub.f32 %v250, %v3246
        %3248 = vmatpush1.msra.mxu0 %v3247
        %3249 = vmatprep.subr.mxu0 0.0
        %3250 = vmatpush1.msra.mxu0 0.0
        %3251 = vmatprep.subr.mxu0 0.0
        %3252 = vmatpush1.msra.mxu0 0.0
        %3253 = vmatprep.subr.mxu0 0.0
        %3254 = vmatpush1.msra.mxu0 0.0
        %3255 = vmatprep.subr.mxu0 0.0
        %3256 = vmatpush1.msra.mxu0 0.0
        %3257 = vmatprep.subr.mxu0 0.0
        %3258 = vmatpush1.msra.mxu0 0.0
        %3259 = vmatprep.subr.mxu0 0.0
        %3260 = vmatpush1.msra.mxu0 0.0
        %3261 = vmatprep.subr.mxu0 0.0
        %3262 = vmatpush1.msra.mxu0 0.0
        %3263 = vmatprep.subr.mxu0 0.0
        %3264 = vmatpush1.msra.mxu0 0.0
        %3265 = vmatprep.subr.mxu0 0.0
        %3266 = vmatpush1.msra.mxu0 0.0
        %3267 = vmatprep.subr.mxu0 0.0
        %3268 = vmatpush1.msra.mxu0 0.0
        %3269 = vmatprep.subr.mxu0 0.0
        %3270 = vmatpush1.msra.mxu0 0.0
        %3271 = vmatprep.subr.mxu0 0.0
        %3272 = vmatpush1.msra.mxu0 0.0
        %3273 = vmatprep.subr.mxu0 0.0
        %3274 = vmatpush1.msra.mxu0 0.0
        %3275 = vmatprep.subr.mxu0 0.0
        %3276 = vmatpush1.msra.mxu0 0.0
        %3277 = vmatprep.subr.mxu0 0.0
        %3278 = vmatpush1.msra.mxu0 0.0
        %3279 = vmatprep.subr.mxu0 0.0
        %3280 = vmatpush1.msra.mxu0 0.0
        %3281 = vmatprep.subr.mxu0 0.0
        %3282 = vmatpush1.msra.mxu0 0.0
        %3283 = vmatprep.subr.mxu0 0.0
        %3284 = vmatpush1.msra.mxu0 0.0
        %3285 = vmatprep.subr.mxu0 0.0
        %3286 = vmatpush1.msra.mxu0 0.0
        %3287 = vmatprep.subr.mxu0 0.0
        %3288 = vmatpush1.msra.mxu0 0.0
        %3289 = vmatprep.subr.mxu0 0.0
        %3290 = vmatpush1.msra.mxu0 0.0
        %3291 = vmatprep.subr.mxu0 0.0
        %3292 = vmatpush1.msra.mxu0 0.0
        %3293 = vmatprep.subr.mxu0 0.0
        %3294 = vmatpush1.msra.mxu0 0.0
        %3295 = vmatprep.subr.mxu0 0.0
        %3296 = vmatpush1.msra.mxu0 0.0
        %3297 = vmatprep.subr.mxu0 0.0
        %3298 = vmatpush1.msra.mxu0 0.0
        %3299 = vmatprep.subr.mxu0 0.0
        %3300 = vmatpush1.msra.mxu0 0.0
        %3301 = vmatprep.subr.mxu0 0.0
        %3302 = vmatpush1.msra.mxu0 0.0
        %3303 = vmatprep.subr.mxu0 0.0
        %3304 = vmatpush1.msra.mxu0 0.0
        %3305 = vmatprep.subr.mxu0 0.0
        %3306 = vmatpush1.msra.mxu0 0.0
        %3307 = vmatprep.subr.mxu0 0.0
        %3308 = vmatpush1.msra.mxu0 0.0
        %3309 = vmatprep.subr.mxu0 0.0
        %3310 = vmatpush1.msra.mxu0 0.0
        %3311 = vmatprep.mubr.f32.mxu0 0.0
        %v3312 = vand.u32 %v2958, 4294901760
        %v3313 = vsub.f32 %v2958, %v3312
        %3314 = vmatmul.mubr.f32.gmra.mrb[0].mxu0 %v3313
        %v3315 = vpop.f32.mrb[0].mxu0
        %v3316 = vadd.f32 %v3200, %v3315
        %v3317 = vpop.f32.mrb[0].mxu0
        %3318 = vmatprep.mubr.f32.mxu0 0.0
        %v3319 = vand.u32 %v2961, 4294901760
        %v3320 = vsub.f32 %v2961, %v3319
        %3321 = vmatmul.mubr.f32.gmra.mrb[0].mxu0 %v3320
        %v3322 = vpop.f32.mrb[0].mxu0
        %v3323 = vadd.f32 %v3206, %v3322
        %v3324 = vpop.f32.mrb[0].mxu0
        %3325 = vmatprep.mubr.f32.mxu0 0.0
        %v3326 = vand.u32 %v2964, 4294901760
        %v3327 = vsub.f32 %v2964, %v3326
        %3328 = vmatmul.mubr.f32.gmra.mrb[0].mxu0 %v3327
        %v3329 = vpop.f32.mrb[0].mxu0
        %v3330 = vadd.f32 %v3212, %v3329
        %v3331 = vpop.f32.mrb[0].mxu0
        %3332 = vmatprep.mubr.f32.mxu0 0.0
        %v3333 = vand.u32 %v2967, 4294901760
        %v3334 = vsub.f32 %v2967, %v3333
        %3335 = vmatmul.mubr.f32.gmra.mrb[0].mxu0 %v3334
        %v3336 = vpop.f32.mrb[0].mxu0
        %v3337 = vadd.f32 %v3218, %v3336
        %v3338 = vpop.f32.mrb[0].mxu0
        %3339 = vmatprep.mubr.f32.mxu0 0.0
        %v3340 = vand.u32 %v2970, 4294901760
        %v3341 = vsub.f32 %v2970, %v3340
        %3342 = vmatmul.mubr.f32.gmra.mrb[0].mxu0 %v3341
        %v3343 = vpop.f32.mrb[0].mxu0
        %v3344 = vadd.f32 %v3224, %v3343
        %v3345 = vpop.f32.mrb[0].mxu0
        %3346 = vmatprep.mubr.f32.mxu0 0.0
        %v3347 = vand.u32 %v2973, 4294901760
        %v3348 = vsub.f32 %v2973, %v3347
        %3349 = vmatmul.mubr.f32.gmra.mrb[0].mxu0 %v3348
        %v3350 = vpop.f32.mrb[0].mxu0
        %v3351 = vadd.f32 %v3230, %v3350
        %v3352 = vpop.f32.mrb[0].mxu0
        %3353 = vmatprep.mubr.f32.mxu0 0.0
        %v3354 = vand.u32 %v2976, 4294901760
        %v3355 = vsub.f32 %v2976, %v3354
        %3356 = vmatmul.mubr.f32.gmra.mrb[0].mxu0 %v3355
        %v3357 = vpop.f32.mrb[0].mxu0
        %v3358 = vadd.f32 %v3236, %v3357
        %v3359 = vpop.f32.mrb[0].mxu0
        %3360 = vmatprep.mubr.f32.mxu0 0.0
        %v3361 = vand.u32 %v2979, 4294901760
        %v3362 = vsub.f32 %v2979, %v3361
        %3363 = vmatmul.mubr.f32.gmra.mrb[0].mxu0 %v3362
        %v3364 = vpop.f32.mrb[0].mxu0
        %v3365 = vadd.f32 %v3242, %v3364
        %v3366 = vpop.f32.mrb[0].mxu0
        %3367 = vdwg.mxu0
        %3368 = vmatprep.subr.mxu0 0.0
        %v3369 = vand.u32 %v250, 4294901760
        %3370 = vmatpush1.msra.mxu0 %v3369
        %3371 = vmatprep.subr.mxu0 0.0
        %3372 = vmatpush1.msra.mxu0 0.0
        %3373 = vmatprep.subr.mxu0 0.0
        %3374 = vmatpush1.msra.mxu0 0.0
        %3375 = vmatprep.subr.mxu0 0.0
        %3376 = vmatpush1.msra.mxu0 0.0
        %3377 = vmatprep.subr.mxu0 0.0
        %3378 = vmatpush1.msra.mxu0 0.0
        %3379 = vmatprep.subr.mxu0 0.0
        %3380 = vmatpush1.msra.mxu0 0.0
        %3381 = vmatprep.subr.mxu0 0.0
        %3382 = vmatpush1.msra.mxu0 0.0
        %3383 = vmatprep.subr.mxu0 0.0
        %3384 = vmatpush1.msra.mxu0 0.0
        %3385 = vmatprep.subr.mxu0 0.0
        %3386 = vmatpush1.msra.mxu0 0.0
        %3387 = vmatprep.subr.mxu0 0.0
        %3388 = vmatpush1.msra.mxu0 0.0
        %3389 = vmatprep.subr.mxu0 0.0
        %3390 = vmatpush1.msra.mxu0 0.0
        %3391 = vmatprep.subr.mxu0 0.0
        %3392 = vmatpush1.msra.mxu0 0.0
        %3393 = vmatprep.subr.mxu0 0.0
        %3394 = vmatpush1.msra.mxu0 0.0
        %3395 = vmatprep.subr.mxu0 0.0
        %3396 = vmatpush1.msra.mxu0 0.0
        %3397 = vmatprep.subr.mxu0 0.0
        %3398 = vmatpush1.msra.mxu0 0.0
        %3399 = vmatprep.subr.mxu0 0.0
        %3400 = vmatpush1.msra.mxu0 0.0
        %3401 = vmatprep.subr.mxu0 0.0
        %3402 = vmatpush1.msra.mxu0 0.0
        %3403 = vmatprep.subr.mxu0 0.0
        %3404 = vmatpush1.msra.mxu0 0.0
        %3405 = vmatprep.subr.mxu0 0.0
        %3406 = vmatpush1.msra.mxu0 0.0
        %3407 = vmatprep.subr.mxu0 0.0
        %3408 = vmatpush1.msra.mxu0 0.0
        %3409 = vmatprep.subr.mxu0 0.0
        %3410 = vmatpush1.msra.mxu0 0.0
        %3411 = vmatprep.subr.mxu0 0.0
        %3412 = vmatpush1.msra.mxu0 0.0
        %3413 = vmatprep.subr.mxu0 0.0
        %3414 = vmatpush1.msra.mxu0 0.0
        %3415 = vmatprep.subr.mxu0 0.0
        %3416 = vmatpush1.msra.mxu0 0.0
        %3417 = vmatprep.subr.mxu0 0.0
        %3418 = vmatpush1.msra.mxu0 0.0
        %3419 = vmatprep.subr.mxu0 0.0
        %3420 = vmatpush1.msra.mxu0 0.0
        %3421 = vmatprep.subr.mxu0 0.0
        %3422 = vmatpush1.msra.mxu0 0.0
        %3423 = vmatprep.subr.mxu0 0.0
        %3424 = vmatpush1.msra.mxu0 0.0
        %3425 = vmatprep.subr.mxu0 0.0
        %3426 = vmatpush1.msra.mxu0 0.0
        %3427 = vmatprep.subr.mxu0 0.0
        %3428 = vmatpush1.msra.mxu0 0.0
        %3429 = vmatprep.subr.mxu0 0.0
        %3430 = vmatpush1.msra.mxu0 0.0
        %3431 = vmatprep.subr.mxu0 0.0
        %3432 = vmatpush1.msra.mxu0 0.0
        %3433 = vmatprep.mubr.f32.mxu0 0.0
        %v3434 = vand.u32 %v2958, 4294901760
        %v3435 = vsub.f32 %v2958, %v3434
        %v3436 = vand.u32 %v3435, 4294901760
        %3437 = vmatmul.mubr.f32.gmra.mrb[0].mxu0 %v3436
        %v3438 = vpop.f32.mrb[0].mxu0
        %v3439 = vadd.f32 %v3316, %v3438
        %v3440 = vpop.f32.mrb[0].mxu0
        %3441 = vmatprep.mubr.f32.mxu0 0.0
        %v3442 = vand.u32 %v2961, 4294901760
        %v3443 = vsub.f32 %v2961, %v3442
        %v3444 = vand.u32 %v3443, 4294901760
        %3445 = vmatmul.mubr.f32.gmra.mrb[0].mxu0 %v3444
        %v3446 = vpop.f32.mrb[0].mxu0
        %v3447 = vadd.f32 %v3323, %v3446
        %v3448 = vpop.f32.mrb[0].mxu0
        %3449 = vmatprep.mubr.f32.mxu0 0.0
        %v3450 = vand.u32 %v2964, 4294901760
        %v3451 = vsub.f32 %v2964, %v3450
        %v3452 = vand.u32 %v3451, 4294901760
        %3453 = vmatmul.mubr.f32.gmra.mrb[0].mxu0 %v3452
        %v3454 = vpop.f32.mrb[0].mxu0
        %v3455 = vadd.f32 %v3330, %v3454
        %v3456 = vpop.f32.mrb[0].mxu0
        %3457 = vmatprep.mubr.f32.mxu0 0.0
        %v3458 = vand.u32 %v2967, 4294901760
        %v3459 = vsub.f32 %v2967, %v3458
        %v3460 = vand.u32 %v3459, 4294901760
        %3461 = vmatmul.mubr.f32.gmra.mrb[0].mxu0 %v3460
        %v3462 = vpop.f32.mrb[0].mxu0
        %v3463 = vadd.f32 %v3337, %v3462
        %v3464 = vpop.f32.mrb[0].mxu0
        %3465 = vmatprep.mubr.f32.mxu0 0.0
        %v3466 = vand.u32 %v2970, 4294901760
        %v3467 = vsub.f32 %v2970, %v3466
        %v3468 = vand.u32 %v3467, 4294901760
        %3469 = vmatmul.mubr.f32.gmra.mrb[0].mxu0 %v3468
        %v3470 = vpop.f32.mrb[0].mxu0
        %v3471 = vadd.f32 %v3344, %v3470
        %v3472 = vpop.f32.mrb[0].mxu0
        %3473 = vmatprep.mubr.f32.mxu0 0.0
        %v3474 = vand.u32 %v2973, 4294901760
        %v3475 = vsub.f32 %v2973, %v3474
        %v3476 = vand.u32 %v3475, 4294901760
        %3477 = vmatmul.mubr.f32.gmra.mrb[0].mxu0 %v3476
        %v3478 = vpop.f32.mrb[0].mxu0
        %v3479 = vadd.f32 %v3351, %v3478
        %v3480 = vpop.f32.mrb[0].mxu0
        %3481 = vmatprep.mubr.f32.mxu0 0.0
        %v3482 = vand.u32 %v2976, 4294901760
        %v3483 = vsub.f32 %v2976, %v3482
        %v3484 = vand.u32 %v3483, 4294901760
        %3485 = vmatmul.mubr.f32.gmra.mrb[0].mxu0 %v3484
        %v3486 = vpop.f32.mrb[0].mxu0
        %v3487 = vadd.f32 %v3358, %v3486
        %v3488 = vpop.f32.mrb[0].mxu0
        %3489 = vmatprep.mubr.f32.mxu0 0.0
        %v3490 = vand.u32 %v2979, 4294901760
        %v3491 = vsub.f32 %v2979, %v3490
        %v3492 = vand.u32 %v3491, 4294901760
        %3493 = vmatmul.mubr.f32.gmra.mrb[0].mxu0 %v3492
        %v3494 = vpop.f32.mrb[0].mxu0
        %v3495 = vadd.f32 %v3365, %v3494
        %v3496 = vpop.f32.mrb[0].mxu0
        %3497 = vdwg.mxu0
        %3498 = vmatprep.subr.mxu0 0.0
        %v3499 = vand.u32 %v250, 4294901760
        %v3500 = vsub.f32 %v250, %v3499
        %v3501 = vand.u32 %v3500, 4294901760
        %3502 = vmatpush1.msra.mxu0 %v3501
        %3503 = vmatprep.subr.mxu0 0.0
        %3504 = vmatpush1.msra.mxu0 0.0
        %3505 = vmatprep.subr.mxu0 0.0
        %3506 = vmatpush1.msra.mxu0 0.0
        %3507 = vmatprep.subr.mxu0 0.0
        %3508 = vmatpush1.msra.mxu0 0.0
        %3509 = vmatprep.subr.mxu0 0.0
        %3510 = vmatpush1.msra.mxu0 0.0
        %3511 = vmatprep.subr.mxu0 0.0
        %3512 = vmatpush1.msra.mxu0 0.0
        %3513 = vmatprep.subr.mxu0 0.0
        %3514 = vmatpush1.msra.mxu0 0.0
        %3515 = vmatprep.subr.mxu0 0.0
        %3516 = vmatpush1.msra.mxu0 0.0
        %3517 = vmatprep.subr.mxu0 0.0
        %3518 = vmatpush1.msra.mxu0 0.0
        %3519 = vmatprep.subr.mxu0 0.0
        %3520 = vmatpush1.msra.mxu0 0.0
        %3521 = vmatprep.subr.mxu0 0.0
        %3522 = vmatpush1.msra.mxu0 0.0
        %3523 = vmatprep.subr.mxu0 0.0
        %3524 = vmatpush1.msra.mxu0 0.0
        %3525 = vmatprep.subr.mxu0 0.0
        %3526 = vmatpush1.msra.mxu0 0.0
        %3527 = vmatprep.subr.mxu0 0.0
        %3528 = vmatpush1.msra.mxu0 0.0
        %3529 = vmatprep.subr.mxu0 0.0
        %3530 = vmatpush1.msra.mxu0 0.0
        %3531 = vmatprep.subr.mxu0 0.0
        %3532 = vmatpush1.msra.mxu0 0.0
        %3533 = vmatprep.subr.mxu0 0.0
        %3534 = vmatpush1.msra.mxu0 0.0
        %3535 = vmatprep.subr.mxu0 0.0
        %3536 = vmatpush1.msra.mxu0 0.0
        %3537 = vmatprep.subr.mxu0 0.0
        %3538 = vmatpush1.msra.mxu0 0.0
        %3539 = vmatprep.subr.mxu0 0.0
        %3540 = vmatpush1.msra.mxu0 0.0
        %3541 = vmatprep.subr.mxu0 0.0
        %3542 = vmatpush1.msra.mxu0 0.0
        %3543 = vmatprep.subr.mxu0 0.0
        %3544 = vmatpush1.msra.mxu0 0.0
        %3545 = vmatprep.subr.mxu0 0.0
        %3546 = vmatpush1.msra.mxu0 0.0
        %3547 = vmatprep.subr.mxu0 0.0
        %3548 = vmatpush1.msra.mxu0 0.0
        %3549 = vmatprep.subr.mxu0 0.0
        %3550 = vmatpush1.msra.mxu0 0.0
        %3551 = vmatprep.subr.mxu0 0.0
        %3552 = vmatpush1.msra.mxu0 0.0
        %3553 = vmatprep.subr.mxu0 0.0
        %3554 = vmatpush1.msra.mxu0 0.0
        %3555 = vmatprep.subr.mxu0 0.0
        %3556 = vmatpush1.msra.mxu0 0.0
        %3557 = vmatprep.subr.mxu0 0.0
        %3558 = vmatpush1.msra.mxu0 0.0
        %3559 = vmatprep.subr.mxu0 0.0
        %3560 = vmatpush1.msra.mxu0 0.0
        %3561 = vmatprep.subr.mxu0 0.0
        %3562 = vmatpush1.msra.mxu0 0.0
        %3563 = vmatprep.subr.mxu0 0.0
        %3564 = vmatpush1.msra.mxu0 0.0
        %3565 = vmatprep.mubr.f32.mxu0 0.0
        %v3566 = vand.u32 %v2958, 4294901760
        %3567 = vmatmul.mubr.f32.gmra.mrb[0].mxu0 %v3566
        %v3568 = vpop.f32.mrb[0].mxu0
        %v3569 = vadd.f32 %v3439, %v3568
        %v3570 = vpop.f32.mrb[0].mxu0
        %3571 = vmatprep.mubr.f32.mxu0 0.0
        %v3572 = vand.u32 %v2961, 4294901760
        %3573 = vmatmul.mubr.f32.gmra.mrb[0].mxu0 %v3572
        %v3574 = vpop.f32.mrb[0].mxu0
        %v3575 = vadd.f32 %v3447, %v3574
        %v3576 = vpop.f32.mrb[0].mxu0
        %3577 = vmatprep.mubr.f32.mxu0 0.0
        %v3578 = vand.u32 %v2964, 4294901760
        %3579 = vmatmul.mubr.f32.gmra.mrb[0].mxu0 %v3578
        %v3580 = vpop.f32.mrb[0].mxu0
        %v3581 = vadd.f32 %v3455, %v3580
        %v3582 = vpop.f32.mrb[0].mxu0
        %3583 = vmatprep.mubr.f32.mxu0 0.0
        %v3584 = vand.u32 %v2967, 4294901760
        %3585 = vmatmul.mubr.f32.gmra.mrb[0].mxu0 %v3584
        %v3586 = vpop.f32.mrb[0].mxu0
        %v3587 = vadd.f32 %v3463, %v3586
        %v3588 = vpop.f32.mrb[0].mxu0
        %3589 = vmatprep.mubr.f32.mxu0 0.0
        %v3590 = vand.u32 %v2970, 4294901760
        %3591 = vmatmul.mubr.f32.gmra.mrb[0].mxu0 %v3590
        %v3592 = vpop.f32.mrb[0].mxu0
        %v3593 = vadd.f32 %v3471, %v3592
        %v3594 = vpop.f32.mrb[0].mxu0
        %3595 = vmatprep.mubr.f32.mxu0 0.0
        %v3596 = vand.u32 %v2973, 4294901760
        %3597 = vmatmul.mubr.f32.gmra.mrb[0].mxu0 %v3596
        %v3598 = vpop.f32.mrb[0].mxu0
        %v3599 = vadd.f32 %v3479, %v3598
        %v3600 = vpop.f32.mrb[0].mxu0
        %3601 = vmatprep.mubr.f32.mxu0 0.0
        %v3602 = vand.u32 %v2976, 4294901760
        %3603 = vmatmul.mubr.f32.gmra.mrb[0].mxu0 %v3602
        %v3604 = vpop.f32.mrb[0].mxu0
        %v3605 = vadd.f32 %v3487, %v3604
        %v3606 = vpop.f32.mrb[0].mxu0
        %3607 = vmatprep.mubr.f32.mxu0 0.0
        %v3608 = vand.u32 %v2979, 4294901760
        %3609 = vmatmul.mubr.f32.gmra.mrb[0].mxu0 %v3608
        %v3610 = vpop.f32.mrb[0].mxu0
        %v3611 = vadd.f32 %v3495, %v3610
        %v3612 = vpop.f32.mrb[0].mxu0
        %3613 = vdwg.mxu0
        %3614 = vmatprep.subr.mxu0 0.0
        %v3615 = vand.u32 %v250, 4294901760
        %3616 = vmatpush1.msra.mxu0 %v3615
        %3617 = vmatprep.subr.mxu0 0.0
        %3618 = vmatpush1.msra.mxu0 0.0
        %3619 = vmatprep.subr.mxu0 0.0
        %3620 = vmatpush1.msra.mxu0 0.0
        %3621 = vmatprep.subr.mxu0 0.0
        %3622 = vmatpush1.msra.mxu0 0.0
        %3623 = vmatprep.subr.mxu0 0.0
        %3624 = vmatpush1.msra.mxu0 0.0
        %3625 = vmatprep.subr.mxu0 0.0
        %3626 = vmatpush1.msra.mxu0 0.0
        %3627 = vmatprep.subr.mxu0 0.0
        %3628 = vmatpush1.msra.mxu0 0.0
        %3629 = vmatprep.subr.mxu0 0.0
        %3630 = vmatpush1.msra.mxu0 0.0
        %3631 = vmatprep.subr.mxu0 0.0
        %3632 = vmatpush1.msra.mxu0 0.0
        %3633 = vmatprep.subr.mxu0 0.0
        %3634 = vmatpush1.msra.mxu0 0.0
        %3635 = vmatprep.subr.mxu0 0.0
        %3636 = vmatpush1.msra.mxu0 0.0
        %3637 = vmatprep.subr.mxu0 0.0
        %3638 = vmatpush1.msra.mxu0 0.0
        %3639 = vmatprep.subr.mxu0 0.0
        %3640 = vmatpush1.msra.mxu0 0.0
        %3641 = vmatprep.subr.mxu0 0.0
        %3642 = vmatpush1.msra.mxu0 0.0
        %3643 = vmatprep.subr.mxu0 0.0
        %3644 = vmatpush1.msra.mxu0 0.0
        %3645 = vmatprep.subr.mxu0 0.0
        %3646 = vmatpush1.msra.mxu0 0.0
        %3647 = vmatprep.subr.mxu0 0.0
        %3648 = vmatpush1.msra.mxu0 0.0
        %3649 = vmatprep.subr.mxu0 0.0
        %3650 = vmatpush1.msra.mxu0 0.0
        %3651 = vmatprep.subr.mxu0 0.0
        %3652 = vmatpush1.msra.mxu0 0.0
        %3653 = vmatprep.subr.mxu0 0.0
        %3654 = vmatpush1.msra.mxu0 0.0
        %3655 = vmatprep.subr.mxu0 0.0
        %3656 = vmatpush1.msra.mxu0 0.0
        %3657 = vmatprep.subr.mxu0 0.0
        %3658 = vmatpush1.msra.mxu0 0.0
        %3659 = vmatprep.subr.mxu0 0.0
        %3660 = vmatpush1.msra.mxu0 0.0
        %3661 = vmatprep.subr.mxu0 0.0
        %3662 = vmatpush1.msra.mxu0 0.0
        %3663 = vmatprep.subr.mxu0 0.0
        %3664 = vmatpush1.msra.mxu0 0.0
        %3665 = vmatprep.subr.mxu0 0.0
        %3666 = vmatpush1.msra.mxu0 0.0
        %3667 = vmatprep.subr.mxu0 0.0
        %3668 = vmatpush1.msra.mxu0 0.0
        %3669 = vmatprep.subr.mxu0 0.0
        %3670 = vmatpush1.msra.mxu0 0.0
        %3671 = vmatprep.subr.mxu0 0.0
        %3672 = vmatpush1.msra.mxu0 0.0
        %3673 = vmatprep.subr.mxu0 0.0
        %3674 = vmatpush1.msra.mxu0 0.0
        %3675 = vmatprep.subr.mxu0 0.0
        %3676 = vmatpush1.msra.mxu0 0.0
        %3677 = vmatprep.subr.mxu0 0.0
        %3678 = vmatpush1.msra.mxu0 0.0
        %3679 = vmatprep.mubr.f32.mxu0 0.0
        %v3680 = vand.u32 %v2958, 4294901760
        %3681 = vmatmul.mubr.f32.gmra.mrb[0].mxu0 %v3680
        %v3682 = vpop.f32.mrb[0].mxu0
        %v3683 = vadd.f32 %v3569, %v3682
        %v3684 = vpop.f32.mrb[0].mxu0
        %3685 = vmatprep.mubr.f32.mxu0 0.0
        %v3686 = vand.u32 %v2961, 4294901760
        %3687 = vmatmul.mubr.f32.gmra.mrb[0].mxu0 %v3686
        %v3688 = vpop.f32.mrb[0].mxu0
        %v3689 = vadd.f32 %v3575, %v3688
        %v3690 = vpop.f32.mrb[0].mxu0
        %3691 = vmatprep.mubr.f32.mxu0 0.0
        %v3692 = vand.u32 %v2964, 4294901760
        %3693 = vmatmul.mubr.f32.gmra.mrb[0].mxu0 %v3692
        %v3694 = vpop.f32.mrb[0].mxu0
        %v3695 = vadd.f32 %v3581, %v3694
        %v3696 = vpop.f32.mrb[0].mxu0
        %3697 = vmatprep.mubr.f32.mxu0 0.0
        %v3698 = vand.u32 %v2967, 4294901760
        %3699 = vmatmul.mubr.f32.gmra.mrb[0].mxu0 %v3698
        %v3700 = vpop.f32.mrb[0].mxu0
        %v3701 = vadd.f32 %v3587, %v3700
        %v3702 = vpop.f32.mrb[0].mxu0
        %3703 = vmatprep.mubr.f32.mxu0 0.0
        %v3704 = vand.u32 %v2970, 4294901760
        %3705 = vmatmul.mubr.f32.gmra.mrb[0].mxu0 %v3704
        %v3706 = vpop.f32.mrb[0].mxu0
        %v3707 = vadd.f32 %v3593, %v3706
        %v3708 = vpop.f32.mrb[0].mxu0
        %3709 = vmatprep.mubr.f32.mxu0 0.0
        %v3710 = vand.u32 %v2973, 4294901760
        %3711 = vmatmul.mubr.f32.gmra.mrb[0].mxu0 %v3710
        %v3712 = vpop.f32.mrb[0].mxu0
        %v3713 = vadd.f32 %v3599, %v3712
        %v3714 = vpop.f32.mrb[0].mxu0
        %3715 = vmatprep.mubr.f32.mxu0 0.0
        %v3716 = vand.u32 %v2976, 4294901760
        %3717 = vmatmul.mubr.f32.gmra.mrb[0].mxu0 %v3716
        %v3718 = vpop.f32.mrb[0].mxu0
        %v3719 = vadd.f32 %v3605, %v3718
        %v3720 = vpop.f32.mrb[0].mxu0
        %3721 = vmatprep.mubr.f32.mxu0 0.0
        %v3722 = vand.u32 %v2979, 4294901760
        %3723 = vmatmul.mubr.f32.gmra.mrb[0].mxu0 %v3722
        %v3724 = vpop.f32.mrb[0].mxu0
        %v3725 = vadd.f32 %v3611, %v3724
        %v3726 = vpop.f32.mrb[0].mxu0
        %3727 = vdwg.mxu0
        %v3728 = vmul.f32 %v1975, %v3683
        %v3729 = vmul.f32 %v1976, %v3689
        %v3730 = vmul.f32 %v1977, %v3695
        %v3731 = vmul.f32 %v1978, %v3701
        %v3732 = vmul.f32 %v1979, %v3707
        %v3733 = vmul.f32 %v1980, %v3713
        %v3734 = vmul.f32 %v1981, %v3719
        %v3735 = vmul.f32 %v1982, %v3725
        %v3737 = vlaneseq
        %v3738 = vshrl.u32 %v3737, 7
        %v3739 = vsub.s32 0, %v3738
        %v3740 = vrot.slane %v251, %v3739
        %v3742 = vmul.f32 %v3728, %v3740
        %v3743 = vmul.f32 %v3729, %v3740
        %v3744 = vmul.f32 %v3730, %v3740
        %v3745 = vmul.f32 %v3731, %v3740
        %v3746 = vmul.f32 %v3732, %v3740
        %v3747 = vmul.f32 %v3733, %v3740
        %v3748 = vmul.f32 %v3734, %v3740
        %v3749 = vmul.f32 %v3735, %v3740
        %v3751 = vlaneseq
        %v3752 = vshrl.u32 %v3751, 7
        %v3753 = vsub.s32 0, %v3752
        %v3754 = vrot.slane %v252, %v3753
        %v3756 = vadd.f32 %v3742, %v3754
        %v3757 = vadd.f32 %v3743, %v3754
        %v3758 = vadd.f32 %v3744, %v3754
        %v3759 = vadd.f32 %v3745, %v3754
        %v3760 = vadd.f32 %v3746, %v3754
        %v3761 = vadd.f32 %v3747, %v3754
        %v3762 = vadd.f32 %v3748, %v3754
        %v3763 = vadd.f32 %v3749, %v3754
        %3764 = vst [vmem:[%s218] sm:$0xff] %v3756
        %3765 = vst [vmem:[%s218 + $0x8] sm:$0xff] %v3757
        %3766 = vst [vmem:[%s218 + $0x10] sm:$0xff] %v3758
        %3767 = vst [vmem:[%s218 + $0x18] sm:$0xff] %v3759
        %3768 = vst [vmem:[%s218 + $0x20] sm:$0xff] %v3760
        %3769 = vst [vmem:[%s218 + $0x28] sm:$0xff] %v3761
        %3770 = vst [vmem:[%s218 + $0x30] sm:$0xff] %v3762
        %3771 = vst [vmem:[%s218 + $0x38] sm:$0xff] %v3763
        %s3772 = sand.u32 %s137, 1
        %s3773 = scalar_lea.sflag [#allocation3], %s3772
        %s3774 = sand.u32 %s137, 1
        %s3775 = smul.addr %s3774, 64
        %s3776 = scalar_lea.vmem [#allocation2], %s3775
        // Predicated region
        $region41: #{tpu_custom_call.1} parent=39 // pred_check
          %p3777 = pneg %p147
        $region42: #{tpu_custom_call.1} parent=39 // pred_check_branch
          %3779 = sbr.rel (%p3777) target = $region44
        $region43: #{tpu_custom_call.1} parent=39 // pred_region
          %s3780 = smul.u32 8, %s19
          %s3782 = ssub.s32 1024, 1024
          %3783 = vsyncadd %s3773, %s3782
          %s3784 = smul.addr %s3780, 128
          %s3785 = scalar_lea.hbm %s5, %s3784
          %s3786 = sshll.u32 %s3776, 4
          %s3787 = int_to_ptr.vmem [resolvable:$true] %s3786
          %3792 = dma.vmem_to_hbm [thread:$0]  %s3787, 1024, %s3785, %s3773, 128, 128, 8
        $region44: #{tpu_custom_call.1} parent=39 // pred_fallthru
          _
      $region40: #{tpu_custom_call.1} parent=5 // pred_fallthru
        _
      %p3793 = scmp.le.s32.totalorder 2, %s14
      // Predicated region
      $region45: #{tpu_custom_call.1} parent=5 // pred_check
        %p3794 = pneg %p3793
      $region46: #{tpu_custom_call.1} parent=5 // pred_check_branch
        %3796 = sbr.rel (%p3794) target = $region48
      $region47: #{tpu_custom_call.1} parent=5 // pred_region
        %s3797 = ssub.s32 %s14, 2
        // Predicated region
        $region49: #{tpu_custom_call.1} parent=47 // pred_check
          %p3798 = pneg %p153
        $region50: #{tpu_custom_call.1} parent=47 // pred_check_branch
          %3800 = sbr.rel (%p3798) target = $region52
        $region51: #{tpu_custom_call.1} parent=47 // pred_region
          %s3801 = sand.u32 %s138, 1
          %s3802 = scalar_lea.sflag [#allocation3], %s3801
          %s3803 = sand.u32 %s138, 1
          %s3804 = smul.addr %s3803, 64
          %s3805 = scalar_lea.vmem [#allocation2], %s3804
          %3806 = dma.done %s3802, 1024
        $region52: #{tpu_custom_call.1} parent=47 // pred_fallthru
          _
      $region48: #{tpu_custom_call.1} parent=5 // pred_fallthru
        _
    $region6: #{tpu_custom_call.1} parent=1 // loop_footer
      %s18 = sadd.s32 1, %s14
    $region7: #{tpu_custom_call.1} parent=1 // loop_footer_branch
      %13 = sbr.rel target = $region3
    $region8: #{tpu_custom_call.1} parent=1 // loop_exit
      _
    %3807 = vsyncpa [#allocation3], 1
    %s3808 = scalar_lea.sflag [#allocation3], 1
    %3809 = vsyncpa %s3808, 1

</llo_original>
